<compile_context>
chip_gen: v6e
topology: v6e:2x2x1
jax: 0.10.0
libtpu: 0.0.40
codegen_flags: <defaults>
</compile_context>

<pallas_src>
import functools

import jax
import jax.numpy as jnp
from jax.experimental import pallas as pl
from jax.experimental.pallas import tpu as pltpu


def _bottleneck_kernel(*refs, k1, k2, pad1, pad2, th, W, use_add):
    """Fused conv(k1)+BN+SiLU -> conv(k2)+BN+SiLU -> (+x); one H-strip per step."""
    if use_add:
        (x_ref, w1_ref, b1_ref, w2_ref, b2_ref, res_ref, o_ref, h_ref) = refs
    else:
        (x_ref, w1_ref, b1_ref, w2_ref, b2_ref, o_ref, h_ref) = refs
        res_ref = None

    THx = th + 2 * (pad1 + pad2)          # input-strip rows (conv1+conv2 halo)
    TH4 = th + 2 * pad2                   # intermediate rows (conv2 row halo)
    Cin_p = x_ref.shape[-1]
    Chid_p = w1_ref.shape[-1]
    Cout_p = w2_ref.shape[-1]
    cdt = h_ref.dtype

    # ---- conv1: kx taps fused into the contraction (k1 matmuls, K = k1*Cin_p) ----
    xcat = jnp.concatenate([x_ref[:, kx:kx + W, :] for kx in range(k1)], axis=-1)
    xcat = xcat.reshape(THx * W, k1 * Cin_p)
    acc1 = jnp.zeros((TH4 * W, Chid_p), jnp.float32)
    for ky in range(k1):
        acc1 = acc1 + jnp.dot(xcat[ky * W: ky * W + TH4 * W, :], w1_ref[ky],
                              preferred_element_type=jnp.float32)
    h = acc1 + b1_ref[...]                # BN1 scale folded into w1
    h = h * jax.nn.sigmoid(h)             # SiLU (f32)

    # ---- stage intermediate in VMEM (compute dtype); zero only the halo ----
    t = pl.program_id(1)
    zcols = jnp.zeros((TH4, pad2, Chid_p), cdt)
    h_ref[:, 0:pad2, :] = zcols                        # conv2 zero pad (left)
    h_ref[:, pad2 + W: 2 * pad2 + W, :] = zcols        # conv2 zero pad (right)
    h_ref[:, pad2:pad2 + W, :] = h.reshape(TH4, W, Chid_p).astype(cdt)

    zrows = jnp.zeros((pad2, W + 2 * pad2, Chid_p), cdt)

    @pl.when(t == 0)                       # rows above the image are true zeros
    def _():
        h_ref[0:pad2, :, :] = zrows

    @pl.when(t == pl.num_programs(1) - 1)  # rows below the image are true zeros
    def _():
        h_ref[TH4 - pad2:TH4, :, :] = zrows

    # ---- conv2: kx taps fused into the contraction (k2 matmuls, K = k2*Chid_p) ----
    hcat = jnp.concatenate([h_ref[:, kx:kx + W, :] for kx in range(k2)], axis=-1)
    hcat = hcat.reshape(TH4 * W, k2 * Chid_p)
    acc2 = jnp.zeros((th * W, Cout_p), jnp.float32)
    for ky in range(k2):
        acc2 = acc2 + jnp.dot(hcat[ky * W: ky * W + th * W, :], w2_ref[ky],
                              preferred_element_type=jnp.float32)
    y = acc2 + b2_ref[...]                 # BN2 scale folded into w2
    y = y * jax.nn.sigmoid(y)              # SiLU (f32)

    if use_add:                            # exact f32 residual
        y = y + res_ref[...].astype(jnp.float32)

    o_ref[...] = y.astype(o_ref.dtype)


def _fold_bn(w, gamma, beta, mean, var, eps):
    inv_std = gamma / jnp.sqrt(var + eps)
    return w * inv_std, beta - mean * inv_std          # scale folded into weights


def _pad_lanes(c):
    return ((c + 127) // 128) * 128


def bottleneck_forward(x_nchw, p1, p2, *, shortcut=True, eps=1e-3,
                       compute_dtype=jnp.bfloat16, strip_h=None):
    """Bottleneck.forward in NCHW in/out (matches the PyTorch module, eval-mode BN)."""
    B, Cin, H, W = x_nchw.shape
    k1, k2 = p1['w'].shape[0], p2['w'].shape[0]
    Chid, Cout = p1['w'].shape[-1], p2['w'].shape[-1]
    pad1, pad2 = (k1 - 1) // 2, (k2 - 1) // 2
    PT = pad1 + pad2
    use_add = bool(shortcut and Cin == Cout)

    # H-strip size: bounds the VMEM working set (strip, not full image).
    if strip_h is None:
        strip_h = H
        if H > 32:
            for cand in (32, 16, 8):
                if H % cand == 0:
                    strip_h = cand
                    break
    if H % strip_h != 0:
        strip_h = H
    th = strip_h
    n_strips = H // th

    # Lane-dense channel counts (zero padding keeps padded channels exactly 0).
    Cin_p, Chid_p, Cout_p = _pad_lanes(Cin), _pad_lanes(Chid), _pad_lanes(Cout)

    # NCHW -> NHWC, zero halo (3 rows / 1 col) + channel pad, overlapping strips.
    x_nhwc = jnp.transpose(x_nchw, (0, 2, 3, 1))
    xpad = jnp.pad(x_nhwc, ((0, 0), (PT, PT), (pad1, pad1), (0, Cin_p - Cin)))
    xpad = xpad.astype(compute_dtype)
    x_strips = jnp.stack(
        [xpad[:, t * th: t * th + th + 2 * PT] for t in range(n_strips)], axis=1)
    # (B, n_strips, th + 2*PT, W + 2*pad1, Cin_p)

    # Fold BN scale into weights; channel-pad; fuse kx into the contraction dim.
    w1f, b1v = _fold_bn(p1['w'], p1['gamma'], p1['beta'], p1['mean'], p1['var'], eps)
    w2f, b2v = _fold_bn(p2['w'], p2['gamma'], p2['beta'], p2['mean'], p2['var'], eps)
    w1f = jnp.pad(w1f, ((0, 0), (0, 0), (0, Cin_p - Cin), (0, Chid_p - Chid)))
    w2f = jnp.pad(w2f, ((0, 0), (0, 0), (0, Chid_p - Chid), (0, Cout_p - Cout)))
    w1f = w1f.reshape(k1, k1 * Cin_p, Chid_p).astype(compute_dtype)
    w2f = w2f.reshape(k2, k2 * Chid_p, Cout_p).astype(compute_dtype)
    b1 = jnp.pad(b1v, (0, Chid_p - Chid)).reshape(1, Chid_p).astype(jnp.float32)
    b2 = jnp.pad(b2v, (0, Cout_p - Cout)).reshape(1, Cout_p).astype(jnp.float32)

    inputs = [x_strips, w1f, b1, w2f, b2]
    in_specs = [
        pl.BlockSpec((pl.Squeezed(), pl.Squeezed(), th + 2 * PT, W + 2 * pad1, Cin_p),
                     lambda b, t: (b, t, 0, 0, 0)),
        pl.BlockSpec((k1, k1 * Cin_p, Chid_p), lambda b, t: (0, 0, 0)),
        pl.BlockSpec((1, Chid_p), lambda b, t: (0, 0)),
        pl.BlockSpec((k2, k2 * Chid_p, Cout_p), lambda b, t: (0, 0, 0)),
        pl.BlockSpec((1, Cout_p), lambda b, t: (0, 0)),
    ]
    if use_add:
        # Exact residual in the original dtype (f32), channel-padded with zeros.
        res = jnp.pad(x_nhwc, ((0, 0), (0, 0), (0, 0), (0, Cin_p - Cin)))
        res = res.reshape(B, H * W, Cin_p)
        inputs.append(res)
        in_specs.append(pl.BlockSpec((pl.Squeezed(), th * W, Cin_p),
                                     lambda b, t: (b, t, 0)))

    # VMEM budget: double-buffered blocks + scratch + in-kernel temporaries.
    bpe = jnp.dtype(compute_dtype).itemsize
    obpe = jnp.dtype(x_nchw.dtype).itemsize
    blk_in = (th + 2 * PT) * (W + 2 * pad1) * Cin_p * bpe
    blk_out = th * W * Cout_p * obpe
    blk_res = th * W * Cin_p * obpe if use_add else 0
    w_bytes = (w1f.size + w2f.size) * bpe + (Chid_p + Cout_p) * 4
    scratch_bytes = (th + 2 * pad2) * (W + 2 * pad2) * Chid_p * bpe
    tmp_bytes = ((th + 2 * PT) * W * k1 * Cin_p
                 + (th + 2 * pad2) * W * k2 * Chid_p) * bpe \
                + ((th + 2 * pad2) * W * Chid_p + th * W * Cout_p) * 4
    vmem_est = 2 * (blk_in + blk_out + blk_res + w_bytes) + scratch_bytes + tmp_bytes
    vmem_limit = int(min(max(vmem_est * 3 // 2, 32 * 1024 * 1024), 100 * 1024 * 1024))

    cost = pl.CostEstimate(
        flops=2 * B * H * W * (k1 * k1 * Cin_p * Chid_p + k2 * k2 * Chid_p * Cout_p),
        transcendentals=B * H * W * (Chid_p + Cout_p),
        bytes_accessed=int(x_strips.size * bpe + (w1f.size + w2f.size) * bpe
                           + (Chid_p + Cout_p) * 4 + B * H * W * Cout_p * obpe
                           + B * n_strips * blk_res),
    )

    kernel = functools.partial(_bottleneck_kernel, k1=k1, k2=k2, pad1=pad1,
                               pad2=pad2, th=th, W=W, use_add=use_add)

    out = pl.pallas_call(
        kernel,
        out_shape=jax.ShapeDtypeStruct((B, H * W, Cout_p), x_nchw.dtype),
        grid=(B, n_strips),
        in_specs=in_specs,
        out_specs=pl.BlockSpec((pl.Squeezed(), th * W, Cout_p),
                               lambda b, t: (b, t, 0)),
        scratch_shapes=[
            # conv1 activation strip (with conv2 halo), never written to HBM
            pltpu.VMEM((th + 2 * pad2, W + 2 * pad2, Chid_p), compute_dtype),
        ],
        compiler_params=pltpu.CompilerParams(
            dimension_semantics=("parallel", "parallel"),
            vmem_limit_bytes=vmem_limit),
        cost_estimate=cost,
    )(*inputs)

    out = out.reshape(B, H, W, Cout_p)[..., :Cout]
    return jnp.transpose(out, (0, 3, 1, 2))


def make_baseconv_params(key, cin, cout, ksize):
    ks = jax.random.split(key, 5)
    w = jax.random.normal(ks[0], (ksize, ksize, cin, cout), jnp.float32) * 0.1
    gamma = jax.random.uniform(ks[1], (cout,), jnp.float32, 0.5, 1.5)
    beta = jax.random.normal(ks[2], (cout,), jnp.float32) * 0.1
    mean = jax.random.normal(ks[3], (cout,), jnp.float32) * 0.1
    var = jax.random.uniform(ks[4], (cout,), jnp.float32, 0.5, 1.5)
    return dict(w=w, gamma=gamma, beta=beta, mean=mean, var=var)


# ---------------- plain-JAX reference (for sanity checking) ----------------
def _conv_bn_silu_ref(x_nhwc, w, gamma, beta, mean, var, *, eps=1e-3):
    k = w.shape[0]
    pad = (k - 1) // 2
    y = jax.lax.conv_general_dilated(
        x_nhwc, w, window_strides=(1, 1), padding=[(pad, pad), (pad, pad)],
        dimension_numbers=('NHWC', 'HWIO', 'NHWC'))
    inv_std = gamma / jnp.sqrt(var + eps)
    y = y * inv_std + (beta - mean * inv_std)
    return y * jax.nn.sigmoid(y)


def _bottleneck_ref(x_nchw, p1, p2, *, shortcut=True):
    x = jnp.transpose(x_nchw, (0, 2, 3, 1))
    y = _conv_bn_silu_ref(x, **p1)
    y = _conv_bn_silu_ref(y, **p2)
    if shortcut and x.shape[-1] == y.shape[-1]:
        y = y + x
    return jnp.transpose(y, (0, 3, 1, 2))


if __name__ == "__main__":
    key = jax.random.PRNGKey(0)
    kx, kp1, kp2 = jax.random.split(key, 3)

    # Bottleneck(in_channels=8, out_channels=8, shortcut=True, expansion=0.5)
    B, C, H, W = 2, 8, 16, 16
    hidden = int(C * 0.5)

    x = jax.random.normal(kx, (B, C, H, W), jnp.float32)      # NCHW, like torch
    p1 = make_baseconv_params(kp1, C, hidden, ksize=3)        # conv1: 3x3
    p2 = make_baseconv_params(kp2, hidden, C, ksize=5)        # conv2: 5x5

    ref = jax.block_until_ready(_bottleneck_ref(x, p1, p2, shortcut=True))

    # f32 MXU-operand path: must match the XLA reference tightly.
    out_f32 = jax.block_until_ready(
        bottleneck_forward(x, p1, p2, shortcut=True,
                           compute_dtype=jnp.float32, strip_h=8))
    assert out_f32.shape == (B, C, H, W), out_f32.shape
    assert jnp.allclose(out_f32, ref, atol=1e-4, rtol=1e-4), "f32 mismatch"

    # No-shortcut variant (exercises the use_add=False path).
    ref_ns = jax.block_until_ready(_bottleneck_ref(x, p1, p2, shortcut=False))
    out_ns = jax.block_until_ready(
        bottleneck_forward(x, p1, p2, shortcut=False,
                           compute_dtype=jnp.float32, strip_h=8))
    assert jnp.allclose(out_ns, ref_ns, atol=1e-4, rtol=1e-4), "no-shortcut mismatch"

    # Default bf16 MXU-operand path (all TPU generations): f32 accumulation,
    # f32 BN / SiLU, exact f32 residual.
    out_bf16 = jax.block_until_ready(
        bottleneck_forward(x, p1, p2, shortcut=True, strip_h=8))
    assert jnp.allclose(out_bf16, ref, atol=1e-1, rtol=1e-1), "bf16 path mismatch"

    print("KERNEL_OK")
</pallas_src>

<mosaic_0001>
module attributes {stable_mosaic.version = 11 : i64} {
  func.func @_bottleneck_kernel(%arg0: i32, %arg1: i32, %arg2: memref<1x1x14x18x128xf32, #tpu.memory_space<vmem>>, %arg3: memref<3x384x128xf32, #tpu.memory_space<vmem>>, %arg4: memref<1x128xf32, #tpu.memory_space<vmem>>, %arg5: memref<5x640x128xf32, #tpu.memory_space<vmem>>, %arg6: memref<1x128xf32, #tpu.memory_space<vmem>>, %arg7: memref<1x128x128xf32, #tpu.memory_space<vmem>>, %arg8: memref<1x128x128xf32, #tpu.memory_space<vmem>>, %arg9: memref<12x20x128xf32, #tpu.memory_space<vmem>>) attributes {dimension_semantics = [#tpu.dimension_semantics<parallel>, #tpu.dimension_semantics<parallel>], iteration_bounds = array<i64: 2, 2>, scalar_prefetch = 0 : i64, scratch_operands = 1 : i64, tpu.core_type = #tpu.core_type<tc>, window_params = [{transform_indices = @transform_0, window_bounds = array<i64: 1, 1, 14, 18, 128>}, {pipeline_mode = #tpu.pipeline_mode<synchronous>, transform_indices = @transform_1, window_bounds = array<i64: 3, 384, 128>}, {pipeline_mode = #tpu.pipeline_mode<synchronous>, transform_indices = @transform_2, window_bounds = array<i64: 1, 128>}, {pipeline_mode = #tpu.pipeline_mode<synchronous>, transform_indices = @transform_3, window_bounds = array<i64: 5, 640, 128>}, {pipeline_mode = #tpu.pipeline_mode<synchronous>, transform_indices = @transform_4, window_bounds = array<i64: 1, 128>}, {transform_indices = @transform_5, window_bounds = array<i64: 1, 128, 128>}, {transform_indices = @transform_6, window_bounds = array<i64: 1, 128, 128>}]} {
    %c0 = arith.constant 0 : index
    %c0_0 = arith.constant 0 : index
    %c0_1 = arith.constant 0 : index
    %c0_2 = arith.constant 0 : index
    %c0_3 = arith.constant 0 : index
    %0 = vector.load %arg2[%c0, %c0_0, %c0_1, %c0_2, %c0_3] : memref<1x1x14x18x128xf32, #tpu.memory_space<vmem>>, vector<1x1x14x16x128xf32>
    %1 = vector.shape_cast %0 : vector<1x1x14x16x128xf32> to vector<14x16x128xf32>
    %c0_4 = arith.constant 0 : index
    %c0_5 = arith.constant 0 : index
    %c0_6 = arith.constant 0 : index
    %c1 = arith.constant 1 : index
    %c0_7 = arith.constant 0 : index
    %2 = vector.load %arg2[%c0_4, %c0_5, %c0_6, %c1, %c0_7] : memref<1x1x14x18x128xf32, #tpu.memory_space<vmem>>, vector<1x1x14x16x128xf32>
    %3 = vector.shape_cast %2 : vector<1x1x14x16x128xf32> to vector<14x16x128xf32>
    %c0_8 = arith.constant 0 : index
    %c0_9 = arith.constant 0 : index
    %c0_10 = arith.constant 0 : index
    %c2 = arith.constant 2 : index
    %c0_11 = arith.constant 0 : index
    %4 = vector.load %arg2[%c0_8, %c0_9, %c0_10, %c2, %c0_11] : memref<1x1x14x18x128xf32, #tpu.memory_space<vmem>>, vector<1x1x14x16x128xf32>
    %5 = vector.shape_cast %4 : vector<1x1x14x16x128xf32> to vector<14x16x128xf32>
    %6 = tpu.concatenate %1, %3, %5 in 2 : vector<14x16x128xf32>, vector<14x16x128xf32>, vector<14x16x128xf32> -> vector<14x16x384xf32>
    %7 = vector.shape_cast %6 : vector<14x16x384xf32> to vector<224x384xf32>
    %cst = arith.constant 0.000000e+00 : f32
    %8 = vector.broadcast %cst : f32 to vector<192x128xf32>
    %9 = vector.extract_strided_slice %7 {offsets = [0, 0], sizes = [192, 384], strides = [1, 1]} : vector<224x384xf32> to vector<192x384xf32>
    %c0_12 = arith.constant 0 : index
    %c0_13 = arith.constant 0 : index
    %c0_14 = arith.constant 0 : index
    %10 = vector.load %arg3[%c0_12, %c0_13, %c0_14] : memref<3x384x128xf32, #tpu.memory_space<vmem>>, vector<1x384x128xf32>
    %11 = vector.shape_cast %10 : vector<1x384x128xf32> to vector<384x128xf32>
    %cst_15 = arith.constant dense<0.000000e+00> : vector<192x128xf32>
    %12 = tpu.matmul %9, %11, %cst_15 {dimension_numbers = #tpu.dot_dimension_numbers<[1], [0], [0], [1], [0, 0, 1, 1], [], []>} : vector<192x384xf32>, vector<384x128xf32>, vector<192x128xf32> -> vector<192x128xf32>
    %13 = arith.addf %8, %12 : vector<192x128xf32>
    %14 = vector.extract_strided_slice %7 {offsets = [16, 0], sizes = [192, 384], strides = [1, 1]} : vector<224x384xf32> to vector<192x384xf32>
    %c1_16 = arith.constant 1 : index
    %c0_17 = arith.constant 0 : index
    %c0_18 = arith.constant 0 : index
    %15 = vector.load %arg3[%c1_16, %c0_17, %c0_18] : memref<3x384x128xf32, #tpu.memory_space<vmem>>, vector<1x384x128xf32>
    %16 = vector.shape_cast %15 : vector<1x384x128xf32> to vector<384x128xf32>
    %cst_19 = arith.constant dense<0.000000e+00> : vector<192x128xf32>
    %17 = tpu.matmul %14, %16, %cst_19 {dimension_numbers = #tpu.dot_dimension_numbers<[1], [0], [0], [1], [0, 0, 1, 1], [], []>} : vector<192x384xf32>, vector<384x128xf32>, vector<192x128xf32> -> vector<192x128xf32>
    %18 = arith.addf %13, %17 : vector<192x128xf32>
    %19 = vector.extract_strided_slice %7 {offsets = [32, 0], sizes = [192, 384], strides = [1, 1]} : vector<224x384xf32> to vector<192x384xf32>
    %c2_20 = arith.constant 2 : index
    %c0_21 = arith.constant 0 : index
    %c0_22 = arith.constant 0 : index
    %20 = vector.load %arg3[%c2_20, %c0_21, %c0_22] : memref<3x384x128xf32, #tpu.memory_space<vmem>>, vector<1x384x128xf32>
    %21 = vector.shape_cast %20 : vector<1x384x128xf32> to vector<384x128xf32>
    %cst_23 = arith.constant dense<0.000000e+00> : vector<192x128xf32>
    %22 = tpu.matmul %19, %21, %cst_23 {dimension_numbers = #tpu.dot_dimension_numbers<[1], [0], [0], [1], [0, 0, 1, 1], [], []>} : vector<192x384xf32>, vector<384x128xf32>, vector<192x128xf32> -> vector<192x128xf32>
    %23 = arith.addf %18, %22 : vector<192x128xf32>
    %c0_24 = arith.constant 0 : index
    %c0_25 = arith.constant 0 : index
    %24 = vector.load %arg4[%c0_24, %c0_25] : memref<1x128xf32, #tpu.memory_space<vmem>>, vector<1x128xf32>
    %25 = vector.broadcast %24 : vector<1x128xf32> to vector<192x128xf32>
    %26 = arith.addf %23, %25 : vector<192x128xf32>
    %27 = arith.negf %26 : vector<192x128xf32>
    %28 = math.exp %27 : vector<192x128xf32>
    %cst_26 = arith.constant 1.000000e+00 : f32
    %29 = vector.broadcast %cst_26 : f32 to vector<192x128xf32>
    %30 = arith.addf %29, %28 : vector<192x128xf32>
    %31 = arith.divf %29, %30 : vector<192x128xf32>
    %32 = arith.mulf %26, %31 : vector<192x128xf32>
    %cst_27 = arith.constant 0.000000e+00 : f32
    %33 = vector.broadcast %cst_27 : f32 to vector<12x2x128xf32>
    %c0_28 = arith.constant 0 : index
    %c0_29 = arith.constant 0 : index
    %c0_30 = arith.constant 0 : index
    %34 = vector.load %arg9[%c0_28, %c0_29, %c0_30] : memref<12x20x128xf32, #tpu.memory_space<vmem>>, vector<12x2x128xf32>
    tpu.vector_store %arg9[%c0_28, %c0_29, %c0_30], %33 {strides = array<i32>} : memref<12x20x128xf32, #tpu.memory_space<vmem>>, vector<12x2x128xf32>,
    %c0_31 = arith.constant 0 : index
    %c18 = arith.constant 18 : index
    %c0_32 = arith.constant 0 : index
    %35 = vector.load %arg9[%c0_31, %c18, %c0_32] : memref<12x20x128xf32, #tpu.memory_space<vmem>>, vector<12x2x128xf32>
    tpu.vector_store %arg9[%c0_31, %c18, %c0_32], %33 {strides = array<i32>} : memref<12x20x128xf32, #tpu.memory_space<vmem>>, vector<12x2x128xf32>,
    %36 = vector.shape_cast %32 : vector<192x128xf32> to vector<12x16x128xf32>
    %c0_33 = arith.constant 0 : index
    %c2_34 = arith.constant 2 : index
    %c0_35 = arith.constant 0 : index
    %37 = vector.load %arg9[%c0_33, %c2_34, %c0_35] : memref<12x20x128xf32, #tpu.memory_space<vmem>>, vector<12x16x128xf32>
    tpu.vector_store %arg9[%c0_33, %c2_34, %c0_35], %36 {strides = array<i32>} : memref<12x20x128xf32, #tpu.memory_space<vmem>>, vector<12x16x128xf32>,
    %cst_36 = arith.constant 0.000000e+00 : f32
    %38 = vector.broadcast %cst_36 : f32 to vector<2x20x128xf32>
    %c0_i32 = arith.constant 0 : i32
    %39 = arith.cmpi eq, %arg1, %c0_i32 : i32
    %40 = arith.extui %39 : i1 to i32
    %c0_i32_37 = arith.constant 0 : i32
    %41 = arith.cmpi ne, %40, %c0_i32_37 : i32
    scf.if %41 {
      %c0_82 = arith.constant 0 : index
      %c0_83 = arith.constant 0 : index
      %c0_84 = arith.constant 0 : index
      %93 = vector.load %arg9[%c0_82, %c0_83, %c0_84] : memref<12x20x128xf32, #tpu.memory_space<vmem>>, vector<2x20x128xf32>
      tpu.vector_store %arg9[%c0_82, %c0_83, %c0_84], %38 {strides = array<i32>} : memref<12x20x128xf32, #tpu.memory_space<vmem>>, vector<2x20x128xf32>,
    } else {
    }
    %c1_i32 = arith.constant 1 : i32
    %42 = arith.cmpi eq, %arg1, %c1_i32 : i32
    %43 = arith.extui %42 : i1 to i32
    %c0_i32_38 = arith.constant 0 : i32
    %44 = arith.cmpi ne, %43, %c0_i32_38 : i32
    scf.if %44 {
      %c10 = arith.constant 10 : index
      %c0_82 = arith.constant 0 : index
      %c0_83 = arith.constant 0 : index
      %93 = vector.load %arg9[%c10, %c0_82, %c0_83] : memref<12x20x128xf32, #tpu.memory_space<vmem>>, vector<2x20x128xf32>
      tpu.vector_store %arg9[%c10, %c0_82, %c0_83], %38 {strides = array<i32>} : memref<12x20x128xf32, #tpu.memory_space<vmem>>, vector<2x20x128xf32>,
    } else {
    }
    %c0_39 = arith.constant 0 : index
    %c0_40 = arith.constant 0 : index
    %c0_41 = arith.constant 0 : index
    %45 = vector.load %arg9[%c0_39, %c0_40, %c0_41] : memref<12x20x128xf32, #tpu.memory_space<vmem>>, vector<12x16x128xf32>
    %c0_42 = arith.constant 0 : index
    %c1_43 = arith.constant 1 : index
    %c0_44 = arith.constant 0 : index
    %46 = vector.load %arg9[%c0_42, %c1_43, %c0_44] : memref<12x20x128xf32, #tpu.memory_space<vmem>>, vector<12x16x128xf32>
    %c0_45 = arith.constant 0 : index
    %c2_46 = arith.constant 2 : index
    %c0_47 = arith.constant 0 : index
    %47 = vector.load %arg9[%c0_45, %c2_46, %c0_47] : memref<12x20x128xf32, #tpu.memory_space<vmem>>, vector<12x16x128xf32>
    %c0_48 = arith.constant 0 : index
    %c3 = arith.constant 3 : index
    %c0_49 = arith.constant 0 : index
    %48 = vector.load %arg9[%c0_48, %c3, %c0_49] : memref<12x20x128xf32, #tpu.memory_space<vmem>>, vector<12x16x128xf32>
    %c0_50 = arith.constant 0 : index
    %c4 = arith.constant 4 : index
    %c0_51 = arith.constant 0 : index
    %49 = vector.load %arg9[%c0_50, %c4, %c0_51] : memref<12x20x128xf32, #tpu.memory_space<vmem>>, vector<12x16x128xf32>
    %50 = tpu.concatenate %45, %46, %47, %48, %49 in 2 : vector<12x16x128xf32>, vector<12x16x128xf32>, vector<12x16x128xf32>, vector<12x16x128xf32>, vector<12x16x128xf32> -> vector<12x16x640xf32>
    %51 = vector.shape_cast %50 : vector<12x16x640xf32> to vector<192x640xf32>
    %cst_52 = arith.constant 0.000000e+00 : f32
    %52 = vector.broadcast %cst_52 : f32 to vector<128x128xf32>
    %53 = vector.extract_strided_slice %51 {offsets = [0, 0], sizes = [128, 640], strides = [1, 1]} : vector<192x640xf32> to vector<128x640xf32>
    %c0_53 = arith.constant 0 : index
    %c0_54 = arith.constant 0 : index
    %c0_55 = arith.constant 0 : index
    %54 = vector.load %arg5[%c0_53, %c0_54, %c0_55] : memref<5x640x128xf32, #tpu.memory_space<vmem>>, vector<1x640x128xf32>
    %55 = vector.shape_cast %54 : vector<1x640x128xf32> to vector<640x128xf32>
    %cst_56 = arith.constant dense<0.000000e+00> : vector<128x128xf32>
    %56 = tpu.matmul %53, %55, %cst_56 {dimension_numbers = #tpu.dot_dimension_numbers<[1], [0], [0], [1], [0, 0, 1, 1], [], []>} : vector<128x640xf32>, vector<640x128xf32>, vector<128x128xf32> -> vector<128x128xf32>
    %57 = arith.addf %52, %56 : vector<128x128xf32>
    %58 = vector.extract_strided_slice %51 {offsets = [16, 0], sizes = [128, 640], strides = [1, 1]} : vector<192x640xf32> to vector<128x640xf32>
    %c1_57 = arith.constant 1 : index
    %c0_58 = arith.constant 0 : index
    %c0_59 = arith.constant 0 : index
    %59 = vector.load %arg5[%c1_57, %c0_58, %c0_59] : memref<5x640x128xf32, #tpu.memory_space<vmem>>, vector<1x640x128xf32>
    %60 = vector.shape_cast %59 : vector<1x640x128xf32> to vector<640x128xf32>
    %cst_60 = arith.constant dense<0.000000e+00> : vector<128x128xf32>
    %61 = tpu.matmul %58, %60, %cst_60 {dimension_numbers = #tpu.dot_dimension_numbers<[1], [0], [0], [1], [0, 0, 1, 1], [], []>} : vector<128x640xf32>, vector<640x128xf32>, vector<128x128xf32> -> vector<128x128xf32>
    %62 = arith.addf %57, %61 : vector<128x128xf32>
    %63 = vector.extract_strided_slice %51 {offsets = [32, 0], sizes = [128, 640], strides = [1, 1]} : vector<192x640xf32> to vector<128x640xf32>
    %c2_61 = arith.constant 2 : index
    %c0_62 = arith.constant 0 : index
    %c0_63 = arith.constant 0 : index
    %64 = vector.load %arg5[%c2_61, %c0_62, %c0_63] : memref<5x640x128xf32, #tpu.memory_space<vmem>>, vector<1x640x128xf32>
    %65 = vector.shape_cast %64 : vector<1x640x128xf32> to vector<640x128xf32>
    %cst_64 = arith.constant dense<0.000000e+00> : vector<128x128xf32>
    %66 = tpu.matmul %63, %65, %cst_64 {dimension_numbers = #tpu.dot_dimension_numbers<[1], [0], [0], [1], [0, 0, 1, 1], [], []>} : vector<128x640xf32>, vector<640x128xf32>, vector<128x128xf32> -> vector<128x128xf32>
    %67 = arith.addf %62, %66 : vector<128x128xf32>
    %68 = vector.extract_strided_slice %51 {offsets = [48, 0], sizes = [128, 640], strides = [1, 1]} : vector<192x640xf32> to vector<128x640xf32>
    %c3_65 = arith.constant 3 : index
    %c0_66 = arith.constant 0 : index
    %c0_67 = arith.constant 0 : index
    %69 = vector.load %arg5[%c3_65, %c0_66, %c0_67] : memref<5x640x128xf32, #tpu.memory_space<vmem>>, vector<1x640x128xf32>
    %70 = vector.shape_cast %69 : vector<1x640x128xf32> to vector<640x128xf32>
    %cst_68 = arith.constant dense<0.000000e+00> : vector<128x128xf32>
    %71 = tpu.matmul %68, %70, %cst_68 {dimension_numbers = #tpu.dot_dimension_numbers<[1], [0], [0], [1], [0, 0, 1, 1], [], []>} : vector<128x640xf32>, vector<640x128xf32>, vector<128x128xf32> -> vector<128x128xf32>
    %72 = arith.addf %67, %71 : vector<128x128xf32>
    %73 = vector.extract_strided_slice %51 {offsets = [64, 0], sizes = [128, 640], strides = [1, 1]} : vector<192x640xf32> to vector<128x640xf32>
    %c4_69 = arith.constant 4 : index
    %c0_70 = arith.constant 0 : index
    %c0_71 = arith.constant 0 : index
    %74 = vector.load %arg5[%c4_69, %c0_70, %c0_71] : memref<5x640x128xf32, #tpu.memory_space<vmem>>, vector<1x640x128xf32>
    %75 = vector.shape_cast %74 : vector<1x640x128xf32> to vector<640x128xf32>
    %cst_72 = arith.constant dense<0.000000e+00> : vector<128x128xf32>
    %76 = tpu.matmul %73, %75, %cst_72 {dimension_numbers = #tpu.dot_dimension_numbers<[1], [0], [0], [1], [0, 0, 1, 1], [], []>} : vector<128x640xf32>, vector<640x128xf32>, vector<128x128xf32> -> vector<128x128xf32>
    %77 = arith.addf %72, %76 : vector<128x128xf32>
    %c0_73 = arith.constant 0 : index
    %c0_74 = arith.constant 0 : index
    %78 = vector.load %arg6[%c0_73, %c0_74] : memref<1x128xf32, #tpu.memory_space<vmem>>, vector<1x128xf32>
    %79 = vector.broadcast %78 : vector<1x128xf32> to vector<128x128xf32>
    %80 = arith.addf %77, %79 : vector<128x128xf32>
    %81 = arith.negf %80 : vector<128x128xf32>
    %82 = math.exp %81 : vector<128x128xf32>
    %cst_75 = arith.constant 1.000000e+00 : f32
    %83 = vector.broadcast %cst_75 : f32 to vector<128x128xf32>
    %84 = arith.addf %83, %82 : vector<128x128xf32>
    %85 = arith.divf %83, %84 : vector<128x128xf32>
    %86 = arith.mulf %80, %85 : vector<128x128xf32>
    %c0_76 = arith.constant 0 : index
    %c0_77 = arith.constant 0 : index
    %c0_78 = arith.constant 0 : index
    %87 = vector.load %arg7[%c0_76, %c0_77, %c0_78] : memref<1x128x128xf32, #tpu.memory_space<vmem>>, vector<1x128x128xf32>
    %88 = vector.shape_cast %87 : vector<1x128x128xf32> to vector<128x128xf32>
    %89 = arith.addf %86, %88 : vector<128x128xf32>
    %c0_79 = arith.constant 0 : index
    %c0_80 = arith.constant 0 : index
    %c0_81 = arith.constant 0 : index
    %90 = vector.load %arg8[%c0_79, %c0_80, %c0_81] : memref<1x128x128xf32, #tpu.memory_space<vmem>>, vector<1x128x128xf32>
    %91 = vector.shape_cast %90 : vector<1x128x128xf32> to vector<128x128xf32>
    %92 = vector.shape_cast %89 : vector<128x128xf32> to vector<1x128x128xf32>
    tpu.vector_store %arg8[%c0_79, %c0_80, %c0_81], %92 {strides = array<i32>} : memref<1x128x128xf32, #tpu.memory_space<vmem>>, vector<1x128x128xf32>,
    return
  }
  func.func @transform_0(%arg0: i32, %arg1: i32) -> (i32, i32, i32, i32, i32) {
    %c0_i32 = arith.constant 0 : i32
    %c0_i32_0 = arith.constant 0 : i32
    %c0_i32_1 = arith.constant 0 : i32
    %c0_i32_2 = arith.constant 0 : i32
    return %arg0, %arg1, %c0_i32, %c0_i32_0, %c0_i32_1 : i32, i32, i32, i32, i32
  }
  func.func @transform_1(%arg0: i32, %arg1: i32) -> (i32, i32, i32) {
    %c0_i32 = arith.constant 0 : i32
    %c0_i32_0 = arith.constant 0 : i32
    %c0_i32_1 = arith.constant 0 : i32
    %c0_i32_2 = arith.constant 0 : i32
    return %c0_i32, %c0_i32_0, %c0_i32_1 : i32, i32, i32
  }
  func.func @transform_2(%arg0: i32, %arg1: i32) -> (i32, i32) {
    %c0_i32 = arith.constant 0 : i32
    %c0_i32_0 = arith.constant 0 : i32
    %c0_i32_1 = arith.constant 0 : i32
    return %c0_i32, %c0_i32_0 : i32, i32
  }
  func.func @transform_3(%arg0: i32, %arg1: i32) -> (i32, i32, i32) {
    %c0_i32 = arith.constant 0 : i32
    %c0_i32_0 = arith.constant 0 : i32
    %c0_i32_1 = arith.constant 0 : i32
    %c0_i32_2 = arith.constant 0 : i32
    return %c0_i32, %c0_i32_0, %c0_i32_1 : i32, i32, i32
  }
  func.func @transform_4(%arg0: i32, %arg1: i32) -> (i32, i32) {
    %c0_i32 = arith.constant 0 : i32
    %c0_i32_0 = arith.constant 0 : i32
    %c0_i32_1 = arith.constant 0 : i32
    return %c0_i32, %c0_i32_0 : i32, i32
  }
  func.func @transform_5(%arg0: i32, %arg1: i32) -> (i32, i32, i32) {
    %c0_i32 = arith.constant 0 : i32
    %c0_i32_0 = arith.constant 0 : i32
    return %arg0, %arg1, %c0_i32 : i32, i32, i32
  }
  func.func @transform_6(%arg0: i32, %arg1: i32) -> (i32, i32, i32) {
    %c0_i32 = arith.constant 0 : i32
    %c0_i32_0 = arith.constant 0 : i32
    return %arg0, %arg1, %c0_i32 : i32, i32, i32
  }
}

</mosaic_0001>

<llo_original>
// kernel: tpu_custom_call.1
$region0: #{tpu_custom_call.1}
  #allocation0 [shape = 'u32[]', space=smem, size = 0x4, offset = 0x4, fixed_abs, tag = 'smem constant byte address 0x4 - core index']
  #allocation1 [shape = 'u32[144,128]{1,0:T(1,128)}', space=vmem, size = 0x12000, scoped, tag = 'internal scratch']
  #allocation2 [shape = 'f32[12,20,128]{2,1,0:T(8,128)}', space=vmem, size = 0x24000, scoped, tag = 'scratch operand']
  %s0 = inlined_call_operand.vmem [shape: f32[2,2,14,18,128], index: 0, kind: input, shape index: {}]
  %s1 = inlined_call_operand.vmem [shape: f32[3,384,128], index: 1, kind: input, shape index: {}]
  %s2 = inlined_call_operand.hbm [shape: f32[1,128], index: 2, kind: input, shape index: {}]
  %s3 = inlined_call_operand.hbm [shape: f32[5,640,128], index: 3, kind: input, shape index: {}]
  %s4 = inlined_call_operand.hbm [shape: f32[1,128], index: 4, kind: input, shape index: {}]
  %s5 = inlined_call_operand.hbm [shape: f32[2,256,128], index: 5, kind: input, shape index: {}]
  %s6 = inlined_call_operand.hbm [shape: f32[2,256,128], index: 6, kind: output, shape index: {}]
  %s7 = sld [smem:[#allocation0]]
  $region81: #{tpu_custom_call.1} parent=0
    _
  %s9 = ssub.s32 1, %s7
  %s10 = scalar_select 0, %s9, %s7
  $region1: #{tpu_custom_call.1} parent=0
    #allocation3 [shape = 'u8[512]{0}', space=vmem, size = 0x400, scoped, tag = 'input window, operand 2, single buffered']
    #allocation4 [shape = 's32[2]{0}', space=sflag, size = 0x8, scoped, tag = 'scoped memory for tpu_custom_call.1']
    #allocation5 [shape = 's32[2]{0}', space=sflag, size = 0x8, scoped, tag = 'scoped memory for tpu_custom_call.1']
    #allocation6 [shape = 'u8[1638400]{0}', space=vmem, size = 0x190000, scoped, tag = 'input window, operand 3, single buffered']
    #allocation7 [shape = 's32[1]{0}', space=sflag, size = 0x4, scoped, tag = 'scoped memory for tpu_custom_call.1']
    #allocation8 [shape = 'u8[512]{0}', space=vmem, size = 0x400, scoped, tag = 'input window, operand 4, single buffered']
    #allocation9 [shape = 'u8[131072]{0}', space=vmem, size = 0x20000, scoped, tag = 'input window, operand 5']
    #allocation10 [shape = 's32[2]{0}', space=sflag, size = 0x8, scoped, tag = 'scoped memory for tpu_custom_call.1']
    #allocation11 [shape = 'u8[131072]{0}', space=vmem, size = 0x20000, scoped, tag = 'output window, operand 0']
    %11 = vsyncpa [#allocation4], 0
    %12 = vsyncpa [#allocation7], 0
    %13 = vsyncpa [#allocation10], 0
    %s14 = scalar_lea.sflag [#allocation10], 1
    %15 = vsyncpa %s14, 0
    %16 = vsyncpa [#allocation5], 0
    %s17 = scalar_lea.sflag [#allocation5], 1
    %18 = vsyncpa %s17, 0
    loop: start=0, step=1, limit=6
    $region2: #{tpu_custom_call.1} parent=1 // loop_pre_header
      _
    $region3: #{tpu_custom_call.1} parent=1 // loop_header
      %s20 = sphi 0, %s24
      %p21 = scmp.ge.s32.totalorder %s20, 6
      %s27 = sphi 0, %s39
      %s28 = sphi 0, %s35
      %s29 = sphi 0, %s27
      %s30 = sphi 0, %s28
      %s31 = sphi 0, %s29
      %s32 = sphi 0, %s30
      %s44 = sphi 0, %s46
      %s47 = sphi 0, %s44
      %s48 = sphi 0, %s47
      %s64 = sphi 0, %s48
      %s68 = sphi 0, %s68
      %s70 = sphi 0, %s68
      %s71 = sphi 0, %s70
      %s85 = sphi 0, %s71
      %s89 = sphi 0, %s89
      %s91 = sphi 0, %s89
      %s92 = sphi 0, %s91
      %s106 = sphi 0, %s92
      %s110 = sphi 0, %s110
      %s112 = sphi 0, %s110
      %s113 = sphi 0, %s112
      %s127 = sphi 0, %s113
      %s131 = sphi 0, %s131
      %s133 = sphi 0, %s131
      %s134 = sphi 0, %s133
      %s148 = sphi 0, %s134
      %s156 = sphi 0, %s158
      %s159 = sphi 0, %s156
      %s160 = sphi 0, %s159
      %s176 = sphi 0, %s160
      %s184 = sphi 0, %s186
      %s187 = sphi 0, %s184
      %s188 = sphi 0, %s187
      %s204 = sphi 0, %s188
    $region4: #{tpu_custom_call.1} parent=1 // loop_header_branch
      %23 = sbr.rel (%p21) target = $region8
    $region5: #{tpu_custom_call.1} parent=1 // loop_body
      %s25 = ssub.s32 %s20, 1
      %s26 = ssub.s32 %s20, 2
      %s33 = sadd.s32 1, %s28
      %p34 = scmp.ge.s32.totalorder %s33, 2
      %s35 = scalar_select %p34, 0, %s33
      %s36 = sadd.s32 1, %s27
      %s37 = scalar_select %p34, %s36, %s27
      %p38 = scmp.ge.s32.totalorder %s37, 2
      %s39 = scalar_select %p38, 0, %s37
      %s40 = ssub.s32 %s27, %s39
      %s41 = ssub.s32 %s28, %s35
      %s42 = sor.u32 %s40, %s41
      %p43 = scmp.eq.s32.totalorder %s42, 0
      %s45 = sadd.s32 %s44, 1
      %s46 = scalar_select %p43, %s44, %s45
      %p49 = pneg %p43
      %p50 = scmp.eq.s32.totalorder %s20, 3
      %p51 = por %p49, %p50
      %p52 = scmp.ne.s32.totalorder %s44, %s47
      %p53 = scmp.eq.s32.totalorder %s20, 0
      %p54 = por %p52, %p53
      %p55 = scmp.ne.s32.totalorder %s44, %s47
      %p56 = scmp.eq.s32.totalorder %s25, 3
      %p57 = por %p55, %p56
      %p58 = scmp.ne.s32.totalorder %s47, %s48
      %p59 = scmp.eq.s32.totalorder %s25, 0
      %p60 = por %p58, %p59
      %p61 = scmp.ne.s32.totalorder %s47, %s48
      %p62 = scmp.eq.s32.totalorder %s26, 3
      %p63 = por %p61, %p62
      %p65 = scmp.ne.s32.totalorder %s48, %s64
      %p66 = scmp.eq.s32.totalorder %s26, 0
      %p67 = por %p65, %p66
      %s69 = sadd.s32 %s68, 1
      %p72 = scmp.eq.s32.totalorder %s20, 3
      %p73 = scmp.ne.s32.totalorder %s68, %s70
      %p74 = scmp.eq.s32.totalorder %s20, 0
      %p75 = por %p73, %p74
      %p76 = scmp.ne.s32.totalorder %s68, %s70
      %p77 = scmp.eq.s32.totalorder %s25, 3
      %p78 = por %p76, %p77
      %p79 = scmp.ne.s32.totalorder %s70, %s71
      %p80 = scmp.eq.s32.totalorder %s25, 0
      %p81 = por %p79, %p80
      %p82 = scmp.ne.s32.totalorder %s70, %s71
      %p83 = scmp.eq.s32.totalorder %s26, 3
      %p84 = por %p82, %p83
      %p86 = scmp.ne.s32.totalorder %s71, %s85
      %p87 = scmp.eq.s32.totalorder %s26, 0
      %p88 = por %p86, %p87
      %s90 = sadd.s32 %s89, 1
      %p93 = scmp.eq.s32.totalorder %s20, 3
      %p94 = scmp.ne.s32.totalorder %s89, %s91
      %p95 = scmp.eq.s32.totalorder %s20, 0
      %p96 = por %p94, %p95
      %p97 = scmp.ne.s32.totalorder %s89, %s91
      %p98 = scmp.eq.s32.totalorder %s25, 3
      %p99 = por %p97, %p98
      %p100 = scmp.ne.s32.totalorder %s91, %s92
      %p101 = scmp.eq.s32.totalorder %s25, 0
      %p102 = por %p100, %p101
      %p103 = scmp.ne.s32.totalorder %s91, %s92
      %p104 = scmp.eq.s32.totalorder %s26, 3
      %p105 = por %p103, %p104
      %p107 = scmp.ne.s32.totalorder %s92, %s106
      %p108 = scmp.eq.s32.totalorder %s26, 0
      %p109 = por %p107, %p108
      %s111 = sadd.s32 %s110, 1
      %p114 = scmp.eq.s32.totalorder %s20, 3
      %p115 = scmp.ne.s32.totalorder %s110, %s112
      %p116 = scmp.eq.s32.totalorder %s20, 0
      %p117 = por %p115, %p116
      %p118 = scmp.ne.s32.totalorder %s110, %s112
      %p119 = scmp.eq.s32.totalorder %s25, 3
      %p120 = por %p118, %p119
      %p121 = scmp.ne.s32.totalorder %s112, %s113
      %p122 = scmp.eq.s32.totalorder %s25, 0
      %p123 = por %p121, %p122
      %p124 = scmp.ne.s32.totalorder %s112, %s113
      %p125 = scmp.eq.s32.totalorder %s26, 3
      %p126 = por %p124, %p125
      %p128 = scmp.ne.s32.totalorder %s113, %s127
      %p129 = scmp.eq.s32.totalorder %s26, 0
      %p130 = por %p128, %p129
      %s132 = sadd.s32 %s131, 1
      %p135 = scmp.eq.s32.totalorder %s20, 3
      %p136 = scmp.ne.s32.totalorder %s131, %s133
      %p137 = scmp.eq.s32.totalorder %s20, 0
      %p138 = por %p136, %p137
      %p139 = scmp.ne.s32.totalorder %s131, %s133
      %p140 = scmp.eq.s32.totalorder %s25, 3
      %p141 = por %p139, %p140
      %p142 = scmp.ne.s32.totalorder %s133, %s134
      %p143 = scmp.eq.s32.totalorder %s25, 0
      %p144 = por %p142, %p143
      %p145 = scmp.ne.s32.totalorder %s133, %s134
      %p146 = scmp.eq.s32.totalorder %s26, 3
      %p147 = por %p145, %p146
      %p149 = scmp.ne.s32.totalorder %s134, %s148
      %p150 = scmp.eq.s32.totalorder %s26, 0
      %p151 = por %p149, %p150
      %s152 = ssub.s32 %s27, %s39
      %s153 = ssub.s32 %s28, %s35
      %s154 = sor.u32 %s152, %s153
      %p155 = scmp.eq.s32.totalorder %s154, 0
      %s157 = sadd.s32 %s156, 1
      %s158 = scalar_select %p155, %s156, %s157
      %p161 = pneg %p155
      %p162 = scmp.eq.s32.totalorder %s20, 3
      %p163 = por %p161, %p162
      %p164 = scmp.ne.s32.totalorder %s156, %s159
      %p165 = scmp.eq.s32.totalorder %s20, 0
      %p166 = por %p164, %p165
      %p167 = scmp.ne.s32.totalorder %s156, %s159
      %p168 = scmp.eq.s32.totalorder %s25, 3
      %p169 = por %p167, %p168
      %p170 = scmp.ne.s32.totalorder %s159, %s160
      %p171 = scmp.eq.s32.totalorder %s25, 0
      %p172 = por %p170, %p171
      %p173 = scmp.ne.s32.totalorder %s159, %s160
      %p174 = scmp.eq.s32.totalorder %s26, 3
      %p175 = por %p173, %p174
      %p177 = scmp.ne.s32.totalorder %s160, %s176
      %p178 = scmp.eq.s32.totalorder %s26, 0
      %p179 = por %p177, %p178
      %s180 = ssub.s32 %s27, %s39
      %s181 = ssub.s32 %s28, %s35
      %s182 = sor.u32 %s180, %s181
      %p183 = scmp.eq.s32.totalorder %s182, 0
      %s185 = sadd.s32 %s184, 1
      %s186 = scalar_select %p183, %s184, %s185
      %p189 = pneg %p183
      %p190 = scmp.eq.s32.totalorder %s20, 3
      %p191 = por %p189, %p190
      %p192 = scmp.ne.s32.totalorder %s184, %s187
      %p193 = scmp.eq.s32.totalorder %s20, 0
      %p194 = por %p192, %p193
      %p195 = scmp.ne.s32.totalorder %s184, %s187
      %p196 = scmp.eq.s32.totalorder %s25, 3
      %p197 = por %p195, %p196
      %p198 = scmp.ne.s32.totalorder %s187, %s188
      %p199 = scmp.eq.s32.totalorder %s25, 0
      %p200 = por %p198, %p199
      %p201 = scmp.ne.s32.totalorder %s187, %s188
      %p202 = scmp.eq.s32.totalorder %s26, 3
      %p203 = por %p201, %p202
      %p205 = scmp.ne.s32.totalorder %s188, %s204
      %p206 = scmp.eq.s32.totalorder %s26, 0
      %p207 = por %p205, %p206
      %p208 = scmp.le.s32.totalorder 1, %s20
      %p209 = scmp.lt.s32.totalorder %s20, 5
      %p210 = pnand %p208, %p209
      %p211 = pneg %p210
      // Predicated region
      $region9: #{tpu_custom_call.1} parent=5 // pred_check
        _
      $region10: #{tpu_custom_call.1} parent=5 // pred_check_branch
        %213 = sbr.rel (%p210) target = $region12
      $region11: #{tpu_custom_call.1} parent=5 // pred_region
        %s214 = ssub.s32 %s20, 1
        // Predicated region
        $region13: #{tpu_custom_call.1} parent=11 // pred_check
          %p215 = pneg %p81
        $region14: #{tpu_custom_call.1} parent=11 // pred_check_branch
          %217 = sbr.rel (%p215) target = $region16
        $region15: #{tpu_custom_call.1} parent=11 // pred_region
          _
        $region16: #{tpu_custom_call.1} parent=11 // pred_fallthru
          _
        // Predicated region
        $region17: #{tpu_custom_call.1} parent=11 // pred_check
          %p218 = pneg %p102
        $region18: #{tpu_custom_call.1} parent=11 // pred_check_branch
          %220 = sbr.rel (%p218) target = $region20
        $region19: #{tpu_custom_call.1} parent=11 // pred_region
          %s222 = ssub.s32 16, 16
          %223 = vsyncadd [#allocation4], %s222
          %s225 = sshll.u32 [#allocation3], 4
          %s226 = int_to_ptr.vmem [resolvable:$true] %s225
          %228 = dma.hbm_to_vmem [thread:$0]  %s2, 16, %s226, [#allocation4]
        $region20: #{tpu_custom_call.1} parent=11 // pred_fallthru
          _
        // Predicated region
        $region21: #{tpu_custom_call.1} parent=11 // pred_check
          %p229 = pneg %p123
        $region22: #{tpu_custom_call.1} parent=11 // pred_check_branch
          %231 = sbr.rel (%p229) target = $region24
        $region23: #{tpu_custom_call.1} parent=11 // pred_region
          %s233 = ssub.s32 51200, 51200
          %234 = vsyncadd [#allocation7], %s233
          %s235 = sshll.u32 [#allocation6], 4
          %s236 = int_to_ptr.vmem [resolvable:$true] %s235
          %241 = dma.hbm_to_vmem [thread:$0]  %s3, 51200, %s236, [#allocation7], 128, 128, 8
        $region24: #{tpu_custom_call.1} parent=11 // pred_fallthru
          _
        // Predicated region
        $region25: #{tpu_custom_call.1} parent=11 // pred_check
          %p242 = pneg %p144
        $region26: #{tpu_custom_call.1} parent=11 // pred_check_branch
          %244 = sbr.rel (%p242) target = $region28
        $region27: #{tpu_custom_call.1} parent=11 // pred_region
          %s246 = ssub.s32 16, 16
          %247 = vsyncadd [#allocation7], %s246
          %s249 = sshll.u32 [#allocation8], 4
          %s250 = int_to_ptr.vmem [resolvable:$true] %s249
          %252 = dma.hbm_to_vmem [thread:$0]  %s4, 16, %s250, [#allocation7]
        $region28: #{tpu_custom_call.1} parent=11 // pred_fallthru
          _
      $region12: #{tpu_custom_call.1} parent=5 // pred_fallthru
        _
      %p253 = scmp.lt.s32.totalorder %s20, 4
      // Predicated region
      $region29: #{tpu_custom_call.1} parent=5 // pred_check
        %p254 = pneg %p253
      $region30: #{tpu_custom_call.1} parent=5 // pred_check_branch
        %256 = sbr.rel (%p254) target = $region32
      $region31: #{tpu_custom_call.1} parent=5 // pred_region
        // Predicated region
        $region33: #{tpu_custom_call.1} parent=31 // pred_check
          %p257 = pneg %p54
        $region34: #{tpu_custom_call.1} parent=31 // pred_check_branch
          %259 = sbr.rel (%p257) target = $region36
        $region35: #{tpu_custom_call.1} parent=31 // pred_region
          %p260 = scmp.lt.s32.totalorder %s27, 1
          %s261 = scalar_select %p260, %s27, 1
          %p262 = scmp.lt.s32.totalorder %s28, 1
          %s263 = scalar_select %p262, %s28, 1
          %s264 = smul.addr %s263, 42
          %s265 = smul.addr %s261, 84
          %s266 = sadd.s32 %s264, %s265
          %s267 = smul.addr %s266, 8
          %s268 = scalar_lea.vmem %s0, %s267
        $region36: #{tpu_custom_call.1} parent=31 // pred_fallthru
          _
        // Predicated region
        $region37: #{tpu_custom_call.1} parent=31 // pred_check
          %p269 = pneg %p166
        $region38: #{tpu_custom_call.1} parent=31 // pred_check_branch
          %271 = sbr.rel (%p269) target = $region40
        $region39: #{tpu_custom_call.1} parent=31 // pred_region
          %s272 = sand.u32 %s156, 1
          %s273 = scalar_lea.sflag [#allocation10], %s272
          %s274 = sand.u32 %s156, 1
          %s275 = smul.addr %s274, 128
          %s276 = scalar_lea.vmem [#allocation9], %s275
          %s277 = smul.u32 16, %s28
          %s279 = ssub.s32 2048, 2048
          %280 = vsyncadd %s273, %s279
          %s281 = smul.addr %s27, 32
          %s282 = sadd.s32 %s277, %s281
          %s283 = smul.addr %s282, 128
          %s284 = scalar_lea.hbm %s5, %s283
          %s285 = sshll.u32 %s276, 4
          %s286 = int_to_ptr.vmem [resolvable:$true] %s285
          %291 = dma.hbm_to_vmem [thread:$0]  %s284, 2048, %s286, %s273, 128, 128, 8
        $region40: #{tpu_custom_call.1} parent=31 // pred_fallthru
          _
      $region32: #{tpu_custom_call.1} parent=5 // pred_fallthru
        _
      %p292 = scmp.le.s32.totalorder 1, %s20
      %p293 = scmp.lt.s32.totalorder %s20, 5
      %p294 = pnand %p292, %p293
      %p295 = pneg %p294
      // Predicated region
      $region41: #{tpu_custom_call.1} parent=5 // pred_check
        _
      $region42: #{tpu_custom_call.1} parent=5 // pred_check_branch
        %297 = sbr.rel (%p294) target = $region44
      $region43: #{tpu_custom_call.1} parent=5 // pred_region
        %s298 = ssub.s32 %s20, 1
        // Predicated region
        $region45: #{tpu_custom_call.1} parent=43 // pred_check
          %p299 = pneg %p102
        $region46: #{tpu_custom_call.1} parent=43 // pred_check_branch
          %301 = sbr.rel (%p299) target = $region48
        $region47: #{tpu_custom_call.1} parent=43 // pred_region
          %302 = dma.done [#allocation4], 16
        $region48: #{tpu_custom_call.1} parent=43 // pred_fallthru
          _
        // Predicated region
        $region49: #{tpu_custom_call.1} parent=43 // pred_check
          %p303 = pneg %p123
        $region50: #{tpu_custom_call.1} parent=43 // pred_check_branch
          %305 = sbr.rel (%p303) target = $region52
        $region51: #{tpu_custom_call.1} parent=43 // pred_region
          %306 = dma.done [#allocation7], 51200
        $region52: #{tpu_custom_call.1} parent=43 // pred_fallthru
          _
        // Predicated region
        $region53: #{tpu_custom_call.1} parent=43 // pred_check
          %p307 = pneg %p144
        $region54: #{tpu_custom_call.1} parent=43 // pred_check_branch
          %309 = sbr.rel (%p307) target = $region56
        $region55: #{tpu_custom_call.1} parent=43 // pred_region
          %310 = dma.done [#allocation7], 16
        $region56: #{tpu_custom_call.1} parent=43 // pred_fallthru
          _
        %s311 = sand.u32 %s159, 1
        %s312 = scalar_lea.sflag [#allocation10], %s311
        %s313 = sand.u32 %s159, 1
        %s314 = smul.addr %s313, 128
        %s315 = scalar_lea.vmem [#allocation9], %s314
        // Predicated region
        $region57: #{tpu_custom_call.1} parent=43 // pred_check
          %p316 = pneg %p172
        $region58: #{tpu_custom_call.1} parent=43 // pred_check_branch
          %318 = sbr.rel (%p316) target = $region60
        $region59: #{tpu_custom_call.1} parent=43 // pred_region
          %319 = dma.done %s312, 2048
        $region60: #{tpu_custom_call.1} parent=43 // pred_fallthru
          _
        %p320 = scmp.lt.s32.totalorder %s29, 1
        %s321 = scalar_select %p320, %s29, 1
        %p322 = scmp.lt.s32.totalorder %s30, 1
        %s323 = scalar_select %p322, %s30, 1
        %s324 = smul.addr %s323, 42
        %s325 = smul.addr %s321, 84
        %s326 = sadd.s32 %s324, %s325
        %s327 = smul.addr %s326, 8
        %s328 = scalar_lea.vmem %s0, %s327
        %p329 = pneg %p60
        %p330 = pneg %p57
        %p331 = pneg %p81
        %p332 = pneg %p78
        %p333 = pneg %p102
        %p334 = pneg %p99
        %p335 = pneg %p123
        %p336 = pneg %p120
        %p337 = pneg %p144
        %p338 = pneg %p141
        %s339 = sand.u32 %s159, 1
        %s340 = scalar_lea.sflag [#allocation10], %s339
        %s341 = sand.u32 %s159, 1
        %s342 = smul.addr %s341, 128
        %s343 = scalar_lea.vmem [#allocation9], %s342
        %p344 = pneg %p172
        %p345 = pneg %p169
        %p346 = pneg %p200
        %p347 = pneg %p197
        %s348 = sand.u32 %s187, 1
        %s349 = scalar_lea.sflag [#allocation5], %s348
        %s350 = sand.u32 %s187, 1
        %s351 = smul.addr %s350, 128
        %s352 = scalar_lea.vmem [#allocation11], %s351
        %p353 = scmp.lt.s32.totalorder %s29, 1
        %s354 = scalar_select %p353, %s29, 1
        %p355 = scmp.lt.s32.totalorder %s30, 1
        %s356 = scalar_select %p355, %s30, 1
        %s357 = smul.addr %s356, 42
        %s358 = smul.addr %s354, 84
        %s359 = sadd.s32 %s357, %s358
        %s360 = smul.addr %s359, 8
        %s361 = scalar_lea.vmem %s0, %s360
        %s362 = smul.u32 16, %s30
        %s363 = smul.u32 16, %s30
        %v364 = vld [vmem:[%s361] sm:$0xff]
        %v365 = vld [vmem:[%s361 + $0x8] sm:$0xff]
        %v366 = vld [vmem:[%s361 + $0x18] sm:$0xff]
        %v367 = vld [vmem:[%s361 + $0x20] sm:$0xff]
        %v368 = vld [vmem:[%s361 + $0x30] sm:$0xff]
        %v369 = vld [vmem:[%s361 + $0x38] sm:$0xff]
        %v370 = vld [vmem:[%s361 + $0x48] sm:$0xff]
        %v371 = vld [vmem:[%s361 + $0x50] sm:$0xff]
        %v372 = vld [vmem:[%s361 + $0x60] sm:$0xff]
        %v373 = vld [vmem:[%s361 + $0x68] sm:$0xff]
        %v374 = vld [vmem:[%s361 + $0x78] sm:$0xff]
        %v375 = vld [vmem:[%s361 + $0x80] sm:$0xff]
        %v376 = vld [vmem:[%s361 + $0x90] sm:$0xff]
        %v377 = vld [vmem:[%s361 + $0x98] sm:$0xff]
        %v378 = vld [vmem:[%s361 + $0xa8] sm:$0xff]
        %v379 = vld [vmem:[%s361 + $0xb0] sm:$0xff]
        %v380 = vld [vmem:[%s361 + $0xc0] sm:$0xff]
        %v381 = vld [vmem:[%s361 + $0xc8] sm:$0xff]
        %v382 = vld [vmem:[%s361 + $0xd8] sm:$0xff]
        %v383 = vld [vmem:[%s361 + $0xe0] sm:$0xff]
        %v384 = vld [vmem:[%s361 + $0xf0] sm:$0xff]
        %v385 = vld [vmem:[%s361 + $0xf8] sm:$0xff]
        %v386 = vld [vmem:[%s361 + $0x108] sm:$0xff]
        %v387 = vld [vmem:[%s361 + $0x110] sm:$0xff]
        %v388 = vld [vmem:[%s361 + $0x120] sm:$0xff]
        %v389 = vld [vmem:[%s361 + $0x128] sm:$0xff]
        %v390 = vld [vmem:[%s361 + $0x138] sm:$0xff]
        %v391 = vld [vmem:[%s361 + $0x140] sm:$0xff]
        %v392 = vld [vmem:[%s361 + $0x1] sm:$0xff]
        %v393 = vld [vmem:[%s361 + $0x9] sm:$0xff]
        %v394 = vld [vmem:[%s361 + $0x19] sm:$0xff]
        %v395 = vld [vmem:[%s361 + $0x21] sm:$0xff]
        %v396 = vld [vmem:[%s361 + $0x31] sm:$0xff]
        %v397 = vld [vmem:[%s361 + $0x39] sm:$0xff]
        %v398 = vld [vmem:[%s361 + $0x49] sm:$0xff]
        %v399 = vld [vmem:[%s361 + $0x51] sm:$0xff]
        %v400 = vld [vmem:[%s361 + $0x61] sm:$0xff]
        %v401 = vld [vmem:[%s361 + $0x69] sm:$0xff]
        %v402 = vld [vmem:[%s361 + $0x79] sm:$0xff]
        %v403 = vld [vmem:[%s361 + $0x81] sm:$0xff]
        %v404 = vld [vmem:[%s361 + $0x91] sm:$0xff]
        %v405 = vld [vmem:[%s361 + $0x99] sm:$0xff]
        %v406 = vld [vmem:[%s361 + $0xa9] sm:$0xff]
        %v407 = vld [vmem:[%s361 + $0xb1] sm:$0xff]
        %v408 = vld [vmem:[%s361 + $0xc1] sm:$0xff]
        %v409 = vld [vmem:[%s361 + $0xc9] sm:$0xff]
        %v410 = vld [vmem:[%s361 + $0xd9] sm:$0xff]
        %v411 = vld [vmem:[%s361 + $0xe1] sm:$0xff]
        %v412 = vld [vmem:[%s361 + $0xf1] sm:$0xff]
        %v413 = vld [vmem:[%s361 + $0xf9] sm:$0xff]
        %v414 = vld [vmem:[%s361 + $0x109] sm:$0xff]
        %v415 = vld [vmem:[%s361 + $0x111] sm:$0xff]
        %v416 = vld [vmem:[%s361 + $0x121] sm:$0xff]
        %v417 = vld [vmem:[%s361 + $0x129] sm:$0xff]
        %v418 = vld [vmem:[%s361 + $0x139] sm:$0xff]
        %v419 = vld [vmem:[%s361 + $0x141] sm:$0xff]
        %v420 = vld [vmem:[%s361 + $0x2] sm:$0xff]
        %v421 = vld [vmem:[%s361 + $0xa] sm:$0xff]
        %v422 = vld [vmem:[%s361 + $0x1a] sm:$0xff]
        %v423 = vld [vmem:[%s361 + $0x22] sm:$0xff]
        %v424 = vld [vmem:[%s361 + $0x32] sm:$0xff]
        %v425 = vld [vmem:[%s361 + $0x3a] sm:$0xff]
        %v426 = vld [vmem:[%s361 + $0x4a] sm:$0xff]
        %v427 = vld [vmem:[%s361 + $0x52] sm:$0xff]
        %v428 = vld [vmem:[%s361 + $0x62] sm:$0xff]
        %v429 = vld [vmem:[%s361 + $0x6a] sm:$0xff]
        %v430 = vld [vmem:[%s361 + $0x7a] sm:$0xff]
        %v431 = vld [vmem:[%s361 + $0x82] sm:$0xff]
        %v432 = vld [vmem:[%s361 + $0x92] sm:$0xff]
        %v433 = vld [vmem:[%s361 + $0x9a] sm:$0xff]
        %v434 = vld [vmem:[%s361 + $0xaa] sm:$0xff]
        %v435 = vld [vmem:[%s361 + $0xb2] sm:$0xff]
        %v436 = vld [vmem:[%s361 + $0xc2] sm:$0xff]
        %v437 = vld [vmem:[%s361 + $0xca] sm:$0xff]
        %v438 = vld [vmem:[%s361 + $0xda] sm:$0xff]
        %v439 = vld [vmem:[%s361 + $0xe2] sm:$0xff]
        %v440 = vld [vmem:[%s361 + $0xf2] sm:$0xff]
        %v441 = vld [vmem:[%s361 + $0xfa] sm:$0xff]
        %v442 = vld [vmem:[%s361 + $0x10a] sm:$0xff]
        %v443 = vld [vmem:[%s361 + $0x112] sm:$0xff]
        %v444 = vld [vmem:[%s361 + $0x122] sm:$0xff]
        %v445 = vld [vmem:[%s361 + $0x12a] sm:$0xff]
        %v446 = vld [vmem:[%s361 + $0x13a] sm:$0xff]
        %v447 = vld [vmem:[%s361 + $0x142] sm:$0xff]
        %v448 = vld [vmem:[%s1] sm:$0xff]
        %v449 = vld [vmem:[%s1 + $0x8] sm:$0xff]
        %v450 = vld [vmem:[%s1 + $0x10] sm:$0xff]
        %v451 = vld [vmem:[%s1 + $0x18] sm:$0xff]
        %v452 = vld [vmem:[%s1 + $0x20] sm:$0xff]
        %v453 = vld [vmem:[%s1 + $0x28] sm:$0xff]
        %v454 = vld [vmem:[%s1 + $0x30] sm:$0xff]
        %v455 = vld [vmem:[%s1 + $0x38] sm:$0xff]
        %v456 = vld [vmem:[%s1 + $0x40] sm:$0xff]
        %v457 = vld [vmem:[%s1 + $0x48] sm:$0xff]
        %v458 = vld [vmem:[%s1 + $0x50] sm:$0xff]
        %v459 = vld [vmem:[%s1 + $0x58] sm:$0xff]
        %v460 = vld [vmem:[%s1 + $0x60] sm:$0xff]
        %v461 = vld [vmem:[%s1 + $0x68] sm:$0xff]
        %v462 = vld [vmem:[%s1 + $0x70] sm:$0xff]
        %v463 = vld [vmem:[%s1 + $0x78] sm:$0xff]
        %v464 = vld [vmem:[%s1 + $0x80] sm:$0xff]
        %v465 = vld [vmem:[%s1 + $0x88] sm:$0xff]
        %v466 = vld [vmem:[%s1 + $0x90] sm:$0xff]
        %v467 = vld [vmem:[%s1 + $0x98] sm:$0xff]
        %v468 = vld [vmem:[%s1 + $0xa0] sm:$0xff]
        %v469 = vld [vmem:[%s1 + $0xa8] sm:$0xff]
        %v470 = vld [vmem:[%s1 + $0xb0] sm:$0xff]
        %v471 = vld [vmem:[%s1 + $0xb8] sm:$0xff]
        %v472 = vld [vmem:[%s1 + $0xc0] sm:$0xff]
        %v473 = vld [vmem:[%s1 + $0xc8] sm:$0xff]
        %v474 = vld [vmem:[%s1 + $0xd0] sm:$0xff]
        %v475 = vld [vmem:[%s1 + $0xd8] sm:$0xff]
        %v476 = vld [vmem:[%s1 + $0xe0] sm:$0xff]
        %v477 = vld [vmem:[%s1 + $0xe8] sm:$0xff]
        %v478 = vld [vmem:[%s1 + $0xf0] sm:$0xff]
        %v479 = vld [vmem:[%s1 + $0xf8] sm:$0xff]
        %v480 = vld [vmem:[%s1 + $0x100] sm:$0xff]
        %v481 = vld [vmem:[%s1 + $0x108] sm:$0xff]
        %v482 = vld [vmem:[%s1 + $0x110] sm:$0xff]
        %v483 = vld [vmem:[%s1 + $0x118] sm:$0xff]
        %v484 = vld [vmem:[%s1 + $0x120] sm:$0xff]
        %v485 = vld [vmem:[%s1 + $0x128] sm:$0xff]
        %v486 = vld [vmem:[%s1 + $0x130] sm:$0xff]
        %v487 = vld [vmem:[%s1 + $0x138] sm:$0xff]
        %v488 = vld [vmem:[%s1 + $0x140] sm:$0xff]
        %v489 = vld [vmem:[%s1 + $0x148] sm:$0xff]
        %v490 = vld [vmem:[%s1 + $0x150] sm:$0xff]
        %v491 = vld [vmem:[%s1 + $0x158] sm:$0xff]
        %v492 = vld [vmem:[%s1 + $0x160] sm:$0xff]
        %v493 = vld [vmem:[%s1 + $0x168] sm:$0xff]
        %v494 = vld [vmem:[%s1 + $0x170] sm:$0xff]
        %v495 = vld [vmem:[%s1 + $0x178] sm:$0xff]
        %s496 = scalar_lea.vmem %s1, 384
        %v497 = vld [vmem:[%s496] sm:$0xff]
        %v498 = vld [vmem:[%s496 + $0x8] sm:$0xff]
        %v499 = vld [vmem:[%s496 + $0x10] sm:$0xff]
        %v500 = vld [vmem:[%s496 + $0x18] sm:$0xff]
        %v501 = vld [vmem:[%s496 + $0x20] sm:$0xff]
        %v502 = vld [vmem:[%s496 + $0x28] sm:$0xff]
        %v503 = vld [vmem:[%s496 + $0x30] sm:$0xff]
        %v504 = vld [vmem:[%s496 + $0x38] sm:$0xff]
        %v505 = vld [vmem:[%s496 + $0x40] sm:$0xff]
        %v506 = vld [vmem:[%s496 + $0x48] sm:$0xff]
        %v507 = vld [vmem:[%s496 + $0x50] sm:$0xff]
        %v508 = vld [vmem:[%s496 + $0x58] sm:$0xff]
        %v509 = vld [vmem:[%s496 + $0x60] sm:$0xff]
        %v510 = vld [vmem:[%s496 + $0x68] sm:$0xff]
        %v511 = vld [vmem:[%s496 + $0x70] sm:$0xff]
        %v512 = vld [vmem:[%s496 + $0x78] sm:$0xff]
        %v513 = vld [vmem:[%s496 + $0x80] sm:$0xff]
        %v514 = vld [vmem:[%s496 + $0x88] sm:$0xff]
        %v515 = vld [vmem:[%s496 + $0x90] sm:$0xff]
        %v516 = vld [vmem:[%s496 + $0x98] sm:$0xff]
        %v517 = vld [vmem:[%s496 + $0xa0] sm:$0xff]
        %v518 = vld [vmem:[%s496 + $0xa8] sm:$0xff]
        %v519 = vld [vmem:[%s496 + $0xb0] sm:$0xff]
        %v520 = vld [vmem:[%s496 + $0xb8] sm:$0xff]
        %v521 = vld [vmem:[%s496 + $0xc0] sm:$0xff]
        %v522 = vld [vmem:[%s496 + $0xc8] sm:$0xff]
        %v523 = vld [vmem:[%s496 + $0xd0] sm:$0xff]
        %v524 = vld [vmem:[%s496 + $0xd8] sm:$0xff]
        %v525 = vld [vmem:[%s496 + $0xe0] sm:$0xff]
        %v526 = vld [vmem:[%s496 + $0xe8] sm:$0xff]
        %v527 = vld [vmem:[%s496 + $0xf0] sm:$0xff]
        %v528 = vld [vmem:[%s496 + $0xf8] sm:$0xff]
        %v529 = vld [vmem:[%s496 + $0x100] sm:$0xff]
        %v530 = vld [vmem:[%s496 + $0x108] sm:$0xff]
        %v531 = vld [vmem:[%s496 + $0x110] sm:$0xff]
        %v532 = vld [vmem:[%s496 + $0x118] sm:$0xff]
        %v533 = vld [vmem:[%s496 + $0x120] sm:$0xff]
        %v534 = vld [vmem:[%s496 + $0x128] sm:$0xff]
        %v535 = vld [vmem:[%s496 + $0x130] sm:$0xff]
        %v536 = vld [vmem:[%s496 + $0x138] sm:$0xff]
        %v537 = vld [vmem:[%s496 + $0x140] sm:$0xff]
        %v538 = vld [vmem:[%s496 + $0x148] sm:$0xff]
        %v539 = vld [vmem:[%s496 + $0x150] sm:$0xff]
        %v540 = vld [vmem:[%s496 + $0x158] sm:$0xff]
        %v541 = vld [vmem:[%s496 + $0x160] sm:$0xff]
        %v542 = vld [vmem:[%s496 + $0x168] sm:$0xff]
        %v543 = vld [vmem:[%s496 + $0x170] sm:$0xff]
        %v544 = vld [vmem:[%s496 + $0x178] sm:$0xff]
        %545 = vmatprep.subr.mxu0 0.0
        %546 = vmatpush1.msra.mxu0 %v512
        %547 = vmatprep.subr.mxu0 0.0
        %548 = vmatpush1.msra.mxu0 %v511
        %549 = vmatprep.subr.mxu0 0.0
        %550 = vmatpush1.msra.mxu0 %v510
        %551 = vmatprep.subr.mxu0 0.0
        %552 = vmatpush1.msra.mxu0 %v509
        %553 = vmatprep.subr.mxu0 0.0
        %554 = vmatpush1.msra.mxu0 %v508
        %555 = vmatprep.subr.mxu0 0.0
        %556 = vmatpush1.msra.mxu0 %v507
        %557 = vmatprep.subr.mxu0 0.0
        %558 = vmatpush1.msra.mxu0 %v506
        %559 = vmatprep.subr.mxu0 0.0
        %560 = vmatpush1.msra.mxu0 %v505
        %561 = vmatprep.subr.mxu0 0.0
        %562 = vmatpush1.msra.mxu0 %v504
        %563 = vmatprep.subr.mxu0 0.0
        %564 = vmatpush1.msra.mxu0 %v503
        %565 = vmatprep.subr.mxu0 0.0
        %566 = vmatpush1.msra.mxu0 %v502
        %567 = vmatprep.subr.mxu0 0.0
        %568 = vmatpush1.msra.mxu0 %v501
        %569 = vmatprep.subr.mxu0 0.0
        %570 = vmatpush1.msra.mxu0 %v500
        %571 = vmatprep.subr.mxu0 0.0
        %572 = vmatpush1.msra.mxu0 %v499
        %573 = vmatprep.subr.mxu0 0.0
        %574 = vmatpush1.msra.mxu0 %v498
        %575 = vmatprep.subr.mxu0 0.0
        %576 = vmatpush1.msra.mxu0 %v497
        %577 = vmatprep.subr.mxu0 0.0
        %578 = vmatpush2.msra.mxu0 %v528
        %579 = vmatprep.subr.mxu0 0.0
        %580 = vmatpush2.msra.mxu0 %v527
        %581 = vmatprep.subr.mxu0 0.0
        %582 = vmatpush2.msra.mxu0 %v526
        %583 = vmatprep.subr.mxu0 0.0
        %584 = vmatpush2.msra.mxu0 %v525
        %585 = vmatprep.subr.mxu0 0.0
        %586 = vmatpush2.msra.mxu0 %v524
        %587 = vmatprep.subr.mxu0 0.0
        %588 = vmatpush2.msra.mxu0 %v523
        %589 = vmatprep.subr.mxu0 0.0
        %590 = vmatpush2.msra.mxu0 %v522
        %591 = vmatprep.subr.mxu0 0.0
        %592 = vmatpush2.msra.mxu0 %v521
        %593 = vmatprep.subr.mxu0 0.0
        %594 = vmatpush2.msra.mxu0 %v520
        %595 = vmatprep.subr.mxu0 0.0
        %596 = vmatpush2.msra.mxu0 %v519
        %597 = vmatprep.subr.mxu0 0.0
        %598 = vmatpush2.msra.mxu0 %v518
        %599 = vmatprep.subr.mxu0 0.0
        %600 = vmatpush2.msra.mxu0 %v517
        %601 = vmatprep.subr.mxu0 0.0
        %602 = vmatpush2.msra.mxu0 %v516
        %603 = vmatprep.subr.mxu0 0.0
        %604 = vmatpush2.msra.mxu0 %v515
        %605 = vmatprep.subr.mxu0 0.0
        %606 = vmatpush2.msra.mxu0 %v514
        %607 = vmatprep.subr.mxu0 0.0
        %608 = vmatpush2.msra.mxu0 %v513
        %609 = vmatprep.mubr.f32.mxu0 %v394
        %610 = vmatmul.mubr.f32.gmra.mxu0 %v366
        %v611 = vpop.f32.mrf.mxu0
        %v612 = vadd.f32 0.0, %v611
        %v613 = vpop.f32.mrf.mxu0
        %614 = vmatprep.mubr.f32.mxu0 %v395
        %615 = vmatmul.mubr.f32.gmra.mxu0 %v367
        %v616 = vpop.f32.mrf.mxu0
        %v617 = vadd.f32 0.0, %v616
        %v618 = vpop.f32.mrf.mxu0
        %619 = vmatprep.mubr.f32.mxu0 %v396
        %620 = vmatmul.mubr.f32.gmra.mxu0 %v368
        %v621 = vpop.f32.mrf.mxu0
        %v622 = vadd.f32 0.0, %v621
        %v623 = vpop.f32.mrf.mxu0
        %624 = vmatprep.mubr.f32.mxu0 %v397
        %625 = vmatmul.mubr.f32.gmra.mxu0 %v369
        %v626 = vpop.f32.mrf.mxu0
        %v627 = vadd.f32 0.0, %v626
        %v628 = vpop.f32.mrf.mxu0
        %629 = vmatprep.mubr.f32.mxu0 %v398
        %630 = vmatmul.mubr.f32.gmra.mxu0 %v370
        %v631 = vpop.f32.mrf.mxu0
        %v632 = vadd.f32 0.0, %v631
        %v633 = vpop.f32.mrf.mxu0
        %634 = vmatprep.mubr.f32.mxu0 %v399
        %635 = vmatmul.mubr.f32.gmra.mxu0 %v371
        %v636 = vpop.f32.mrf.mxu0
        %v637 = vadd.f32 0.0, %v636
        %v638 = vpop.f32.mrf.mxu0
        %639 = vmatprep.mubr.f32.mxu0 %v400
        %640 = vmatmul.mubr.f32.gmra.mxu0 %v372
        %v641 = vpop.f32.mrf.mxu0
        %v642 = vadd.f32 0.0, %v641
        %v643 = vpop.f32.mrf.mxu0
        %644 = vmatprep.mubr.f32.mxu0 %v401
        %645 = vmatmul.mubr.f32.gmra.mxu0 %v373
        %v646 = vpop.f32.mrf.mxu0
        %v647 = vadd.f32 0.0, %v646
        %v648 = vpop.f32.mrf.mxu0
        %649 = vmatprep.mubr.f32.mxu0 %v402
        %650 = vmatmul.mubr.f32.gmra.mxu0 %v374
        %v651 = vpop.f32.mrf.mxu0
        %v652 = vadd.f32 0.0, %v651
        %v653 = vpop.f32.mrf.mxu0
        %654 = vmatprep.mubr.f32.mxu0 %v403
        %655 = vmatmul.mubr.f32.gmra.mxu0 %v375
        %v656 = vpop.f32.mrf.mxu0
        %v657 = vadd.f32 0.0, %v656
        %v658 = vpop.f32.mrf.mxu0
        %659 = vmatprep.mubr.f32.mxu0 %v404
        %660 = vmatmul.mubr.f32.gmra.mxu0 %v376
        %v661 = vpop.f32.mrf.mxu0
        %v662 = vadd.f32 0.0, %v661
        %v663 = vpop.f32.mrf.mxu0
        %664 = vmatprep.mubr.f32.mxu0 %v405
        %665 = vmatmul.mubr.f32.gmra.mxu0 %v377
        %v666 = vpop.f32.mrf.mxu0
        %v667 = vadd.f32 0.0, %v666
        %v668 = vpop.f32.mrf.mxu0
        %669 = vmatprep.mubr.f32.mxu0 %v406
        %670 = vmatmul.mubr.f32.gmra.mxu0 %v378
        %v671 = vpop.f32.mrf.mxu0
        %v672 = vadd.f32 0.0, %v671
        %v673 = vpop.f32.mrf.mxu0
        %674 = vmatprep.mubr.f32.mxu0 %v407
        %675 = vmatmul.mubr.f32.gmra.mxu0 %v379
        %v676 = vpop.f32.mrf.mxu0
        %v677 = vadd.f32 0.0, %v676
        %v678 = vpop.f32.mrf.mxu0
        %679 = vmatprep.mubr.f32.mxu0 %v408
        %680 = vmatmul.mubr.f32.gmra.mxu0 %v380
        %v681 = vpop.f32.mrf.mxu0
        %v682 = vadd.f32 0.0, %v681
        %v683 = vpop.f32.mrf.mxu0
        %684 = vmatprep.mubr.f32.mxu0 %v409
        %685 = vmatmul.mubr.f32.gmra.mxu0 %v381
        %v686 = vpop.f32.mrf.mxu0
        %v687 = vadd.f32 0.0, %v686
        %v688 = vpop.f32.mrf.mxu0
        %689 = vmatprep.mubr.f32.mxu0 %v410
        %690 = vmatmul.mubr.f32.gmra.mxu0 %v382
        %v691 = vpop.f32.mrf.mxu0
        %v692 = vadd.f32 0.0, %v691
        %v693 = vpop.f32.mrf.mxu0
        %694 = vmatprep.mubr.f32.mxu0 %v411
        %695 = vmatmul.mubr.f32.gmra.mxu0 %v383
        %v696 = vpop.f32.mrf.mxu0
        %v697 = vadd.f32 0.0, %v696
        %v698 = vpop.f32.mrf.mxu0
        %699 = vmatprep.mubr.f32.mxu0 %v412
        %700 = vmatmul.mubr.f32.gmra.mxu0 %v384
        %v701 = vpop.f32.mrf.mxu0
        %v702 = vadd.f32 0.0, %v701
        %v703 = vpop.f32.mrf.mxu0
        %704 = vmatprep.mubr.f32.mxu0 %v413
        %705 = vmatmul.mubr.f32.gmra.mxu0 %v385
        %v706 = vpop.f32.mrf.mxu0
        %v707 = vadd.f32 0.0, %v706
        %v708 = vpop.f32.mrf.mxu0
        %709 = vmatprep.mubr.f32.mxu0 %v414
        %710 = vmatmul.mubr.f32.gmra.mxu0 %v386
        %v711 = vpop.f32.mrf.mxu0
        %v712 = vadd.f32 0.0, %v711
        %v713 = vpop.f32.mrf.mxu0
        %714 = vmatprep.mubr.f32.mxu0 %v415
        %715 = vmatmul.mubr.f32.gmra.mxu0 %v387
        %v716 = vpop.f32.mrf.mxu0
        %v717 = vadd.f32 0.0, %v716
        %v718 = vpop.f32.mrf.mxu0
        %719 = vmatprep.mubr.f32.mxu0 %v416
        %720 = vmatmul.mubr.f32.gmra.mxu0 %v388
        %v721 = vpop.f32.mrf.mxu0
        %v722 = vadd.f32 0.0, %v721
        %v723 = vpop.f32.mrf.mxu0
        %724 = vmatprep.mubr.f32.mxu0 %v417
        %725 = vmatmul.mubr.f32.gmra.mxu0 %v389
        %v726 = vpop.f32.mrf.mxu0
        %v727 = vadd.f32 0.0, %v726
        %v728 = vpop.f32.mrf.mxu0
        %729 = vdwg.mxu0
        %730 = vmatprep.subr.mxu0 0.0
        %731 = vmatpush1.msra.mxu0 %v544
        %732 = vmatprep.subr.mxu0 0.0
        %733 = vmatpush1.msra.mxu0 %v543
        %734 = vmatprep.subr.mxu0 0.0
        %735 = vmatpush1.msra.mxu0 %v542
        %736 = vmatprep.subr.mxu0 0.0
        %737 = vmatpush1.msra.mxu0 %v541
        %738 = vmatprep.subr.mxu0 0.0
        %739 = vmatpush1.msra.mxu0 %v540
        %740 = vmatprep.subr.mxu0 0.0
        %741 = vmatpush1.msra.mxu0 %v539
        %742 = vmatprep.subr.mxu0 0.0
        %743 = vmatpush1.msra.mxu0 %v538
        %744 = vmatprep.subr.mxu0 0.0
        %745 = vmatpush1.msra.mxu0 %v537
        %746 = vmatprep.subr.mxu0 0.0
        %747 = vmatpush1.msra.mxu0 %v536
        %748 = vmatprep.subr.mxu0 0.0
        %749 = vmatpush1.msra.mxu0 %v535
        %750 = vmatprep.subr.mxu0 0.0
        %751 = vmatpush1.msra.mxu0 %v534
        %752 = vmatprep.subr.mxu0 0.0
        %753 = vmatpush1.msra.mxu0 %v533
        %754 = vmatprep.subr.mxu0 0.0
        %755 = vmatpush1.msra.mxu0 %v532
        %756 = vmatprep.subr.mxu0 0.0
        %757 = vmatpush1.msra.mxu0 %v531
        %758 = vmatprep.subr.mxu0 0.0
        %759 = vmatpush1.msra.mxu0 %v530
        %760 = vmatprep.subr.mxu0 0.0
        %761 = vmatpush1.msra.mxu0 %v529
        %762 = vmatprep.subr.mxu0 0.0
        %763 = vmatpush2.msra.mxu0 0.0
        %764 = vmatprep.subr.mxu0 0.0
        %765 = vmatpush2.msra.mxu0 0.0
        %766 = vmatprep.subr.mxu0 0.0
        %767 = vmatpush2.msra.mxu0 0.0
        %768 = vmatprep.subr.mxu0 0.0
        %769 = vmatpush2.msra.mxu0 0.0
        %770 = vmatprep.subr.mxu0 0.0
        %771 = vmatpush2.msra.mxu0 0.0
        %772 = vmatprep.subr.mxu0 0.0
        %773 = vmatpush2.msra.mxu0 0.0
        %774 = vmatprep.subr.mxu0 0.0
        %775 = vmatpush2.msra.mxu0 0.0
        %776 = vmatprep.subr.mxu0 0.0
        %777 = vmatpush2.msra.mxu0 0.0
        %778 = vmatprep.subr.mxu0 0.0
        %779 = vmatpush2.msra.mxu0 0.0
        %780 = vmatprep.subr.mxu0 0.0
        %781 = vmatpush2.msra.mxu0 0.0
        %782 = vmatprep.subr.mxu0 0.0
        %783 = vmatpush2.msra.mxu0 0.0
        %784 = vmatprep.subr.mxu0 0.0
        %785 = vmatpush2.msra.mxu0 0.0
        %786 = vmatprep.subr.mxu0 0.0
        %787 = vmatpush2.msra.mxu0 0.0
        %788 = vmatprep.subr.mxu0 0.0
        %789 = vmatpush2.msra.mxu0 0.0
        %790 = vmatprep.subr.mxu0 0.0
        %791 = vmatpush2.msra.mxu0 0.0
        %792 = vmatprep.subr.mxu0 0.0
        %793 = vmatpush2.msra.mxu0 0.0
        %794 = vmatprep.mubr.f32.mxu0 0.0
        %795 = vmatmul.mubr.f32.gmra.mxu0 %v422
        %v796 = vpop.f32.mrf.mxu0
        %v797 = vadd.f32 %v612, %v796
        %v798 = vpop.f32.mrf.mxu0
        %799 = vmatprep.mubr.f32.mxu0 0.0
        %800 = vmatmul.mubr.f32.gmra.mxu0 %v423
        %v801 = vpop.f32.mrf.mxu0
        %v802 = vadd.f32 %v617, %v801
        %v803 = vpop.f32.mrf.mxu0
        %804 = vmatprep.mubr.f32.mxu0 0.0
        %805 = vmatmul.mubr.f32.gmra.mxu0 %v424
        %v806 = vpop.f32.mrf.mxu0
        %v807 = vadd.f32 %v622, %v806
        %v808 = vpop.f32.mrf.mxu0
        %809 = vmatprep.mubr.f32.mxu0 0.0
        %810 = vmatmul.mubr.f32.gmra.mxu0 %v425
        %v811 = vpop.f32.mrf.mxu0
        %v812 = vadd.f32 %v627, %v811
        %v813 = vpop.f32.mrf.mxu0
        %814 = vmatprep.mubr.f32.mxu0 0.0
        %815 = vmatmul.mubr.f32.gmra.mxu0 %v426
        %v816 = vpop.f32.mrf.mxu0
        %v817 = vadd.f32 %v632, %v816
        %v818 = vpop.f32.mrf.mxu0
        %819 = vmatprep.mubr.f32.mxu0 0.0
        %820 = vmatmul.mubr.f32.gmra.mxu0 %v427
        %v821 = vpop.f32.mrf.mxu0
        %v822 = vadd.f32 %v637, %v821
        %v823 = vpop.f32.mrf.mxu0
        %824 = vmatprep.mubr.f32.mxu0 0.0
        %825 = vmatmul.mubr.f32.gmra.mxu0 %v428
        %v826 = vpop.f32.mrf.mxu0
        %v827 = vadd.f32 %v642, %v826
        %v828 = vpop.f32.mrf.mxu0
        %829 = vmatprep.mubr.f32.mxu0 0.0
        %830 = vmatmul.mubr.f32.gmra.mxu0 %v429
        %v831 = vpop.f32.mrf.mxu0
        %v832 = vadd.f32 %v647, %v831
        %v833 = vpop.f32.mrf.mxu0
        %834 = vmatprep.mubr.f32.mxu0 0.0
        %835 = vmatmul.mubr.f32.gmra.mxu0 %v430
        %v836 = vpop.f32.mrf.mxu0
        %v837 = vadd.f32 %v652, %v836
        %v838 = vpop.f32.mrf.mxu0
        %839 = vmatprep.mubr.f32.mxu0 0.0
        %840 = vmatmul.mubr.f32.gmra.mxu0 %v431
        %v841 = vpop.f32.mrf.mxu0
        %v842 = vadd.f32 %v657, %v841
        %v843 = vpop.f32.mrf.mxu0
        %844 = vmatprep.mubr.f32.mxu0 0.0
        %845 = vmatmul.mubr.f32.gmra.mxu0 %v432
        %v846 = vpop.f32.mrf.mxu0
        %v847 = vadd.f32 %v662, %v846
        %v848 = vpop.f32.mrf.mxu0
        %849 = vmatprep.mubr.f32.mxu0 0.0
        %850 = vmatmul.mubr.f32.gmra.mxu0 %v433
        %v851 = vpop.f32.mrf.mxu0
        %v852 = vadd.f32 %v667, %v851
        %v853 = vpop.f32.mrf.mxu0
        %854 = vmatprep.mubr.f32.mxu0 0.0
        %855 = vmatmul.mubr.f32.gmra.mxu0 %v434
        %v856 = vpop.f32.mrf.mxu0
        %v857 = vadd.f32 %v672, %v856
        %v858 = vpop.f32.mrf.mxu0
        %859 = vmatprep.mubr.f32.mxu0 0.0
        %860 = vmatmul.mubr.f32.gmra.mxu0 %v435
        %v861 = vpop.f32.mrf.mxu0
        %v862 = vadd.f32 %v677, %v861
        %v863 = vpop.f32.mrf.mxu0
        %864 = vmatprep.mubr.f32.mxu0 0.0
        %865 = vmatmul.mubr.f32.gmra.mxu0 %v436
        %v866 = vpop.f32.mrf.mxu0
        %v867 = vadd.f32 %v682, %v866
        %v868 = vpop.f32.mrf.mxu0
        %869 = vmatprep.mubr.f32.mxu0 0.0
        %870 = vmatmul.mubr.f32.gmra.mxu0 %v437
        %v871 = vpop.f32.mrf.mxu0
        %v872 = vadd.f32 %v687, %v871
        %v873 = vpop.f32.mrf.mxu0
        %874 = vmatprep.mubr.f32.mxu0 0.0
        %875 = vmatmul.mubr.f32.gmra.mxu0 %v438
        %v876 = vpop.f32.mrf.mxu0
        %v877 = vadd.f32 %v692, %v876
        %v878 = vpop.f32.mrf.mxu0
        %879 = vmatprep.mubr.f32.mxu0 0.0
        %880 = vmatmul.mubr.f32.gmra.mxu0 %v439
        %v881 = vpop.f32.mrf.mxu0
        %v882 = vadd.f32 %v697, %v881
        %v883 = vpop.f32.mrf.mxu0
        %884 = vmatprep.mubr.f32.mxu0 0.0
        %885 = vmatmul.mubr.f32.gmra.mxu0 %v440
        %v886 = vpop.f32.mrf.mxu0
        %v887 = vadd.f32 %v702, %v886
        %v888 = vpop.f32.mrf.mxu0
        %889 = vmatprep.mubr.f32.mxu0 0.0
        %890 = vmatmul.mubr.f32.gmra.mxu0 %v441
        %v891 = vpop.f32.mrf.mxu0
        %v892 = vadd.f32 %v707, %v891
        %v893 = vpop.f32.mrf.mxu0
        %894 = vmatprep.mubr.f32.mxu0 0.0
        %895 = vmatmul.mubr.f32.gmra.mxu0 %v442
        %v896 = vpop.f32.mrf.mxu0
        %v897 = vadd.f32 %v712, %v896
        %v898 = vpop.f32.mrf.mxu0
        %899 = vmatprep.mubr.f32.mxu0 0.0
        %900 = vmatmul.mubr.f32.gmra.mxu0 %v443
        %v901 = vpop.f32.mrf.mxu0
        %v902 = vadd.f32 %v717, %v901
        %v903 = vpop.f32.mrf.mxu0
        %904 = vmatprep.mubr.f32.mxu0 0.0
        %905 = vmatmul.mubr.f32.gmra.mxu0 %v444
        %v906 = vpop.f32.mrf.mxu0
        %v907 = vadd.f32 %v722, %v906
        %v908 = vpop.f32.mrf.mxu0
        %909 = vmatprep.mubr.f32.mxu0 0.0
        %910 = vmatmul.mubr.f32.gmra.mxu0 %v445
        %v911 = vpop.f32.mrf.mxu0
        %v912 = vadd.f32 %v727, %v911
        %v913 = vpop.f32.mrf.mxu0
        %914 = vdwg.mxu0
        %915 = vmatprep.subr.mxu0 0.0
        %916 = vmatpush1.msra.mxu0 %v463
        %917 = vmatprep.subr.mxu0 0.0
        %918 = vmatpush1.msra.mxu0 %v462
        %919 = vmatprep.subr.mxu0 0.0
        %920 = vmatpush1.msra.mxu0 %v461
        %921 = vmatprep.subr.mxu0 0.0
        %922 = vmatpush1.msra.mxu0 %v460
        %923 = vmatprep.subr.mxu0 0.0
        %924 = vmatpush1.msra.mxu0 %v459
        %925 = vmatprep.subr.mxu0 0.0
        %926 = vmatpush1.msra.mxu0 %v458
        %927 = vmatprep.subr.mxu0 0.0
        %928 = vmatpush1.msra.mxu0 %v457
        %929 = vmatprep.subr.mxu0 0.0
        %930 = vmatpush1.msra.mxu0 %v456
        %931 = vmatprep.subr.mxu0 0.0
        %932 = vmatpush1.msra.mxu0 %v455
        %933 = vmatprep.subr.mxu0 0.0
        %934 = vmatpush1.msra.mxu0 %v454
        %935 = vmatprep.subr.mxu0 0.0
        %936 = vmatpush1.msra.mxu0 %v453
        %937 = vmatprep.subr.mxu0 0.0
        %938 = vmatpush1.msra.mxu0 %v452
        %939 = vmatprep.subr.mxu0 0.0
        %940 = vmatpush1.msra.mxu0 %v451
        %941 = vmatprep.subr.mxu0 0.0
        %942 = vmatpush1.msra.mxu0 %v450
        %943 = vmatprep.subr.mxu0 0.0
        %944 = vmatpush1.msra.mxu0 %v449
        %945 = vmatprep.subr.mxu0 0.0
        %946 = vmatpush1.msra.mxu0 %v448
        %947 = vmatprep.subr.mxu0 0.0
        %948 = vmatpush2.msra.mxu0 %v479
        %949 = vmatprep.subr.mxu0 0.0
        %950 = vmatpush2.msra.mxu0 %v478
        %951 = vmatprep.subr.mxu0 0.0
        %952 = vmatpush2.msra.mxu0 %v477
        %953 = vmatprep.subr.mxu0 0.0
        %954 = vmatpush2.msra.mxu0 %v476
        %955 = vmatprep.subr.mxu0 0.0
        %956 = vmatpush2.msra.mxu0 %v475
        %957 = vmatprep.subr.mxu0 0.0
        %958 = vmatpush2.msra.mxu0 %v474
        %959 = vmatprep.subr.mxu0 0.0
        %960 = vmatpush2.msra.mxu0 %v473
        %961 = vmatprep.subr.mxu0 0.0
        %962 = vmatpush2.msra.mxu0 %v472
        %963 = vmatprep.subr.mxu0 0.0
        %964 = vmatpush2.msra.mxu0 %v471
        %965 = vmatprep.subr.mxu0 0.0
        %966 = vmatpush2.msra.mxu0 %v470
        %967 = vmatprep.subr.mxu0 0.0
        %968 = vmatpush2.msra.mxu0 %v469
        %969 = vmatprep.subr.mxu0 0.0
        %970 = vmatpush2.msra.mxu0 %v468
        %971 = vmatprep.subr.mxu0 0.0
        %972 = vmatpush2.msra.mxu0 %v467
        %973 = vmatprep.subr.mxu0 0.0
        %974 = vmatpush2.msra.mxu0 %v466
        %975 = vmatprep.subr.mxu0 0.0
        %976 = vmatpush2.msra.mxu0 %v465
        %977 = vmatprep.subr.mxu0 0.0
        %978 = vmatpush2.msra.mxu0 %v464
        %979 = vmatprep.mubr.f32.mxu0 %v392
        %980 = vmatmul.mubr.f32.gmra.mxu0 %v364
        %v981 = vpop.f32.mrf.mxu0
        %v982 = vadd.f32 %v797, %v981
        %v983 = vpop.f32.mrf.mxu0
        %984 = vmatprep.mubr.f32.mxu0 %v393
        %985 = vmatmul.mubr.f32.gmra.mxu0 %v365
        %v986 = vpop.f32.mrf.mxu0
        %v987 = vadd.f32 %v802, %v986
        %v988 = vpop.f32.mrf.mxu0
        %989 = vmatprep.mubr.f32.mxu0 %v394
        %990 = vmatmul.mubr.f32.gmra.mxu0 %v366
        %v991 = vpop.f32.mrf.mxu0
        %v992 = vadd.f32 %v807, %v991
        %v993 = vpop.f32.mrf.mxu0
        %994 = vmatprep.mubr.f32.mxu0 %v395
        %995 = vmatmul.mubr.f32.gmra.mxu0 %v367
        %v996 = vpop.f32.mrf.mxu0
        %v997 = vadd.f32 %v812, %v996
        %v998 = vpop.f32.mrf.mxu0
        %999 = vmatprep.mubr.f32.mxu0 %v396
        %1000 = vmatmul.mubr.f32.gmra.mxu0 %v368
        %v1001 = vpop.f32.mrf.mxu0
        %v1002 = vadd.f32 %v817, %v1001
        %v1003 = vpop.f32.mrf.mxu0
        %1004 = vmatprep.mubr.f32.mxu0 %v397
        %1005 = vmatmul.mubr.f32.gmra.mxu0 %v369
        %v1006 = vpop.f32.mrf.mxu0
        %v1007 = vadd.f32 %v822, %v1006
        %v1008 = vpop.f32.mrf.mxu0
        %1009 = vmatprep.mubr.f32.mxu0 %v398
        %1010 = vmatmul.mubr.f32.gmra.mxu0 %v370
        %v1011 = vpop.f32.mrf.mxu0
        %v1012 = vadd.f32 %v827, %v1011
        %v1013 = vpop.f32.mrf.mxu0
        %1014 = vmatprep.mubr.f32.mxu0 %v399
        %1015 = vmatmul.mubr.f32.gmra.mxu0 %v371
        %v1016 = vpop.f32.mrf.mxu0
        %v1017 = vadd.f32 %v832, %v1016
        %v1018 = vpop.f32.mrf.mxu0
        %1019 = vmatprep.mubr.f32.mxu0 %v400
        %1020 = vmatmul.mubr.f32.gmra.mxu0 %v372
        %v1021 = vpop.f32.mrf.mxu0
        %v1022 = vadd.f32 %v837, %v1021
        %v1023 = vpop.f32.mrf.mxu0
        %1024 = vmatprep.mubr.f32.mxu0 %v401
        %1025 = vmatmul.mubr.f32.gmra.mxu0 %v373
        %v1026 = vpop.f32.mrf.mxu0
        %v1027 = vadd.f32 %v842, %v1026
        %v1028 = vpop.f32.mrf.mxu0
        %1029 = vmatprep.mubr.f32.mxu0 %v402
        %1030 = vmatmul.mubr.f32.gmra.mxu0 %v374
        %v1031 = vpop.f32.mrf.mxu0
        %v1032 = vadd.f32 %v847, %v1031
        %v1033 = vpop.f32.mrf.mxu0
        %1034 = vmatprep.mubr.f32.mxu0 %v403
        %1035 = vmatmul.mubr.f32.gmra.mxu0 %v375
        %v1036 = vpop.f32.mrf.mxu0
        %v1037 = vadd.f32 %v852, %v1036
        %v1038 = vpop.f32.mrf.mxu0
        %1039 = vmatprep.mubr.f32.mxu0 %v404
        %1040 = vmatmul.mubr.f32.gmra.mxu0 %v376
        %v1041 = vpop.f32.mrf.mxu0
        %v1042 = vadd.f32 %v857, %v1041
        %v1043 = vpop.f32.mrf.mxu0
        %1044 = vmatprep.mubr.f32.mxu0 %v405
        %1045 = vmatmul.mubr.f32.gmra.mxu0 %v377
        %v1046 = vpop.f32.mrf.mxu0
        %v1047 = vadd.f32 %v862, %v1046
        %v1048 = vpop.f32.mrf.mxu0
        %1049 = vmatprep.mubr.f32.mxu0 %v406
        %1050 = vmatmul.mubr.f32.gmra.mxu0 %v378
        %v1051 = vpop.f32.mrf.mxu0
        %v1052 = vadd.f32 %v867, %v1051
        %v1053 = vpop.f32.mrf.mxu0
        %1054 = vmatprep.mubr.f32.mxu0 %v407
        %1055 = vmatmul.mubr.f32.gmra.mxu0 %v379
        %v1056 = vpop.f32.mrf.mxu0
        %v1057 = vadd.f32 %v872, %v1056
        %v1058 = vpop.f32.mrf.mxu0
        %1059 = vmatprep.mubr.f32.mxu0 %v408
        %1060 = vmatmul.mubr.f32.gmra.mxu0 %v380
        %v1061 = vpop.f32.mrf.mxu0
        %v1062 = vadd.f32 %v877, %v1061
        %v1063 = vpop.f32.mrf.mxu0
        %1064 = vmatprep.mubr.f32.mxu0 %v409
        %1065 = vmatmul.mubr.f32.gmra.mxu0 %v381
        %v1066 = vpop.f32.mrf.mxu0
        %v1067 = vadd.f32 %v882, %v1066
        %v1068 = vpop.f32.mrf.mxu0
        %1069 = vmatprep.mubr.f32.mxu0 %v410
        %1070 = vmatmul.mubr.f32.gmra.mxu0 %v382
        %v1071 = vpop.f32.mrf.mxu0
        %v1072 = vadd.f32 %v887, %v1071
        %v1073 = vpop.f32.mrf.mxu0
        %1074 = vmatprep.mubr.f32.mxu0 %v411
        %1075 = vmatmul.mubr.f32.gmra.mxu0 %v383
        %v1076 = vpop.f32.mrf.mxu0
        %v1077 = vadd.f32 %v892, %v1076
        %v1078 = vpop.f32.mrf.mxu0
        %1079 = vmatprep.mubr.f32.mxu0 %v412
        %1080 = vmatmul.mubr.f32.gmra.mxu0 %v384
        %v1081 = vpop.f32.mrf.mxu0
        %v1082 = vadd.f32 %v897, %v1081
        %v1083 = vpop.f32.mrf.mxu0
        %1084 = vmatprep.mubr.f32.mxu0 %v413
        %1085 = vmatmul.mubr.f32.gmra.mxu0 %v385
        %v1086 = vpop.f32.mrf.mxu0
        %v1087 = vadd.f32 %v902, %v1086
        %v1088 = vpop.f32.mrf.mxu0
        %1089 = vmatprep.mubr.f32.mxu0 %v414
        %1090 = vmatmul.mubr.f32.gmra.mxu0 %v386
        %v1091 = vpop.f32.mrf.mxu0
        %v1092 = vadd.f32 %v907, %v1091
        %v1093 = vpop.f32.mrf.mxu0
        %1094 = vmatprep.mubr.f32.mxu0 %v415
        %1095 = vmatmul.mubr.f32.gmra.mxu0 %v387
        %v1096 = vpop.f32.mrf.mxu0
        %v1097 = vadd.f32 %v912, %v1096
        %v1098 = vpop.f32.mrf.mxu0
        %1099 = vdwg.mxu0
        %1100 = vmatprep.subr.mxu0 0.0
        %1101 = vmatpush1.msra.mxu0 %v495
        %1102 = vmatprep.subr.mxu0 0.0
        %1103 = vmatpush1.msra.mxu0 %v494
        %1104 = vmatprep.subr.mxu0 0.0
        %1105 = vmatpush1.msra.mxu0 %v493
        %1106 = vmatprep.subr.mxu0 0.0
        %1107 = vmatpush1.msra.mxu0 %v492
        %1108 = vmatprep.subr.mxu0 0.0
        %1109 = vmatpush1.msra.mxu0 %v491
        %1110 = vmatprep.subr.mxu0 0.0
        %1111 = vmatpush1.msra.mxu0 %v490
        %1112 = vmatprep.subr.mxu0 0.0
        %1113 = vmatpush1.msra.mxu0 %v489
        %1114 = vmatprep.subr.mxu0 0.0
        %1115 = vmatpush1.msra.mxu0 %v488
        %1116 = vmatprep.subr.mxu0 0.0
        %1117 = vmatpush1.msra.mxu0 %v487
        %1118 = vmatprep.subr.mxu0 0.0
        %1119 = vmatpush1.msra.mxu0 %v486
        %1120 = vmatprep.subr.mxu0 0.0
        %1121 = vmatpush1.msra.mxu0 %v485
        %1122 = vmatprep.subr.mxu0 0.0
        %1123 = vmatpush1.msra.mxu0 %v484
        %1124 = vmatprep.subr.mxu0 0.0
        %1125 = vmatpush1.msra.mxu0 %v483
        %1126 = vmatprep.subr.mxu0 0.0
        %1127 = vmatpush1.msra.mxu0 %v482
        %1128 = vmatprep.subr.mxu0 0.0
        %1129 = vmatpush1.msra.mxu0 %v481
        %1130 = vmatprep.subr.mxu0 0.0
        %1131 = vmatpush1.msra.mxu0 %v480
        %1132 = vmatprep.subr.mxu0 0.0
        %1133 = vmatpush2.msra.mxu0 0.0
        %1134 = vmatprep.subr.mxu0 0.0
        %1135 = vmatpush2.msra.mxu0 0.0
        %1136 = vmatprep.subr.mxu0 0.0
        %1137 = vmatpush2.msra.mxu0 0.0
        %1138 = vmatprep.subr.mxu0 0.0
        %1139 = vmatpush2.msra.mxu0 0.0
        %1140 = vmatprep.subr.mxu0 0.0
        %1141 = vmatpush2.msra.mxu0 0.0
        %1142 = vmatprep.subr.mxu0 0.0
        %1143 = vmatpush2.msra.mxu0 0.0
        %1144 = vmatprep.subr.mxu0 0.0
        %1145 = vmatpush2.msra.mxu0 0.0
        %1146 = vmatprep.subr.mxu0 0.0
        %1147 = vmatpush2.msra.mxu0 0.0
        %1148 = vmatprep.subr.mxu0 0.0
        %1149 = vmatpush2.msra.mxu0 0.0
        %1150 = vmatprep.subr.mxu0 0.0
        %1151 = vmatpush2.msra.mxu0 0.0
        %1152 = vmatprep.subr.mxu0 0.0
        %1153 = vmatpush2.msra.mxu0 0.0
        %1154 = vmatprep.subr.mxu0 0.0
        %1155 = vmatpush2.msra.mxu0 0.0
        %1156 = vmatprep.subr.mxu0 0.0
        %1157 = vmatpush2.msra.mxu0 0.0
        %1158 = vmatprep.subr.mxu0 0.0
        %1159 = vmatpush2.msra.mxu0 0.0
        %1160 = vmatprep.subr.mxu0 0.0
        %1161 = vmatpush2.msra.mxu0 0.0
        %1162 = vmatprep.subr.mxu0 0.0
        %1163 = vmatpush2.msra.mxu0 0.0
        %1164 = vmatprep.mubr.f32.mxu0 0.0
        %1165 = vmatmul.mubr.f32.gmra.mxu0 %v420
        %v1166 = vpop.f32.mrf.mxu0
        %v1167 = vadd.f32 %v982, %v1166
        %v1168 = vpop.f32.mrf.mxu0
        %1169 = vmatprep.mubr.f32.mxu0 0.0
        %1170 = vmatmul.mubr.f32.gmra.mxu0 %v421
        %v1171 = vpop.f32.mrf.mxu0
        %v1172 = vadd.f32 %v987, %v1171
        %v1173 = vpop.f32.mrf.mxu0
        %1174 = vmatprep.mubr.f32.mxu0 0.0
        %1175 = vmatmul.mubr.f32.gmra.mxu0 %v422
        %v1176 = vpop.f32.mrf.mxu0
        %v1177 = vadd.f32 %v992, %v1176
        %v1178 = vpop.f32.mrf.mxu0
        %1179 = vmatprep.mubr.f32.mxu0 0.0
        %1180 = vmatmul.mubr.f32.gmra.mxu0 %v423
        %v1181 = vpop.f32.mrf.mxu0
        %v1182 = vadd.f32 %v997, %v1181
        %v1183 = vpop.f32.mrf.mxu0
        %1184 = vmatprep.mubr.f32.mxu0 0.0
        %1185 = vmatmul.mubr.f32.gmra.mxu0 %v424
        %v1186 = vpop.f32.mrf.mxu0
        %v1187 = vadd.f32 %v1002, %v1186
        %v1188 = vpop.f32.mrf.mxu0
        %1189 = vmatprep.mubr.f32.mxu0 0.0
        %1190 = vmatmul.mubr.f32.gmra.mxu0 %v425
        %v1191 = vpop.f32.mrf.mxu0
        %v1192 = vadd.f32 %v1007, %v1191
        %v1193 = vpop.f32.mrf.mxu0
        %1194 = vmatprep.mubr.f32.mxu0 0.0
        %1195 = vmatmul.mubr.f32.gmra.mxu0 %v426
        %v1196 = vpop.f32.mrf.mxu0
        %v1197 = vadd.f32 %v1012, %v1196
        %v1198 = vpop.f32.mrf.mxu0
        %1199 = vmatprep.mubr.f32.mxu0 0.0
        %1200 = vmatmul.mubr.f32.gmra.mxu0 %v427
        %v1201 = vpop.f32.mrf.mxu0
        %v1202 = vadd.f32 %v1017, %v1201
        %v1203 = vpop.f32.mrf.mxu0
        %1204 = vmatprep.mubr.f32.mxu0 0.0
        %1205 = vmatmul.mubr.f32.gmra.mxu0 %v428
        %v1206 = vpop.f32.mrf.mxu0
        %v1207 = vadd.f32 %v1022, %v1206
        %v1208 = vpop.f32.mrf.mxu0
        %1209 = vmatprep.mubr.f32.mxu0 0.0
        %1210 = vmatmul.mubr.f32.gmra.mxu0 %v429
        %v1211 = vpop.f32.mrf.mxu0
        %v1212 = vadd.f32 %v1027, %v1211
        %v1213 = vpop.f32.mrf.mxu0
        %1214 = vmatprep.mubr.f32.mxu0 0.0
        %1215 = vmatmul.mubr.f32.gmra.mxu0 %v430
        %v1216 = vpop.f32.mrf.mxu0
        %v1217 = vadd.f32 %v1032, %v1216
        %v1218 = vpop.f32.mrf.mxu0
        %1219 = vmatprep.mubr.f32.mxu0 0.0
        %1220 = vmatmul.mubr.f32.gmra.mxu0 %v431
        %v1221 = vpop.f32.mrf.mxu0
        %v1222 = vadd.f32 %v1037, %v1221
        %v1223 = vpop.f32.mrf.mxu0
        %1224 = vmatprep.mubr.f32.mxu0 0.0
        %1225 = vmatmul.mubr.f32.gmra.mxu0 %v432
        %v1226 = vpop.f32.mrf.mxu0
        %v1227 = vadd.f32 %v1042, %v1226
        %v1228 = vpop.f32.mrf.mxu0
        %1229 = vmatprep.mubr.f32.mxu0 0.0
        %1230 = vmatmul.mubr.f32.gmra.mxu0 %v433
        %v1231 = vpop.f32.mrf.mxu0
        %v1232 = vadd.f32 %v1047, %v1231
        %v1233 = vpop.f32.mrf.mxu0
        %1234 = vmatprep.mubr.f32.mxu0 0.0
        %1235 = vmatmul.mubr.f32.gmra.mxu0 %v434
        %v1236 = vpop.f32.mrf.mxu0
        %v1237 = vadd.f32 %v1052, %v1236
        %v1238 = vpop.f32.mrf.mxu0
        %1239 = vmatprep.mubr.f32.mxu0 0.0
        %1240 = vmatmul.mubr.f32.gmra.mxu0 %v435
        %v1241 = vpop.f32.mrf.mxu0
        %v1242 = vadd.f32 %v1057, %v1241
        %v1243 = vpop.f32.mrf.mxu0
        %1244 = vmatprep.mubr.f32.mxu0 0.0
        %1245 = vmatmul.mubr.f32.gmra.mxu0 %v436
        %v1246 = vpop.f32.mrf.mxu0
        %v1247 = vadd.f32 %v1062, %v1246
        %v1248 = vpop.f32.mrf.mxu0
        %1249 = vmatprep.mubr.f32.mxu0 0.0
        %1250 = vmatmul.mubr.f32.gmra.mxu0 %v437
        %v1251 = vpop.f32.mrf.mxu0
        %v1252 = vadd.f32 %v1067, %v1251
        %v1253 = vpop.f32.mrf.mxu0
        %1254 = vmatprep.mubr.f32.mxu0 0.0
        %1255 = vmatmul.mubr.f32.gmra.mxu0 %v438
        %v1256 = vpop.f32.mrf.mxu0
        %v1257 = vadd.f32 %v1072, %v1256
        %v1258 = vpop.f32.mrf.mxu0
        %1259 = vmatprep.mubr.f32.mxu0 0.0
        %1260 = vmatmul.mubr.f32.gmra.mxu0 %v439
        %v1261 = vpop.f32.mrf.mxu0
        %v1262 = vadd.f32 %v1077, %v1261
        %v1263 = vpop.f32.mrf.mxu0
        %1264 = vmatprep.mubr.f32.mxu0 0.0
        %1265 = vmatmul.mubr.f32.gmra.mxu0 %v440
        %v1266 = vpop.f32.mrf.mxu0
        %v1267 = vadd.f32 %v1082, %v1266
        %v1268 = vpop.f32.mrf.mxu0
        %1269 = vmatprep.mubr.f32.mxu0 0.0
        %1270 = vmatmul.mubr.f32.gmra.mxu0 %v441
        %v1271 = vpop.f32.mrf.mxu0
        %v1272 = vadd.f32 %v1087, %v1271
        %v1273 = vpop.f32.mrf.mxu0
        %1274 = vmatprep.mubr.f32.mxu0 0.0
        %1275 = vmatmul.mubr.f32.gmra.mxu0 %v442
        %v1276 = vpop.f32.mrf.mxu0
        %v1277 = vadd.f32 %v1092, %v1276
        %v1278 = vpop.f32.mrf.mxu0
        %1279 = vmatprep.mubr.f32.mxu0 0.0
        %1280 = vmatmul.mubr.f32.gmra.mxu0 %v443
        %v1281 = vpop.f32.mrf.mxu0
        %v1282 = vadd.f32 %v1097, %v1281
        %v1283 = vpop.f32.mrf.mxu0
        %1284 = vdwg.mxu0
        %s1285 = scalar_lea.vmem %s1, 768
        %v1286 = vld [vmem:[%s1285] sm:$0xff]
        %v1287 = vld [vmem:[%s1285 + $0x8] sm:$0xff]
        %v1288 = vld [vmem:[%s1285 + $0x10] sm:$0xff]
        %v1289 = vld [vmem:[%s1285 + $0x18] sm:$0xff]
        %v1290 = vld [vmem:[%s1285 + $0x20] sm:$0xff]
        %v1291 = vld [vmem:[%s1285 + $0x28] sm:$0xff]
        %v1292 = vld [vmem:[%s1285 + $0x30] sm:$0xff]
        %v1293 = vld [vmem:[%s1285 + $0x38] sm:$0xff]
        %v1294 = vld [vmem:[%s1285 + $0x40] sm:$0xff]
        %v1295 = vld [vmem:[%s1285 + $0x48] sm:$0xff]
        %v1296 = vld [vmem:[%s1285 + $0x50] sm:$0xff]
        %v1297 = vld [vmem:[%s1285 + $0x58] sm:$0xff]
        %v1298 = vld [vmem:[%s1285 + $0x60] sm:$0xff]
        %v1299 = vld [vmem:[%s1285 + $0x68] sm:$0xff]
        %v1300 = vld [vmem:[%s1285 + $0x70] sm:$0xff]
        %v1301 = vld [vmem:[%s1285 + $0x78] sm:$0xff]
        %v1302 = vld [vmem:[%s1285 + $0x80] sm:$0xff]
        %v1303 = vld [vmem:[%s1285 + $0x88] sm:$0xff]
        %v1304 = vld [vmem:[%s1285 + $0x90] sm:$0xff]
        %v1305 = vld [vmem:[%s1285 + $0x98] sm:$0xff]
        %v1306 = vld [vmem:[%s1285 + $0xa0] sm:$0xff]
        %v1307 = vld [vmem:[%s1285 + $0xa8] sm:$0xff]
        %v1308 = vld [vmem:[%s1285 + $0xb0] sm:$0xff]
        %v1309 = vld [vmem:[%s1285 + $0xb8] sm:$0xff]
        %v1310 = vld [vmem:[%s1285 + $0xc0] sm:$0xff]
        %v1311 = vld [vmem:[%s1285 + $0xc8] sm:$0xff]
        %v1312 = vld [vmem:[%s1285 + $0xd0] sm:$0xff]
        %v1313 = vld [vmem:[%s1285 + $0xd8] sm:$0xff]
        %v1314 = vld [vmem:[%s1285 + $0xe0] sm:$0xff]
        %v1315 = vld [vmem:[%s1285 + $0xe8] sm:$0xff]
        %v1316 = vld [vmem:[%s1285 + $0xf0] sm:$0xff]
        %v1317 = vld [vmem:[%s1285 + $0xf8] sm:$0xff]
        %v1318 = vld [vmem:[%s1285 + $0x100] sm:$0xff]
        %v1319 = vld [vmem:[%s1285 + $0x108] sm:$0xff]
        %v1320 = vld [vmem:[%s1285 + $0x110] sm:$0xff]
        %v1321 = vld [vmem:[%s1285 + $0x118] sm:$0xff]
        %v1322 = vld [vmem:[%s1285 + $0x120] sm:$0xff]
        %v1323 = vld [vmem:[%s1285 + $0x128] sm:$0xff]
        %v1324 = vld [vmem:[%s1285 + $0x130] sm:$0xff]
        %v1325 = vld [vmem:[%s1285 + $0x138] sm:$0xff]
        %v1326 = vld [vmem:[%s1285 + $0x140] sm:$0xff]
        %v1327 = vld [vmem:[%s1285 + $0x148] sm:$0xff]
        %v1328 = vld [vmem:[%s1285 + $0x150] sm:$0xff]
        %v1329 = vld [vmem:[%s1285 + $0x158] sm:$0xff]
        %v1330 = vld [vmem:[%s1285 + $0x160] sm:$0xff]
        %v1331 = vld [vmem:[%s1285 + $0x168] sm:$0xff]
        %v1332 = vld [vmem:[%s1285 + $0x170] sm:$0xff]
        %v1333 = vld [vmem:[%s1285 + $0x178] sm:$0xff]
        %1334 = vmatprep.subr.mxu0 0.0
        %1335 = vmatpush1.msra.mxu0 %v1301
        %1336 = vmatprep.subr.mxu0 0.0
        %1337 = vmatpush1.msra.mxu0 %v1300
        %1338 = vmatprep.subr.mxu0 0.0
        %1339 = vmatpush1.msra.mxu0 %v1299
        %1340 = vmatprep.subr.mxu0 0.0
        %1341 = vmatpush1.msra.mxu0 %v1298
        %1342 = vmatprep.subr.mxu0 0.0
        %1343 = vmatpush1.msra.mxu0 %v1297
        %1344 = vmatprep.subr.mxu0 0.0
        %1345 = vmatpush1.msra.mxu0 %v1296
        %1346 = vmatprep.subr.mxu0 0.0
        %1347 = vmatpush1.msra.mxu0 %v1295
        %1348 = vmatprep.subr.mxu0 0.0
        %1349 = vmatpush1.msra.mxu0 %v1294
        %1350 = vmatprep.subr.mxu0 0.0
        %1351 = vmatpush1.msra.mxu0 %v1293
        %1352 = vmatprep.subr.mxu0 0.0
        %1353 = vmatpush1.msra.mxu0 %v1292
        %1354 = vmatprep.subr.mxu0 0.0
        %1355 = vmatpush1.msra.mxu0 %v1291
        %1356 = vmatprep.subr.mxu0 0.0
        %1357 = vmatpush1.msra.mxu0 %v1290
        %1358 = vmatprep.subr.mxu0 0.0
        %1359 = vmatpush1.msra.mxu0 %v1289
        %1360 = vmatprep.subr.mxu0 0.0
        %1361 = vmatpush1.msra.mxu0 %v1288
        %1362 = vmatprep.subr.mxu0 0.0
        %1363 = vmatpush1.msra.mxu0 %v1287
        %1364 = vmatprep.subr.mxu0 0.0
        %1365 = vmatpush1.msra.mxu0 %v1286
        %1366 = vmatprep.subr.mxu0 0.0
        %1367 = vmatpush2.msra.mxu0 %v1317
        %1368 = vmatprep.subr.mxu0 0.0
        %1369 = vmatpush2.msra.mxu0 %v1316
        %1370 = vmatprep.subr.mxu0 0.0
        %1371 = vmatpush2.msra.mxu0 %v1315
        %1372 = vmatprep.subr.mxu0 0.0
        %1373 = vmatpush2.msra.mxu0 %v1314
        %1374 = vmatprep.subr.mxu0 0.0
        %1375 = vmatpush2.msra.mxu0 %v1313
        %1376 = vmatprep.subr.mxu0 0.0
        %1377 = vmatpush2.msra.mxu0 %v1312
        %1378 = vmatprep.subr.mxu0 0.0
        %1379 = vmatpush2.msra.mxu0 %v1311
        %1380 = vmatprep.subr.mxu0 0.0
        %1381 = vmatpush2.msra.mxu0 %v1310
        %1382 = vmatprep.subr.mxu0 0.0
        %1383 = vmatpush2.msra.mxu0 %v1309
        %1384 = vmatprep.subr.mxu0 0.0
        %1385 = vmatpush2.msra.mxu0 %v1308
        %1386 = vmatprep.subr.mxu0 0.0
        %1387 = vmatpush2.msra.mxu0 %v1307
        %1388 = vmatprep.subr.mxu0 0.0
        %1389 = vmatpush2.msra.mxu0 %v1306
        %1390 = vmatprep.subr.mxu0 0.0
        %1391 = vmatpush2.msra.mxu0 %v1305
        %1392 = vmatprep.subr.mxu0 0.0
        %1393 = vmatpush2.msra.mxu0 %v1304
        %1394 = vmatprep.subr.mxu0 0.0
        %1395 = vmatpush2.msra.mxu0 %v1303
        %1396 = vmatprep.subr.mxu0 0.0
        %1397 = vmatpush2.msra.mxu0 %v1302
        %1398 = vmatprep.mubr.f32.mxu0 %v396
        %1399 = vmatmul.mubr.f32.gmra.mxu0 %v368
        %v1400 = vpop.f32.mrf.mxu0
        %v1401 = vadd.f32 0.0, %v1400
        %v1402 = vpop.f32.mrf.mxu0
        %1403 = vmatprep.mubr.f32.mxu0 %v397
        %1404 = vmatmul.mubr.f32.gmra.mxu0 %v369
        %v1405 = vpop.f32.mrf.mxu0
        %v1406 = vadd.f32 0.0, %v1405
        %v1407 = vpop.f32.mrf.mxu0
        %1408 = vmatprep.mubr.f32.mxu0 %v398
        %1409 = vmatmul.mubr.f32.gmra.mxu0 %v370
        %v1410 = vpop.f32.mrf.mxu0
        %v1411 = vadd.f32 0.0, %v1410
        %v1412 = vpop.f32.mrf.mxu0
        %1413 = vmatprep.mubr.f32.mxu0 %v399
        %1414 = vmatmul.mubr.f32.gmra.mxu0 %v371
        %v1415 = vpop.f32.mrf.mxu0
        %v1416 = vadd.f32 0.0, %v1415
        %v1417 = vpop.f32.mrf.mxu0
        %1418 = vmatprep.mubr.f32.mxu0 %v400
        %1419 = vmatmul.mubr.f32.gmra.mxu0 %v372
        %v1420 = vpop.f32.mrf.mxu0
        %v1421 = vadd.f32 0.0, %v1420
        %v1422 = vpop.f32.mrf.mxu0
        %1423 = vmatprep.mubr.f32.mxu0 %v401
        %1424 = vmatmul.mubr.f32.gmra.mxu0 %v373
        %v1425 = vpop.f32.mrf.mxu0
        %v1426 = vadd.f32 0.0, %v1425
        %v1427 = vpop.f32.mrf.mxu0
        %1428 = vmatprep.mubr.f32.mxu0 %v402
        %1429 = vmatmul.mubr.f32.gmra.mxu0 %v374
        %v1430 = vpop.f32.mrf.mxu0
        %v1431 = vadd.f32 0.0, %v1430
        %v1432 = vpop.f32.mrf.mxu0
        %1433 = vmatprep.mubr.f32.mxu0 %v403
        %1434 = vmatmul.mubr.f32.gmra.mxu0 %v375
        %v1435 = vpop.f32.mrf.mxu0
        %v1436 = vadd.f32 0.0, %v1435
        %v1437 = vpop.f32.mrf.mxu0
        %1438 = vmatprep.mubr.f32.mxu0 %v404
        %1439 = vmatmul.mubr.f32.gmra.mxu0 %v376
        %v1440 = vpop.f32.mrf.mxu0
        %v1441 = vadd.f32 0.0, %v1440
        %v1442 = vpop.f32.mrf.mxu0
        %1443 = vmatprep.mubr.f32.mxu0 %v405
        %1444 = vmatmul.mubr.f32.gmra.mxu0 %v377
        %v1445 = vpop.f32.mrf.mxu0
        %v1446 = vadd.f32 0.0, %v1445
        %v1447 = vpop.f32.mrf.mxu0
        %1448 = vmatprep.mubr.f32.mxu0 %v406
        %1449 = vmatmul.mubr.f32.gmra.mxu0 %v378
        %v1450 = vpop.f32.mrf.mxu0
        %v1451 = vadd.f32 0.0, %v1450
        %v1452 = vpop.f32.mrf.mxu0
        %1453 = vmatprep.mubr.f32.mxu0 %v407
        %1454 = vmatmul.mubr.f32.gmra.mxu0 %v379
        %v1455 = vpop.f32.mrf.mxu0
        %v1456 = vadd.f32 0.0, %v1455
        %v1457 = vpop.f32.mrf.mxu0
        %1458 = vmatprep.mubr.f32.mxu0 %v408
        %1459 = vmatmul.mubr.f32.gmra.mxu0 %v380
        %v1460 = vpop.f32.mrf.mxu0
        %v1461 = vadd.f32 0.0, %v1460
        %v1462 = vpop.f32.mrf.mxu0
        %1463 = vmatprep.mubr.f32.mxu0 %v409
        %1464 = vmatmul.mubr.f32.gmra.mxu0 %v381
        %v1465 = vpop.f32.mrf.mxu0
        %v1466 = vadd.f32 0.0, %v1465
        %v1467 = vpop.f32.mrf.mxu0
        %1468 = vmatprep.mubr.f32.mxu0 %v410
        %1469 = vmatmul.mubr.f32.gmra.mxu0 %v382
        %v1470 = vpop.f32.mrf.mxu0
        %v1471 = vadd.f32 0.0, %v1470
        %v1472 = vpop.f32.mrf.mxu0
        %1473 = vmatprep.mubr.f32.mxu0 %v411
        %1474 = vmatmul.mubr.f32.gmra.mxu0 %v383
        %v1475 = vpop.f32.mrf.mxu0
        %v1476 = vadd.f32 0.0, %v1475
        %v1477 = vpop.f32.mrf.mxu0
        %1478 = vmatprep.mubr.f32.mxu0 %v412
        %1479 = vmatmul.mubr.f32.gmra.mxu0 %v384
        %v1480 = vpop.f32.mrf.mxu0
        %v1481 = vadd.f32 0.0, %v1480
        %v1482 = vpop.f32.mrf.mxu0
        %1483 = vmatprep.mubr.f32.mxu0 %v413
        %1484 = vmatmul.mubr.f32.gmra.mxu0 %v385
        %v1485 = vpop.f32.mrf.mxu0
        %v1486 = vadd.f32 0.0, %v1485
        %v1487 = vpop.f32.mrf.mxu0
        %1488 = vmatprep.mubr.f32.mxu0 %v414
        %1489 = vmatmul.mubr.f32.gmra.mxu0 %v386
        %v1490 = vpop.f32.mrf.mxu0
        %v1491 = vadd.f32 0.0, %v1490
        %v1492 = vpop.f32.mrf.mxu0
        %1493 = vmatprep.mubr.f32.mxu0 %v415
        %1494 = vmatmul.mubr.f32.gmra.mxu0 %v387
        %v1495 = vpop.f32.mrf.mxu0
        %v1496 = vadd.f32 0.0, %v1495
        %v1497 = vpop.f32.mrf.mxu0
        %1498 = vmatprep.mubr.f32.mxu0 %v416
        %1499 = vmatmul.mubr.f32.gmra.mxu0 %v388
        %v1500 = vpop.f32.mrf.mxu0
        %v1501 = vadd.f32 0.0, %v1500
        %v1502 = vpop.f32.mrf.mxu0
        %1503 = vmatprep.mubr.f32.mxu0 %v417
        %1504 = vmatmul.mubr.f32.gmra.mxu0 %v389
        %v1505 = vpop.f32.mrf.mxu0
        %v1506 = vadd.f32 0.0, %v1505
        %v1507 = vpop.f32.mrf.mxu0
        %1508 = vmatprep.mubr.f32.mxu0 %v418
        %1509 = vmatmul.mubr.f32.gmra.mxu0 %v390
        %v1510 = vpop.f32.mrf.mxu0
        %v1511 = vadd.f32 0.0, %v1510
        %v1512 = vpop.f32.mrf.mxu0
        %1513 = vmatprep.mubr.f32.mxu0 %v419
        %1514 = vmatmul.mubr.f32.gmra.mxu0 %v391
        %v1515 = vpop.f32.mrf.mxu0
        %v1516 = vadd.f32 0.0, %v1515
        %v1517 = vpop.f32.mrf.mxu0
        %1518 = vdwg.mxu0
        %1519 = vmatprep.subr.mxu0 0.0
        %1520 = vmatpush1.msra.mxu0 %v1333
        %1521 = vmatprep.subr.mxu0 0.0
        %1522 = vmatpush1.msra.mxu0 %v1332
        %1523 = vmatprep.subr.mxu0 0.0
        %1524 = vmatpush1.msra.mxu0 %v1331
        %1525 = vmatprep.subr.mxu0 0.0
        %1526 = vmatpush1.msra.mxu0 %v1330
        %1527 = vmatprep.subr.mxu0 0.0
        %1528 = vmatpush1.msra.mxu0 %v1329
        %1529 = vmatprep.subr.mxu0 0.0
        %1530 = vmatpush1.msra.mxu0 %v1328
        %1531 = vmatprep.subr.mxu0 0.0
        %1532 = vmatpush1.msra.mxu0 %v1327
        %1533 = vmatprep.subr.mxu0 0.0
        %1534 = vmatpush1.msra.mxu0 %v1326
        %1535 = vmatprep.subr.mxu0 0.0
        %1536 = vmatpush1.msra.mxu0 %v1325
        %1537 = vmatprep.subr.mxu0 0.0
        %1538 = vmatpush1.msra.mxu0 %v1324
        %1539 = vmatprep.subr.mxu0 0.0
        %1540 = vmatpush1.msra.mxu0 %v1323
        %1541 = vmatprep.subr.mxu0 0.0
        %1542 = vmatpush1.msra.mxu0 %v1322
        %1543 = vmatprep.subr.mxu0 0.0
        %1544 = vmatpush1.msra.mxu0 %v1321
        %1545 = vmatprep.subr.mxu0 0.0
        %1546 = vmatpush1.msra.mxu0 %v1320
        %1547 = vmatprep.subr.mxu0 0.0
        %1548 = vmatpush1.msra.mxu0 %v1319
        %1549 = vmatprep.subr.mxu0 0.0
        %1550 = vmatpush1.msra.mxu0 %v1318
        %1551 = vmatprep.subr.mxu0 0.0
        %1552 = vmatpush2.msra.mxu0 0.0
        %1553 = vmatprep.subr.mxu0 0.0
        %1554 = vmatpush2.msra.mxu0 0.0
        %1555 = vmatprep.subr.mxu0 0.0
        %1556 = vmatpush2.msra.mxu0 0.0
        %1557 = vmatprep.subr.mxu0 0.0
        %1558 = vmatpush2.msra.mxu0 0.0
        %1559 = vmatprep.subr.mxu0 0.0
        %1560 = vmatpush2.msra.mxu0 0.0
        %1561 = vmatprep.subr.mxu0 0.0
        %1562 = vmatpush2.msra.mxu0 0.0
        %1563 = vmatprep.subr.mxu0 0.0
        %1564 = vmatpush2.msra.mxu0 0.0
        %1565 = vmatprep.subr.mxu0 0.0
        %1566 = vmatpush2.msra.mxu0 0.0
        %1567 = vmatprep.subr.mxu0 0.0
        %1568 = vmatpush2.msra.mxu0 0.0
        %1569 = vmatprep.subr.mxu0 0.0
        %1570 = vmatpush2.msra.mxu0 0.0
        %1571 = vmatprep.subr.mxu0 0.0
        %1572 = vmatpush2.msra.mxu0 0.0
        %1573 = vmatprep.subr.mxu0 0.0
        %1574 = vmatpush2.msra.mxu0 0.0
        %1575 = vmatprep.subr.mxu0 0.0
        %1576 = vmatpush2.msra.mxu0 0.0
        %1577 = vmatprep.subr.mxu0 0.0
        %1578 = vmatpush2.msra.mxu0 0.0
        %1579 = vmatprep.subr.mxu0 0.0
        %1580 = vmatpush2.msra.mxu0 0.0
        %1581 = vmatprep.subr.mxu0 0.0
        %1582 = vmatpush2.msra.mxu0 0.0
        %1583 = vmatprep.mubr.f32.mxu0 0.0
        %1584 = vmatmul.mubr.f32.gmra.mxu0 %v424
        %v1585 = vpop.f32.mrf.mxu0
        %v1586 = vadd.f32 %v1401, %v1585
        %v1587 = vpop.f32.mrf.mxu0
        %1588 = vmatprep.mubr.f32.mxu0 0.0
        %1589 = vmatmul.mubr.f32.gmra.mxu0 %v425
        %v1590 = vpop.f32.mrf.mxu0
        %v1591 = vadd.f32 %v1406, %v1590
        %v1592 = vpop.f32.mrf.mxu0
        %1593 = vmatprep.mubr.f32.mxu0 0.0
        %1594 = vmatmul.mubr.f32.gmra.mxu0 %v426
        %v1595 = vpop.f32.mrf.mxu0
        %v1596 = vadd.f32 %v1411, %v1595
        %v1597 = vpop.f32.mrf.mxu0
        %1598 = vmatprep.mubr.f32.mxu0 0.0
        %1599 = vmatmul.mubr.f32.gmra.mxu0 %v427
        %v1600 = vpop.f32.mrf.mxu0
        %v1601 = vadd.f32 %v1416, %v1600
        %v1602 = vpop.f32.mrf.mxu0
        %1603 = vmatprep.mubr.f32.mxu0 0.0
        %1604 = vmatmul.mubr.f32.gmra.mxu0 %v428
        %v1605 = vpop.f32.mrf.mxu0
        %v1606 = vadd.f32 %v1421, %v1605
        %v1607 = vpop.f32.mrf.mxu0
        %1608 = vmatprep.mubr.f32.mxu0 0.0
        %1609 = vmatmul.mubr.f32.gmra.mxu0 %v429
        %v1610 = vpop.f32.mrf.mxu0
        %v1611 = vadd.f32 %v1426, %v1610
        %v1612 = vpop.f32.mrf.mxu0
        %1613 = vmatprep.mubr.f32.mxu0 0.0
        %1614 = vmatmul.mubr.f32.gmra.mxu0 %v430
        %v1615 = vpop.f32.mrf.mxu0
        %v1616 = vadd.f32 %v1431, %v1615
        %v1617 = vpop.f32.mrf.mxu0
        %1618 = vmatprep.mubr.f32.mxu0 0.0
        %1619 = vmatmul.mubr.f32.gmra.mxu0 %v431
        %v1620 = vpop.f32.mrf.mxu0
        %v1621 = vadd.f32 %v1436, %v1620
        %v1622 = vpop.f32.mrf.mxu0
        %1623 = vmatprep.mubr.f32.mxu0 0.0
        %1624 = vmatmul.mubr.f32.gmra.mxu0 %v432
        %v1625 = vpop.f32.mrf.mxu0
        %v1626 = vadd.f32 %v1441, %v1625
        %v1627 = vpop.f32.mrf.mxu0
        %1628 = vmatprep.mubr.f32.mxu0 0.0
        %1629 = vmatmul.mubr.f32.gmra.mxu0 %v433
        %v1630 = vpop.f32.mrf.mxu0
        %v1631 = vadd.f32 %v1446, %v1630
        %v1632 = vpop.f32.mrf.mxu0
        %1633 = vmatprep.mubr.f32.mxu0 0.0
        %1634 = vmatmul.mubr.f32.gmra.mxu0 %v434
        %v1635 = vpop.f32.mrf.mxu0
        %v1636 = vadd.f32 %v1451, %v1635
        %v1637 = vpop.f32.mrf.mxu0
        %1638 = vmatprep.mubr.f32.mxu0 0.0
        %1639 = vmatmul.mubr.f32.gmra.mxu0 %v435
        %v1640 = vpop.f32.mrf.mxu0
        %v1641 = vadd.f32 %v1456, %v1640
        %v1642 = vpop.f32.mrf.mxu0
        %1643 = vmatprep.mubr.f32.mxu0 0.0
        %1644 = vmatmul.mubr.f32.gmra.mxu0 %v436
        %v1645 = vpop.f32.mrf.mxu0
        %v1646 = vadd.f32 %v1461, %v1645
        %v1647 = vpop.f32.mrf.mxu0
        %1648 = vmatprep.mubr.f32.mxu0 0.0
        %1649 = vmatmul.mubr.f32.gmra.mxu0 %v437
        %v1650 = vpop.f32.mrf.mxu0
        %v1651 = vadd.f32 %v1466, %v1650
        %v1652 = vpop.f32.mrf.mxu0
        %1653 = vmatprep.mubr.f32.mxu0 0.0
        %1654 = vmatmul.mubr.f32.gmra.mxu0 %v438
        %v1655 = vpop.f32.mrf.mxu0
        %v1656 = vadd.f32 %v1471, %v1655
        %v1657 = vpop.f32.mrf.mxu0
        %1658 = vmatprep.mubr.f32.mxu0 0.0
        %1659 = vmatmul.mubr.f32.gmra.mxu0 %v439
        %v1660 = vpop.f32.mrf.mxu0
        %v1661 = vadd.f32 %v1476, %v1660
        %v1662 = vpop.f32.mrf.mxu0
        %1663 = vmatprep.mubr.f32.mxu0 0.0
        %1664 = vmatmul.mubr.f32.gmra.mxu0 %v440
        %v1665 = vpop.f32.mrf.mxu0
        %v1666 = vadd.f32 %v1481, %v1665
        %v1667 = vpop.f32.mrf.mxu0
        %1668 = vmatprep.mubr.f32.mxu0 0.0
        %1669 = vmatmul.mubr.f32.gmra.mxu0 %v441
        %v1670 = vpop.f32.mrf.mxu0
        %v1671 = vadd.f32 %v1486, %v1670
        %v1672 = vpop.f32.mrf.mxu0
        %1673 = vmatprep.mubr.f32.mxu0 0.0
        %1674 = vmatmul.mubr.f32.gmra.mxu0 %v442
        %v1675 = vpop.f32.mrf.mxu0
        %v1676 = vadd.f32 %v1491, %v1675
        %v1677 = vpop.f32.mrf.mxu0
        %1678 = vmatprep.mubr.f32.mxu0 0.0
        %1679 = vmatmul.mubr.f32.gmra.mxu0 %v443
        %v1680 = vpop.f32.mrf.mxu0
        %v1681 = vadd.f32 %v1496, %v1680
        %v1682 = vpop.f32.mrf.mxu0
        %1683 = vmatprep.mubr.f32.mxu0 0.0
        %1684 = vmatmul.mubr.f32.gmra.mxu0 %v444
        %v1685 = vpop.f32.mrf.mxu0
        %v1686 = vadd.f32 %v1501, %v1685
        %v1687 = vpop.f32.mrf.mxu0
        %1688 = vmatprep.mubr.f32.mxu0 0.0
        %1689 = vmatmul.mubr.f32.gmra.mxu0 %v445
        %v1690 = vpop.f32.mrf.mxu0
        %v1691 = vadd.f32 %v1506, %v1690
        %v1692 = vpop.f32.mrf.mxu0
        %1693 = vmatprep.mubr.f32.mxu0 0.0
        %1694 = vmatmul.mubr.f32.gmra.mxu0 %v446
        %v1695 = vpop.f32.mrf.mxu0
        %v1696 = vadd.f32 %v1511, %v1695
        %v1697 = vpop.f32.mrf.mxu0
        %1698 = vmatprep.mubr.f32.mxu0 0.0
        %1699 = vmatmul.mubr.f32.gmra.mxu0 %v447
        %v1700 = vpop.f32.mrf.mxu0
        %v1701 = vadd.f32 %v1516, %v1700
        %v1702 = vpop.f32.mrf.mxu0
        %1703 = vdwg.mxu0
        %v1704 = vadd.f32 %v1167, %v1586
        %v1705 = vadd.f32 %v1172, %v1591
        %v1706 = vadd.f32 %v1177, %v1596
        %v1707 = vadd.f32 %v1182, %v1601
        %v1708 = vadd.f32 %v1187, %v1606
        %v1709 = vadd.f32 %v1192, %v1611
        %v1710 = vadd.f32 %v1197, %v1616
        %v1711 = vadd.f32 %v1202, %v1621
        %v1712 = vadd.f32 %v1207, %v1626
        %v1713 = vadd.f32 %v1212, %v1631
        %v1714 = vadd.f32 %v1217, %v1636
        %v1715 = vadd.f32 %v1222, %v1641
        %v1716 = vadd.f32 %v1227, %v1646
        %v1717 = vadd.f32 %v1232, %v1651
        %v1718 = vadd.f32 %v1237, %v1656
        %v1719 = vadd.f32 %v1242, %v1661
        %v1720 = vadd.f32 %v1247, %v1666
        %v1721 = vadd.f32 %v1252, %v1671
        %v1722 = vadd.f32 %v1257, %v1676
        %v1723 = vadd.f32 %v1262, %v1681
        %v1724 = vadd.f32 %v1267, %v1686
        %v1725 = vadd.f32 %v1272, %v1691
        %v1726 = vadd.f32 %v1277, %v1696
        %v1727 = vadd.f32 %v1282, %v1701
        %v1728 = vld [vmem:[#allocation3] sm:$0x1]
        %v1730 = vlaneseq
        %v1731 = vshrl.u32 %v1730, 7
        %v1732 = vsub.s32 0, %v1731
        %v1733 = vrot.slane %v1728, %v1732
        %v1735 = vadd.f32 %v1704, %v1733
        %v1736 = vadd.f32 %v1705, %v1733
        %v1737 = vadd.f32 %v1706, %v1733
        %v1738 = vadd.f32 %v1707, %v1733
        %v1739 = vadd.f32 %v1708, %v1733
        %v1740 = vadd.f32 %v1709, %v1733
        %v1741 = vadd.f32 %v1710, %v1733
        %v1742 = vadd.f32 %v1711, %v1733
        %v1743 = vadd.f32 %v1712, %v1733
        %v1744 = vadd.f32 %v1713, %v1733
        %v1745 = vadd.f32 %v1714, %v1733
        %v1746 = vadd.f32 %v1715, %v1733
        %v1747 = vadd.f32 %v1716, %v1733
        %v1748 = vadd.f32 %v1717, %v1733
        %v1749 = vadd.f32 %v1718, %v1733
        %v1750 = vadd.f32 %v1719, %v1733
        %v1751 = vadd.f32 %v1720, %v1733
        %v1752 = vadd.f32 %v1721, %v1733
        %v1753 = vadd.f32 %v1722, %v1733
        %v1754 = vadd.f32 %v1723, %v1733
        %v1755 = vadd.f32 %v1724, %v1733
        %v1756 = vadd.f32 %v1725, %v1733
        %v1757 = vadd.f32 %v1726, %v1733
        %v1758 = vadd.f32 %v1727, %v1733
        %v1759 = vxor.u32 %v1735, 2147483648
        %v1760 = vxor.u32 %v1736, 2147483648
        %v1761 = vxor.u32 %v1737, 2147483648
        %v1762 = vxor.u32 %v1738, 2147483648
        %v1763 = vxor.u32 %v1739, 2147483648
        %v1764 = vxor.u32 %v1740, 2147483648
        %v1765 = vxor.u32 %v1741, 2147483648
        %v1766 = vxor.u32 %v1742, 2147483648
        %v1767 = vxor.u32 %v1743, 2147483648
        %v1768 = vxor.u32 %v1744, 2147483648
        %v1769 = vxor.u32 %v1745, 2147483648
        %v1770 = vxor.u32 %v1746, 2147483648
        %v1771 = vxor.u32 %v1747, 2147483648
        %v1772 = vxor.u32 %v1748, 2147483648
        %v1773 = vxor.u32 %v1749, 2147483648
        %v1774 = vxor.u32 %v1750, 2147483648
        %v1775 = vxor.u32 %v1751, 2147483648
        %v1776 = vxor.u32 %v1752, 2147483648
        %v1777 = vxor.u32 %v1753, 2147483648
        %v1778 = vxor.u32 %v1754, 2147483648
        %v1779 = vxor.u32 %v1755, 2147483648
        %v1780 = vxor.u32 %v1756, 2147483648
        %v1781 = vxor.u32 %v1757, 2147483648
        %v1782 = vxor.u32 %v1758, 2147483648
        %v1783 = vmul.f32 %v1759, 1.442695
        %v1784 = vpow.pop %v1783
        %v1785 = vmul.f32 %v1760, 1.442695
        %v1786 = vpow.pop %v1785
        %v1787 = vmul.f32 %v1761, 1.442695
        %v1788 = vpow.pop %v1787
        %v1789 = vmul.f32 %v1762, 1.442695
        %v1790 = vpow.pop %v1789
        %v1791 = vmul.f32 %v1763, 1.442695
        %v1792 = vpow.pop %v1791
        %v1793 = vmul.f32 %v1764, 1.442695
        %v1794 = vpow.pop %v1793
        %v1795 = vmul.f32 %v1765, 1.442695
        %v1796 = vpow.pop %v1795
        %v1797 = vmul.f32 %v1766, 1.442695
        %v1798 = vpow.pop %v1797
        %v1799 = vmul.f32 %v1767, 1.442695
        %v1800 = vpow.pop %v1799
        %v1801 = vmul.f32 %v1768, 1.442695
        %v1802 = vpow.pop %v1801
        %v1803 = vmul.f32 %v1769, 1.442695
        %v1804 = vpow.pop %v1803
        %v1805 = vmul.f32 %v1770, 1.442695
        %v1806 = vpow.pop %v1805
        %v1807 = vmul.f32 %v1771, 1.442695
        %v1808 = vpow.pop %v1807
        %v1809 = vmul.f32 %v1772, 1.442695
        %v1810 = vpow.pop %v1809
        %v1811 = vmul.f32 %v1773, 1.442695
        %v1812 = vpow.pop %v1811
        %v1813 = vmul.f32 %v1774, 1.442695
        %v1814 = vpow.pop %v1813
        %v1815 = vmul.f32 %v1775, 1.442695
        %v1816 = vpow.pop %v1815
        %v1817 = vmul.f32 %v1776, 1.442695
        %v1818 = vpow.pop %v1817
        %v1819 = vmul.f32 %v1777, 1.442695
        %v1820 = vpow.pop %v1819
        %v1821 = vmul.f32 %v1778, 1.442695
        %v1822 = vpow.pop %v1821
        %v1823 = vmul.f32 %v1779, 1.442695
        %v1824 = vpow.pop %v1823
        %v1825 = vmul.f32 %v1780, 1.442695
        %v1826 = vpow.pop %v1825
        %v1827 = vmul.f32 %v1781, 1.442695
        %v1828 = vpow.pop %v1827
        %v1829 = vmul.f32 %v1782, 1.442695
        %v1830 = vpow.pop %v1829
        %v1831 = vadd.f32 %v1784, 1.0
        %v1832 = vadd.f32 %v1786, 1.0
        %v1833 = vadd.f32 %v1788, 1.0
        %v1834 = vadd.f32 %v1790, 1.0
        %v1835 = vadd.f32 %v1792, 1.0
        %v1836 = vadd.f32 %v1794, 1.0
        %v1837 = vadd.f32 %v1796, 1.0
        %v1838 = vadd.f32 %v1798, 1.0
        %v1839 = vadd.f32 %v1800, 1.0
        %v1840 = vadd.f32 %v1802, 1.0
        %v1841 = vadd.f32 %v1804, 1.0
        %v1842 = vadd.f32 %v1806, 1.0
        %v1843 = vadd.f32 %v1808, 1.0
        %v1844 = vadd.f32 %v1810, 1.0
        %v1845 = vadd.f32 %v1812, 1.0
        %v1846 = vadd.f32 %v1814, 1.0
        %v1847 = vadd.f32 %v1816, 1.0
        %v1848 = vadd.f32 %v1818, 1.0
        %v1849 = vadd.f32 %v1820, 1.0
        %v1850 = vadd.f32 %v1822, 1.0
        %v1851 = vadd.f32 %v1824, 1.0
        %v1852 = vadd.f32 %v1826, 1.0
        %v1853 = vadd.f32 %v1828, 1.0
        %v1854 = vadd.f32 %v1830, 1.0
        %v1855 = vrcp.pop %v1831
        %v1856 = vmul.f32 1.0, %v1855
        %v1857 = vrcp.pop %v1832
        %v1858 = vmul.f32 1.0, %v1857
        %v1859 = vrcp.pop %v1833
        %v1860 = vmul.f32 1.0, %v1859
        %v1861 = vrcp.pop %v1834
        %v1862 = vmul.f32 1.0, %v1861
        %v1863 = vrcp.pop %v1835
        %v1864 = vmul.f32 1.0, %v1863
        %v1865 = vrcp.pop %v1836
        %v1866 = vmul.f32 1.0, %v1865
        %v1867 = vrcp.pop %v1837
        %v1868 = vmul.f32 1.0, %v1867
        %v1869 = vrcp.pop %v1838
        %v1870 = vmul.f32 1.0, %v1869
        %v1871 = vrcp.pop %v1839
        %v1872 = vmul.f32 1.0, %v1871
        %v1873 = vrcp.pop %v1840
        %v1874 = vmul.f32 1.0, %v1873
        %v1875 = vrcp.pop %v1841
        %v1876 = vmul.f32 1.0, %v1875
        %v1877 = vrcp.pop %v1842
        %v1878 = vmul.f32 1.0, %v1877
        %v1879 = vrcp.pop %v1843
        %v1880 = vmul.f32 1.0, %v1879
        %v1881 = vrcp.pop %v1844
        %v1882 = vmul.f32 1.0, %v1881
        %v1883 = vrcp.pop %v1845
        %v1884 = vmul.f32 1.0, %v1883
        %v1885 = vrcp.pop %v1846
        %v1886 = vmul.f32 1.0, %v1885
        %v1887 = vrcp.pop %v1847
        %v1888 = vmul.f32 1.0, %v1887
        %v1889 = vrcp.pop %v1848
        %v1890 = vmul.f32 1.0, %v1889
        %v1891 = vrcp.pop %v1849
        %v1892 = vmul.f32 1.0, %v1891
        %v1893 = vrcp.pop %v1850
        %v1894 = vmul.f32 1.0, %v1893
        %v1895 = vrcp.pop %v1851
        %v1896 = vmul.f32 1.0, %v1895
        %v1897 = vrcp.pop %v1852
        %v1898 = vmul.f32 1.0, %v1897
        %v1899 = vrcp.pop %v1853
        %v1900 = vmul.f32 1.0, %v1899
        %v1901 = vrcp.pop %v1854
        %v1902 = vmul.f32 1.0, %v1901
        %v1903 = vmul.f32 %v1735, %v1856
        %v1904 = vmul.f32 %v1736, %v1858
        %v1905 = vmul.f32 %v1737, %v1860
        %v1906 = vmul.f32 %v1738, %v1862
        %v1907 = vmul.f32 %v1739, %v1864
        %v1908 = vmul.f32 %v1740, %v1866
        %v1909 = vmul.f32 %v1741, %v1868
        %v1910 = vmul.f32 %v1742, %v1870
        %v1911 = vmul.f32 %v1743, %v1872
        %v1912 = vmul.f32 %v1744, %v1874
        %v1913 = vmul.f32 %v1745, %v1876
        %v1914 = vmul.f32 %v1746, %v1878
        %v1915 = vmul.f32 %v1747, %v1880
        %v1916 = vmul.f32 %v1748, %v1882
        %v1917 = vmul.f32 %v1749, %v1884
        %v1918 = vmul.f32 %v1750, %v1886
        %v1919 = vmul.f32 %v1751, %v1888
        %v1920 = vmul.f32 %v1752, %v1890
        %v1921 = vmul.f32 %v1753, %v1892
        %v1922 = vmul.f32 %v1754, %v1894
        %v1923 = vmul.f32 %v1755, %v1896
        %v1924 = vmul.f32 %v1756, %v1898
        %v1925 = vmul.f32 %v1757, %v1900
        %v1926 = vmul.f32 %v1758, %v1902
        %1927 = vst [vmem:[#allocation2] sm:$0x3] 0.0
        %1928 = vst [vmem:[#allocation2 + $0x18] sm:$0x3] 0.0
        %1929 = vst [vmem:[#allocation2 + $0x30] sm:$0x3] 0.0
        %1930 = vst [vmem:[#allocation2 + $0x48] sm:$0x3] 0.0
        %1931 = vst [vmem:[#allocation2 + $0x60] sm:$0x3] 0.0
        %1932 = vst [vmem:[#allocation2 + $0x78] sm:$0x3] 0.0
        %1933 = vst [vmem:[#allocation2 + $0x90] sm:$0x3] 0.0
        %1934 = vst [vmem:[#allocation2 + $0xa8] sm:$0x3] 0.0
        %1935 = vst [vmem:[#allocation2 + $0xc0] sm:$0x3] 0.0
        %1936 = vst [vmem:[#allocation2 + $0xd8] sm:$0x3] 0.0
        %1937 = vst [vmem:[#allocation2 + $0xf0] sm:$0x3] 0.0
        %1938 = vst [vmem:[#allocation2 + $0x108] sm:$0x3] 0.0
        %1939 = vst [vmem:[#allocation2 + $0x12] sm:$0x3] 0.0
        %1940 = vst [vmem:[#allocation2 + $0x2a] sm:$0x3] 0.0
        %1941 = vst [vmem:[#allocation2 + $0x42] sm:$0x3] 0.0
        %1942 = vst [vmem:[#allocation2 + $0x5a] sm:$0x3] 0.0
        %1943 = vst [vmem:[#allocation2 + $0x72] sm:$0x3] 0.0
        %1944 = vst [vmem:[#allocation2 + $0x8a] sm:$0x3] 0.0
        %1945 = vst [vmem:[#allocation2 + $0xa2] sm:$0x3] 0.0
        %1946 = vst [vmem:[#allocation2 + $0xba] sm:$0x3] 0.0
        %1947 = vst [vmem:[#allocation2 + $0xd2] sm:$0x3] 0.0
        %1948 = vst [vmem:[#allocation2 + $0xea] sm:$0x3] 0.0
        %1949 = vst [vmem:[#allocation2 + $0x102] sm:$0x3] 0.0
        %1950 = vst [vmem:[#allocation2 + $0x11a] sm:$0x3] 0.0
        %1951 = vst [vmem:[#allocation2 + $0x2] sm:$0xff] %v1903
        %1952 = vst [vmem:[#allocation2 + $0xa] sm:$0xff] %v1904
        %1953 = vst [vmem:[#allocation2 + $0x1a] sm:$0xff] %v1905
        %1954 = vst [vmem:[#allocation2 + $0x22] sm:$0xff] %v1906
        %1955 = vst [vmem:[#allocation2 + $0x32] sm:$0xff] %v1907
        %1956 = vst [vmem:[#allocation2 + $0x3a] sm:$0xff] %v1908
        %1957 = vst [vmem:[#allocation2 + $0x4a] sm:$0xff] %v1909
        %1958 = vst [vmem:[#allocation2 + $0x52] sm:$0xff] %v1910
        %1959 = vst [vmem:[#allocation2 + $0x62] sm:$0xff] %v1911
        %1960 = vst [vmem:[#allocation2 + $0x6a] sm:$0xff] %v1912
        %1961 = vst [vmem:[#allocation2 + $0x7a] sm:$0xff] %v1913
        %1962 = vst [vmem:[#allocation2 + $0x82] sm:$0xff] %v1914
        %1963 = vst [vmem:[#allocation2 + $0x92] sm:$0xff] %v1915
        %1964 = vst [vmem:[#allocation2 + $0x9a] sm:$0xff] %v1916
        %1965 = vst [vmem:[#allocation2 + $0xaa] sm:$0xff] %v1917
        %1966 = vst [vmem:[#allocation2 + $0xb2] sm:$0xff] %v1918
        %1967 = vst [vmem:[#allocation2 + $0xc2] sm:$0xff] %v1919
        %1968 = vst [vmem:[#allocation2 + $0xca] sm:$0xff] %v1920
        %1969 = vst [vmem:[#allocation2 + $0xda] sm:$0xff] %v1921
        %1970 = vst [vmem:[#allocation2 + $0xe2] sm:$0xff] %v1922
        %1971 = vst [vmem:[#allocation2 + $0xf2] sm:$0xff] %v1923
        %1972 = vst [vmem:[#allocation2 + $0xfa] sm:$0xff] %v1924
        %1973 = vst [vmem:[#allocation2 + $0x10a] sm:$0xff] %v1925
        %1974 = vst [vmem:[#allocation2 + $0x112] sm:$0xff] %v1926
        %p1975 = scmp.eq.s32.totalorder %s30, 0
        // Predicated region
        $region61: #{tpu_custom_call.1} parent=43 // pred_check
          %p1976 = pneg %p1975
        $region62: #{tpu_custom_call.1} parent=43 // pred_check_branch
          %1978 = sbr.rel (%p1976) target = $region64
        $region63: #{tpu_custom_call.1} parent=43 // pred_region
          %1979 = vst [vmem:[#allocation2] sm:$0xff] 0.0
          %1980 = vst [vmem:[#allocation2 + $0x8] sm:$0xff] 0.0
          %1981 = vst [vmem:[#allocation2 + $0x10] sm:$0xf] 0.0
          %1982 = vst [vmem:[#allocation2 + $0x18] sm:$0xff] 0.0
          %1983 = vst [vmem:[#allocation2 + $0x20] sm:$0xff] 0.0
          %1984 = vst [vmem:[#allocation2 + $0x28] sm:$0xf] 0.0
        $region64: #{tpu_custom_call.1} parent=43 // pred_fallthru
          _
        %p1985 = scmp.eq.s32.totalorder %s30, 1
        // Predicated region
        $region65: #{tpu_custom_call.1} parent=43 // pred_check
          %p1986 = pneg %p1985
        $region66: #{tpu_custom_call.1} parent=43 // pred_check_branch
          %1988 = sbr.rel (%p1986) target = $region68
        $region67: #{tpu_custom_call.1} parent=43 // pred_region
          %s1989 = scalar_lea.vmem [#allocation2], 240
          %1990 = vst [vmem:[%s1989] sm:$0xff] 0.0
          %1991 = vst [vmem:[%s1989 + $0x8] sm:$0xff] 0.0
          %1992 = vst [vmem:[%s1989 + $0x10] sm:$0xf] 0.0
          %1993 = vst [vmem:[%s1989 + $0x18] sm:$0xff] 0.0
          %1994 = vst [vmem:[%s1989 + $0x20] sm:$0xff] 0.0
          %1995 = vst [vmem:[%s1989 + $0x28] sm:$0xf] 0.0
        $region68: #{tpu_custom_call.1} parent=43 // pred_fallthru
          _
        %v1996 = vld [vmem:[#allocation2] sm:$0xff]
        %v1997 = vld [vmem:[#allocation2 + $0x8] sm:$0xff]
        %v1998 = vld [vmem:[#allocation2 + $0x18] sm:$0xff]
        %v1999 = vld [vmem:[#allocation2 + $0x20] sm:$0xff]
        %v2000 = vld [vmem:[#allocation2 + $0x30] sm:$0xff]
        %v2001 = vld [vmem:[#allocation2 + $0x38] sm:$0xff]
        %v2002 = vld [vmem:[#allocation2 + $0x48] sm:$0xff]
        %v2003 = vld [vmem:[#allocation2 + $0x50] sm:$0xff]
        %v2004 = vld [vmem:[#allocation2 + $0x60] sm:$0xff]
        %v2005 = vld [vmem:[#allocation2 + $0x68] sm:$0xff]
        %v2006 = vld [vmem:[#allocation2 + $0x78] sm:$0xff]
        %v2007 = vld [vmem:[#allocation2 + $0x80] sm:$0xff]
        %v2008 = vld [vmem:[#allocation2 + $0x90] sm:$0xff]
        %v2009 = vld [vmem:[#allocation2 + $0x98] sm:$0xff]
        %v2010 = vld [vmem:[#allocation2 + $0xa8] sm:$0xff]
        %v2011 = vld [vmem:[#allocation2 + $0xb0] sm:$0xff]
        %v2012 = vld [vmem:[#allocation2 + $0xc0] sm:$0xff]
        %v2013 = vld [vmem:[#allocation2 + $0xc8] sm:$0xff]
        %v2014 = vld [vmem:[#allocation2 + $0xd8] sm:$0xff]
        %v2015 = vld [vmem:[#allocation2 + $0xe0] sm:$0xff]
        %v2016 = vld [vmem:[#allocation2 + $0xf0] sm:$0xff]
        %v2017 = vld [vmem:[#allocation2 + $0xf8] sm:$0xff]
        %v2018 = vld [vmem:[#allocation2 + $0x108] sm:$0xff]
        %v2019 = vld [vmem:[#allocation2 + $0x110] sm:$0xff]
        %v2020 = vld [vmem:[#allocation2 + $0x1] sm:$0xff]
        %v2021 = vld [vmem:[#allocation2 + $0x9] sm:$0xff]
        %v2022 = vld [vmem:[#allocation2 + $0x19] sm:$0xff]
        %v2023 = vld [vmem:[#allocation2 + $0x21] sm:$0xff]
        %v2024 = vld [vmem:[#allocation2 + $0x31] sm:$0xff]
        %v2025 = vld [vmem:[#allocation2 + $0x39] sm:$0xff]
        %v2026 = vld [vmem:[#allocation2 + $0x49] sm:$0xff]
        %v2027 = vld [vmem:[#allocation2 + $0x51] sm:$0xff]
        %v2028 = vld [vmem:[#allocation2 + $0x61] sm:$0xff]
        %v2029 = vld [vmem:[#allocation2 + $0x69] sm:$0xff]
        %v2030 = vld [vmem:[#allocation2 + $0x79] sm:$0xff]
        %v2031 = vld [vmem:[#allocation2 + $0x81] sm:$0xff]
        %v2032 = vld [vmem:[#allocation2 + $0x91] sm:$0xff]
        %v2033 = vld [vmem:[#allocation2 + $0x99] sm:$0xff]
        %v2034 = vld [vmem:[#allocation2 + $0xa9] sm:$0xff]
        %v2035 = vld [vmem:[#allocation2 + $0xb1] sm:$0xff]
        %v2036 = vld [vmem:[#allocation2 + $0xc1] sm:$0xff]
        %v2037 = vld [vmem:[#allocation2 + $0xc9] sm:$0xff]
        %v2038 = vld [vmem:[#allocation2 + $0xd9] sm:$0xff]
        %v2039 = vld [vmem:[#allocation2 + $0xe1] sm:$0xff]
        %v2040 = vld [vmem:[#allocation2 + $0xf1] sm:$0xff]
        %v2041 = vld [vmem:[#allocation2 + $0xf9] sm:$0xff]
        %v2042 = vld [vmem:[#allocation2 + $0x109] sm:$0xff]
        %v2043 = vld [vmem:[#allocation2 + $0x111] sm:$0xff]
        %v2044 = vld [vmem:[#allocation2 + $0x2] sm:$0xff]
        %v2045 = vld [vmem:[#allocation2 + $0xa] sm:$0xff]
        %v2046 = vld [vmem:[#allocation2 + $0x1a] sm:$0xff]
        %v2047 = vld [vmem:[#allocation2 + $0x22] sm:$0xff]
        %v2048 = vld [vmem:[#allocation2 + $0x32] sm:$0xff]
        %v2049 = vld [vmem:[#allocation2 + $0x3a] sm:$0xff]
        %v2050 = vld [vmem:[#allocation2 + $0x4a] sm:$0xff]
        %v2051 = vld [vmem:[#allocation2 + $0x52] sm:$0xff]
        %v2052 = vld [vmem:[#allocation2 + $0x62] sm:$0xff]
        %v2053 = vld [vmem:[#allocation2 + $0x6a] sm:$0xff]
        %v2054 = vld [vmem:[#allocation2 + $0x7a] sm:$0xff]
        %v2055 = vld [vmem:[#allocation2 + $0x82] sm:$0xff]
        %v2056 = vld [vmem:[#allocation2 + $0x92] sm:$0xff]
        %v2057 = vld [vmem:[#allocation2 + $0x9a] sm:$0xff]
        %v2058 = vld [vmem:[#allocation2 + $0xaa] sm:$0xff]
        %v2059 = vld [vmem:[#allocation2 + $0xb2] sm:$0xff]
        %v2060 = vld [vmem:[#allocation2 + $0xc2] sm:$0xff]
        %v2061 = vld [vmem:[#allocation2 + $0xca] sm:$0xff]
        %v2062 = vld [vmem:[#allocation2 + $0xda] sm:$0xff]
        %v2063 = vld [vmem:[#allocation2 + $0xe2] sm:$0xff]
        %v2064 = vld [vmem:[#allocation2 + $0xf2] sm:$0xff]
        %v2065 = vld [vmem:[#allocation2 + $0xfa] sm:$0xff]
        %v2066 = vld [vmem:[#allocation2 + $0x10a] sm:$0xff]
        %v2067 = vld [vmem:[#allocation2 + $0x112] sm:$0xff]
        %v2068 = vld [vmem:[#allocation2 + $0x3] sm:$0xff]
        %v2069 = vld [vmem:[#allocation2 + $0xb] sm:$0xff]
        %v2070 = vld [vmem:[#allocation2 + $0x1b] sm:$0xff]
        %v2071 = vld [vmem:[#allocation2 + $0x23] sm:$0xff]
        %v2072 = vld [vmem:[#allocation2 + $0x33] sm:$0xff]
        %v2073 = vld [vmem:[#allocation2 + $0x3b] sm:$0xff]
        %v2074 = vld [vmem:[#allocation2 + $0x4b] sm:$0xff]
        %v2075 = vld [vmem:[#allocation2 + $0x53] sm:$0xff]
        %v2076 = vld [vmem:[#allocation2 + $0x63] sm:$0xff]
        %v2077 = vld [vmem:[#allocation2 + $0x6b] sm:$0xff]
        %v2078 = vld [vmem:[#allocation2 + $0x7b] sm:$0xff]
        %v2079 = vld [vmem:[#allocation2 + $0x83] sm:$0xff]
        %v2080 = vld [vmem:[#allocation2 + $0x93] sm:$0xff]
        %v2081 = vld [vmem:[#allocation2 + $0x9b] sm:$0xff]
        %v2082 = vld [vmem:[#allocation2 + $0xab] sm:$0xff]
        %v2083 = vld [vmem:[#allocation2 + $0xb3] sm:$0xff]
        %v2084 = vld [vmem:[#allocation2 + $0xc3] sm:$0xff]
        %v2085 = vld [vmem:[#allocation2 + $0xcb] sm:$0xff]
        %v2086 = vld [vmem:[#allocation2 + $0xdb] sm:$0xff]
        %v2087 = vld [vmem:[#allocation2 + $0xe3] sm:$0xff]
        %v2088 = vld [vmem:[#allocation2 + $0xf3] sm:$0xff]
        %v2089 = vld [vmem:[#allocation2 + $0xfb] sm:$0xff]
        %v2090 = vld [vmem:[#allocation2 + $0x10b] sm:$0xff]
        %v2091 = vld [vmem:[#allocation2 + $0x113] sm:$0xff]
        %v2092 = vld [vmem:[#allocation2 + $0x4] sm:$0xff]
        %v2093 = vld [vmem:[#allocation2 + $0xc] sm:$0xff]
        %v2094 = vld [vmem:[#allocation2 + $0x1c] sm:$0xff]
        %v2095 = vld [vmem:[#allocation2 + $0x24] sm:$0xff]
        %v2096 = vld [vmem:[#allocation2 + $0x34] sm:$0xff]
        %v2097 = vld [vmem:[#allocation2 + $0x3c] sm:$0xff]
        %v2098 = vld [vmem:[#allocation2 + $0x4c] sm:$0xff]
        %v2099 = vld [vmem:[#allocation2 + $0x54] sm:$0xff]
        %v2100 = vld [vmem:[#allocation2 + $0x64] sm:$0xff]
        %v2101 = vld [vmem:[#allocation2 + $0x6c] sm:$0xff]
        %v2102 = vld [vmem:[#allocation2 + $0x7c] sm:$0xff]
        %v2103 = vld [vmem:[#allocation2 + $0x84] sm:$0xff]
        %v2104 = vld [vmem:[#allocation2 + $0x94] sm:$0xff]
        %v2105 = vld [vmem:[#allocation2 + $0x9c] sm:$0xff]
        %v2106 = vld [vmem:[#allocation2 + $0xac] sm:$0xff]
        %v2107 = vld [vmem:[#allocation2 + $0xb4] sm:$0xff]
        %v2108 = vld [vmem:[#allocation2 + $0xc4] sm:$0xff]
        %v2109 = vld [vmem:[#allocation2 + $0xcc] sm:$0xff]
        %v2110 = vld [vmem:[#allocation2 + $0xdc] sm:$0xff]
        %v2111 = vld [vmem:[#allocation2 + $0xe4] sm:$0xff]
        %v2112 = vld [vmem:[#allocation2 + $0xf4] sm:$0xff]
        %v2113 = vld [vmem:[#allocation2 + $0xfc] sm:$0xff]
        %v2114 = vld [vmem:[#allocation2 + $0x10c] sm:$0xff]
        %v2115 = vld [vmem:[#allocation2 + $0x114] sm:$0xff]
        %v2116 = vld [vmem:[#allocation6] sm:$0xff]
        %v2117 = vld [vmem:[#allocation6 + $0x8] sm:$0xff]
        %v2118 = vld [vmem:[#allocation6 + $0x10] sm:$0xff]
        %v2119 = vld [vmem:[#allocation6 + $0x18] sm:$0xff]
        %v2120 = vld [vmem:[#allocation6 + $0x20] sm:$0xff]
        %v2121 = vld [vmem:[#allocation6 + $0x28] sm:$0xff]
        %v2122 = vld [vmem:[#allocation6 + $0x30] sm:$0xff]
        %v2123 = vld [vmem:[#allocation6 + $0x38] sm:$0xff]
        %v2124 = vld [vmem:[#allocation6 + $0x40] sm:$0xff]
        %v2125 = vld [vmem:[#allocation6 + $0x48] sm:$0xff]
        %v2126 = vld [vmem:[#allocation6 + $0x50] sm:$0xff]
        %v2127 = vld [vmem:[#allocation6 + $0x58] sm:$0xff]
        %v2128 = vld [vmem:[#allocation6 + $0x60] sm:$0xff]
        %v2129 = vld [vmem:[#allocation6 + $0x68] sm:$0xff]
        %v2130 = vld [vmem:[#allocation6 + $0x70] sm:$0xff]
        %v2131 = vld [vmem:[#allocation6 + $0x78] sm:$0xff]
        %v2132 = vld [vmem:[#allocation6 + $0x80] sm:$0xff]
        %v2133 = vld [vmem:[#allocation6 + $0x88] sm:$0xff]
        %v2134 = vld [vmem:[#allocation6 + $0x90] sm:$0xff]
        %v2135 = vld [vmem:[#allocation6 + $0x98] sm:$0xff]
        %v2136 = vld [vmem:[#allocation6 + $0xa0] sm:$0xff]
        %v2137 = vld [vmem:[#allocation6 + $0xa8] sm:$0xff]
        %v2138 = vld [vmem:[#allocation6 + $0xb0] sm:$0xff]
        %v2139 = vld [vmem:[#allocation6 + $0xb8] sm:$0xff]
        %v2140 = vld [vmem:[#allocation6 + $0xc0] sm:$0xff]
        %v2141 = vld [vmem:[#allocation6 + $0xc8] sm:$0xff]
        %v2142 = vld [vmem:[#allocation6 + $0xd0] sm:$0xff]
        %v2143 = vld [vmem:[#allocation6 + $0xd8] sm:$0xff]
        %v2144 = vld [vmem:[#allocation6 + $0xe0] sm:$0xff]
        %v2145 = vld [vmem:[#allocation6 + $0xe8] sm:$0xff]
        %v2146 = vld [vmem:[#allocation6 + $0xf0] sm:$0xff]
        %v2147 = vld [vmem:[#allocation6 + $0xf8] sm:$0xff]
        %v2148 = vld [vmem:[#allocation6 + $0x100] sm:$0xff]
        %v2149 = vld [vmem:[#allocation6 + $0x108] sm:$0xff]
        %v2150 = vld [vmem:[#allocation6 + $0x110] sm:$0xff]
        %v2151 = vld [vmem:[#allocation6 + $0x118] sm:$0xff]
        %v2152 = vld [vmem:[#allocation6 + $0x120] sm:$0xff]
        %v2153 = vld [vmem:[#allocation6 + $0x128] sm:$0xff]
        %v2154 = vld [vmem:[#allocation6 + $0x130] sm:$0xff]
        %v2155 = vld [vmem:[#allocation6 + $0x138] sm:$0xff]
        %v2156 = vld [vmem:[#allocation6 + $0x140] sm:$0xff]
        %v2157 = vld [vmem:[#allocation6 + $0x148] sm:$0xff]
        %v2158 = vld [vmem:[#allocation6 + $0x150] sm:$0xff]
        %v2159 = vld [vmem:[#allocation6 + $0x158] sm:$0xff]
        %v2160 = vld [vmem:[#allocation6 + $0x160] sm:$0xff]
        %v2161 = vld [vmem:[#allocation6 + $0x168] sm:$0xff]
        %v2162 = vld [vmem:[#allocation6 + $0x170] sm:$0xff]
        %v2163 = vld [vmem:[#allocation6 + $0x178] sm:$0xff]
        %v2164 = vld [vmem:[#allocation6 + $0x180] sm:$0xff]
        %v2165 = vld [vmem:[#allocation6 + $0x188] sm:$0xff]
        %v2166 = vld [vmem:[#allocation6 + $0x190] sm:$0xff]
        %v2167 = vld [vmem:[#allocation6 + $0x198] sm:$0xff]
        %v2168 = vld [vmem:[#allocation6 + $0x1a0] sm:$0xff]
        %v2169 = vld [vmem:[#allocation6 + $0x1a8] sm:$0xff]
        %v2170 = vld [vmem:[#allocation6 + $0x1b0] sm:$0xff]
        %v2171 = vld [vmem:[#allocation6 + $0x1b8] sm:$0xff]
        %v2172 = vld [vmem:[#allocation6 + $0x1c0] sm:$0xff]
        %v2173 = vld [vmem:[#allocation6 + $0x1c8] sm:$0xff]
        %v2174 = vld [vmem:[#allocation6 + $0x1d0] sm:$0xff]
        %v2175 = vld [vmem:[#allocation6 + $0x1d8] sm:$0xff]
        %v2176 = vld [vmem:[#allocation6 + $0x1e0] sm:$0xff]
        %v2177 = vld [vmem:[#allocation6 + $0x1e8] sm:$0xff]
        %v2178 = vld [vmem:[#allocation6 + $0x1f0] sm:$0xff]
        %v2179 = vld [vmem:[#allocation6 + $0x1f8] sm:$0xff]
        %v2180 = vld [vmem:[#allocation6 + $0x200] sm:$0xff]
        %v2181 = vld [vmem:[#allocation6 + $0x208] sm:$0xff]
        %v2182 = vld [vmem:[#allocation6 + $0x210] sm:$0xff]
        %v2183 = vld [vmem:[#allocation6 + $0x218] sm:$0xff]
        %v2184 = vld [vmem:[#allocation6 + $0x220] sm:$0xff]
        %v2185 = vld [vmem:[#allocation6 + $0x228] sm:$0xff]
        %v2186 = vld [vmem:[#allocation6 + $0x230] sm:$0xff]
        %v2187 = vld [vmem:[#allocation6 + $0x238] sm:$0xff]
        %v2188 = vld [vmem:[#allocation6 + $0x240] sm:$0xff]
        %v2189 = vld [vmem:[#allocation6 + $0x248] sm:$0xff]
        %v2190 = vld [vmem:[#allocation6 + $0x250] sm:$0xff]
        %v2191 = vld [vmem:[#allocation6 + $0x258] sm:$0xff]
        %v2192 = vld [vmem:[#allocation6 + $0x260] sm:$0xff]
        %v2193 = vld [vmem:[#allocation6 + $0x268] sm:$0xff]
        %v2194 = vld [vmem:[#allocation6 + $0x270] sm:$0xff]
        %v2195 = vld [vmem:[#allocation6 + $0x278] sm:$0xff]
        %s2196 = scalar_lea.vmem [#allocation6], 640
        %v2197 = vld [vmem:[%s2196] sm:$0xff]
        %v2198 = vld [vmem:[%s2196 + $0x8] sm:$0xff]
        %v2199 = vld [vmem:[%s2196 + $0x10] sm:$0xff]
        %v2200 = vld [vmem:[%s2196 + $0x18] sm:$0xff]
        %v2201 = vld [vmem:[%s2196 + $0x20] sm:$0xff]
        %v2202 = vld [vmem:[%s2196 + $0x28] sm:$0xff]
        %v2203 = vld [vmem:[%s2196 + $0x30] sm:$0xff]
        %v2204 = vld [vmem:[%s2196 + $0x38] sm:$0xff]
        %v2205 = vld [vmem:[%s2196 + $0x40] sm:$0xff]
        %v2206 = vld [vmem:[%s2196 + $0x48] sm:$0xff]
        %v2207 = vld [vmem:[%s2196 + $0x50] sm:$0xff]
        %v2208 = vld [vmem:[%s2196 + $0x58] sm:$0xff]
        %v2209 = vld [vmem:[%s2196 + $0x60] sm:$0xff]
        %v2210 = vld [vmem:[%s2196 + $0x68] sm:$0xff]
        %v2211 = vld [vmem:[%s2196 + $0x70] sm:$0xff]
        %v2212 = vld [vmem:[%s2196 + $0x78] sm:$0xff]
        %v2213 = vld [vmem:[%s2196 + $0x80] sm:$0xff]
        %v2214 = vld [vmem:[%s2196 + $0x88] sm:$0xff]
        %v2215 = vld [vmem:[%s2196 + $0x90] sm:$0xff]
        %v2216 = vld [vmem:[%s2196 + $0x98] sm:$0xff]
        %v2217 = vld [vmem:[%s2196 + $0xa0] sm:$0xff]
        %v2218 = vld [vmem:[%s2196 + $0xa8] sm:$0xff]
        %v2219 = vld [vmem:[%s2196 + $0xb0] sm:$0xff]
        %v2220 = vld [vmem:[%s2196 + $0xb8] sm:$0xff]
        %v2221 = vld [vmem:[%s2196 + $0xc0] sm:$0xff]
        %v2222 = vld [vmem:[%s2196 + $0xc8] sm:$0xff]
        %v2223 = vld [vmem:[%s2196 + $0xd0] sm:$0xff]
        %v2224 = vld [vmem:[%s2196 + $0xd8] sm:$0xff]
        %v2225 = vld [vmem:[%s2196 + $0xe0] sm:$0xff]
        %v2226 = vld [vmem:[%s2196 + $0xe8] sm:$0xff]
        %v2227 = vld [vmem:[%s2196 + $0xf0] sm:$0xff]
        %v2228 = vld [vmem:[%s2196 + $0xf8] sm:$0xff]
        %v2229 = vld [vmem:[%s2196 + $0x100] sm:$0xff]
        %v2230 = vld [vmem:[%s2196 + $0x108] sm:$0xff]
        %v2231 = vld [vmem:[%s2196 + $0x110] sm:$0xff]
        %v2232 = vld [vmem:[%s2196 + $0x118] sm:$0xff]
        %v2233 = vld [vmem:[%s2196 + $0x120] sm:$0xff]
        %v2234 = vld [vmem:[%s2196 + $0x128] sm:$0xff]
        %v2235 = vld [vmem:[%s2196 + $0x130] sm:$0xff]
        %v2236 = vld [vmem:[%s2196 + $0x138] sm:$0xff]
        %v2237 = vld [vmem:[%s2196 + $0x140] sm:$0xff]
        %v2238 = vld [vmem:[%s2196 + $0x148] sm:$0xff]
        %v2239 = vld [vmem:[%s2196 + $0x150] sm:$0xff]
        %v2240 = vld [vmem:[%s2196 + $0x158] sm:$0xff]
        %v2241 = vld [vmem:[%s2196 + $0x160] sm:$0xff]
        %v2242 = vld [vmem:[%s2196 + $0x168] sm:$0xff]
        %v2243 = vld [vmem:[%s2196 + $0x170] sm:$0xff]
        %v2244 = vld [vmem:[%s2196 + $0x178] sm:$0xff]
        %v2245 = vld [vmem:[%s2196 + $0x180] sm:$0xff]
        %v2246 = vld [vmem:[%s2196 + $0x188] sm:$0xff]
        %v2247 = vld [vmem:[%s2196 + $0x190] sm:$0xff]
        %v2248 = vld [vmem:[%s2196 + $0x198] sm:$0xff]
        %v2249 = vld [vmem:[%s2196 + $0x1a0] sm:$0xff]
        %v2250 = vld [vmem:[%s2196 + $0x1a8] sm:$0xff]
        %v2251 = vld [vmem:[%s2196 + $0x1b0] sm:$0xff]
        %v2252 = vld [vmem:[%s2196 + $0x1b8] sm:$0xff]
        %v2253 = vld [vmem:[%s2196 + $0x1c0] sm:$0xff]
        %v2254 = vld [vmem:[%s2196 + $0x1c8] sm:$0xff]
        %v2255 = vld [vmem:[%s2196 + $0x1d0] sm:$0xff]
        %v2256 = vld [vmem:[%s2196 + $0x1d8] sm:$0xff]
        %v2257 = vld [vmem:[%s2196 + $0x1e0] sm:$0xff]
        %v2258 = vld [vmem:[%s2196 + $0x1e8] sm:$0xff]
        %v2259 = vld [vmem:[%s2196 + $0x1f0] sm:$0xff]
        %v2260 = vld [vmem:[%s2196 + $0x1f8] sm:$0xff]
        %v2261 = vld [vmem:[%s2196 + $0x200] sm:$0xff]
        %v2262 = vld [vmem:[%s2196 + $0x208] sm:$0xff]
        %v2263 = vld [vmem:[%s2196 + $0x210] sm:$0xff]
        %v2264 = vld [vmem:[%s2196 + $0x218] sm:$0xff]
        %v2265 = vld [vmem:[%s2196 + $0x220] sm:$0xff]
        %v2266 = vld [vmem:[%s2196 + $0x228] sm:$0xff]
        %v2267 = vld [vmem:[%s2196 + $0x230] sm:$0xff]
        %v2268 = vld [vmem:[%s2196 + $0x238] sm:$0xff]
        %v2269 = vld [vmem:[%s2196 + $0x240] sm:$0xff]
        %v2270 = vld [vmem:[%s2196 + $0x248] sm:$0xff]
        %v2271 = vld [vmem:[%s2196 + $0x250] sm:$0xff]
        %v2272 = vld [vmem:[%s2196 + $0x258] sm:$0xff]
        %v2273 = vld [vmem:[%s2196 + $0x260] sm:$0xff]
        %v2274 = vld [vmem:[%s2196 + $0x268] sm:$0xff]
        %v2275 = vld [vmem:[%s2196 + $0x270] sm:$0xff]
        %v2276 = vld [vmem:[%s2196 + $0x278] sm:$0xff]
        %2277 = vmatprep.subr.mxu0 0.0
        %2278 = vmatpush1.msra.mxu0 %v2212
        %2279 = vmatprep.subr.mxu0 0.0
        %2280 = vmatpush1.msra.mxu0 %v2211
        %2281 = vmatprep.subr.mxu0 0.0
        %2282 = vmatpush1.msra.mxu0 %v2210
        %2283 = vmatprep.subr.mxu0 0.0
        %2284 = vmatpush1.msra.mxu0 %v2209
        %2285 = vmatprep.subr.mxu0 0.0
        %2286 = vmatpush1.msra.mxu0 %v2208
        %2287 = vmatprep.subr.mxu0 0.0
        %2288 = vmatpush1.msra.mxu0 %v2207
        %2289 = vmatprep.subr.mxu0 0.0
        %2290 = vmatpush1.msra.mxu0 %v2206
        %2291 = vmatprep.subr.mxu0 0.0
        %2292 = vmatpush1.msra.mxu0 %v2205
        %2293 = vmatprep.subr.mxu0 0.0
        %2294 = vmatpush1.msra.mxu0 %v2204
        %2295 = vmatprep.subr.mxu0 0.0
        %2296 = vmatpush1.msra.mxu0 %v2203
        %2297 = vmatprep.subr.mxu0 0.0
        %2298 = vmatpush1.msra.mxu0 %v2202
        %2299 = vmatprep.subr.mxu0 0.0
        %2300 = vmatpush1.msra.mxu0 %v2201
        %2301 = vmatprep.subr.mxu0 0.0
        %2302 = vmatpush1.msra.mxu0 %v2200
        %2303 = vmatprep.subr.mxu0 0.0
        %2304 = vmatpush1.msra.mxu0 %v2199
        %2305 = vmatprep.subr.mxu0 0.0
        %2306 = vmatpush1.msra.mxu0 %v2198
        %2307 = vmatprep.subr.mxu0 0.0
        %2308 = vmatpush1.msra.mxu0 %v2197
        %2309 = vmatprep.subr.mxu0 0.0
        %2310 = vmatpush2.msra.mxu0 %v2228
        %2311 = vmatprep.subr.mxu0 0.0
        %2312 = vmatpush2.msra.mxu0 %v2227
        %2313 = vmatprep.subr.mxu0 0.0
        %2314 = vmatpush2.msra.mxu0 %v2226
        %2315 = vmatprep.subr.mxu0 0.0
        %2316 = vmatpush2.msra.mxu0 %v2225
        %2317 = vmatprep.subr.mxu0 0.0
        %2318 = vmatpush2.msra.mxu0 %v2224
        %2319 = vmatprep.subr.mxu0 0.0
        %2320 = vmatpush2.msra.mxu0 %v2223
        %2321 = vmatprep.subr.mxu0 0.0
        %2322 = vmatpush2.msra.mxu0 %v2222
        %2323 = vmatprep.subr.mxu0 0.0
        %2324 = vmatpush2.msra.mxu0 %v2221
        %2325 = vmatprep.subr.mxu0 0.0
        %2326 = vmatpush2.msra.mxu0 %v2220
        %2327 = vmatprep.subr.mxu0 0.0
        %2328 = vmatpush2.msra.mxu0 %v2219
        %2329 = vmatprep.subr.mxu0 0.0
        %2330 = vmatpush2.msra.mxu0 %v2218
        %2331 = vmatprep.subr.mxu0 0.0
        %2332 = vmatpush2.msra.mxu0 %v2217
        %2333 = vmatprep.subr.mxu0 0.0
        %2334 = vmatpush2.msra.mxu0 %v2216
        %2335 = vmatprep.subr.mxu0 0.0
        %2336 = vmatpush2.msra.mxu0 %v2215
        %2337 = vmatprep.subr.mxu0 0.0
        %2338 = vmatpush2.msra.mxu0 %v2214
        %2339 = vmatprep.subr.mxu0 0.0
        %2340 = vmatpush2.msra.mxu0 %v2213
        %2341 = vmatprep.mubr.f32.mxu0 %v2022
        %2342 = vmatmul.mubr.f32.gmra.mxu0 %v1998
        %v2343 = vpop.f32.mrf.mxu0
        %v2344 = vadd.f32 0.0, %v2343
        %v2345 = vpop.f32.mrf.mxu0
        %2346 = vmatprep.mubr.f32.mxu0 %v2023
        %2347 = vmatmul.mubr.f32.gmra.mxu0 %v1999
        %v2348 = vpop.f32.mrf.mxu0
        %v2349 = vadd.f32 0.0, %v2348
        %v2350 = vpop.f32.mrf.mxu0
        %2351 = vmatprep.mubr.f32.mxu0 %v2024
        %2352 = vmatmul.mubr.f32.gmra.mxu0 %v2000
        %v2353 = vpop.f32.mrf.mxu0
        %v2354 = vadd.f32 0.0, %v2353
        %v2355 = vpop.f32.mrf.mxu0
        %2356 = vmatprep.mubr.f32.mxu0 %v2025
        %2357 = vmatmul.mubr.f32.gmra.mxu0 %v2001
        %v2358 = vpop.f32.mrf.mxu0
        %v2359 = vadd.f32 0.0, %v2358
        %v2360 = vpop.f32.mrf.mxu0
        %2361 = vmatprep.mubr.f32.mxu0 %v2026
        %2362 = vmatmul.mubr.f32.gmra.mxu0 %v2002
        %v2363 = vpop.f32.mrf.mxu0
        %v2364 = vadd.f32 0.0, %v2363
        %v2365 = vpop.f32.mrf.mxu0
        %2366 = vmatprep.mubr.f32.mxu0 %v2027
        %2367 = vmatmul.mubr.f32.gmra.mxu0 %v2003
        %v2368 = vpop.f32.mrf.mxu0
        %v2369 = vadd.f32 0.0, %v2368
        %v2370 = vpop.f32.mrf.mxu0
        %2371 = vmatprep.mubr.f32.mxu0 %v2028
        %2372 = vmatmul.mubr.f32.gmra.mxu0 %v2004
        %v2373 = vpop.f32.mrf.mxu0
        %v2374 = vadd.f32 0.0, %v2373
        %v2375 = vpop.f32.mrf.mxu0
        %2376 = vmatprep.mubr.f32.mxu0 %v2029
        %2377 = vmatmul.mubr.f32.gmra.mxu0 %v2005
        %v2378 = vpop.f32.mrf.mxu0
        %v2379 = vadd.f32 0.0, %v2378
        %v2380 = vpop.f32.mrf.mxu0
        %2381 = vmatprep.mubr.f32.mxu0 %v2030
        %2382 = vmatmul.mubr.f32.gmra.mxu0 %v2006
        %v2383 = vpop.f32.mrf.mxu0
        %v2384 = vadd.f32 0.0, %v2383
        %v2385 = vpop.f32.mrf.mxu0
        %2386 = vmatprep.mubr.f32.mxu0 %v2031
        %2387 = vmatmul.mubr.f32.gmra.mxu0 %v2007
        %v2388 = vpop.f32.mrf.mxu0
        %v2389 = vadd.f32 0.0, %v2388
        %v2390 = vpop.f32.mrf.mxu0
        %2391 = vmatprep.mubr.f32.mxu0 %v2032
        %2392 = vmatmul.mubr.f32.gmra.mxu0 %v2008
        %v2393 = vpop.f32.mrf.mxu0
        %v2394 = vadd.f32 0.0, %v2393
        %v2395 = vpop.f32.mrf.mxu0
        %2396 = vmatprep.mubr.f32.mxu0 %v2033
        %2397 = vmatmul.mubr.f32.gmra.mxu0 %v2009
        %v2398 = vpop.f32.mrf.mxu0
        %v2399 = vadd.f32 0.0, %v2398
        %v2400 = vpop.f32.mrf.mxu0
        %2401 = vmatprep.mubr.f32.mxu0 %v2034
        %2402 = vmatmul.mubr.f32.gmra.mxu0 %v2010
        %v2403 = vpop.f32.mrf.mxu0
        %v2404 = vadd.f32 0.0, %v2403
        %v2405 = vpop.f32.mrf.mxu0
        %2406 = vmatprep.mubr.f32.mxu0 %v2035
        %2407 = vmatmul.mubr.f32.gmra.mxu0 %v2011
        %v2408 = vpop.f32.mrf.mxu0
        %v2409 = vadd.f32 0.0, %v2408
        %v2410 = vpop.f32.mrf.mxu0
        %2411 = vmatprep.mubr.f32.mxu0 %v2036
        %2412 = vmatmul.mubr.f32.gmra.mxu0 %v2012
        %v2413 = vpop.f32.mrf.mxu0
        %v2414 = vadd.f32 0.0, %v2413
        %v2415 = vpop.f32.mrf.mxu0
        %2416 = vmatprep.mubr.f32.mxu0 %v2037
        %2417 = vmatmul.mubr.f32.gmra.mxu0 %v2013
        %v2418 = vpop.f32.mrf.mxu0
        %v2419 = vadd.f32 0.0, %v2418
        %v2420 = vpop.f32.mrf.mxu0
        %2421 = vdwg.mxu0
        %2422 = vmatprep.subr.mxu0 0.0
        %2423 = vmatpush1.msra.mxu0 %v2244
        %2424 = vmatprep.subr.mxu0 0.0
        %2425 = vmatpush1.msra.mxu0 %v2243
        %2426 = vmatprep.subr.mxu0 0.0
        %2427 = vmatpush1.msra.mxu0 %v2242
        %2428 = vmatprep.subr.mxu0 0.0
        %2429 = vmatpush1.msra.mxu0 %v2241
        %2430 = vmatprep.subr.mxu0 0.0
        %2431 = vmatpush1.msra.mxu0 %v2240
        %2432 = vmatprep.subr.mxu0 0.0
        %2433 = vmatpush1.msra.mxu0 %v2239
        %2434 = vmatprep.subr.mxu0 0.0
        %2435 = vmatpush1.msra.mxu0 %v2238
        %2436 = vmatprep.subr.mxu0 0.0
        %2437 = vmatpush1.msra.mxu0 %v2237
        %2438 = vmatprep.subr.mxu0 0.0
        %2439 = vmatpush1.msra.mxu0 %v2236
        %2440 = vmatprep.subr.mxu0 0.0
        %2441 = vmatpush1.msra.mxu0 %v2235
        %2442 = vmatprep.subr.mxu0 0.0
        %2443 = vmatpush1.msra.mxu0 %v2234
        %2444 = vmatprep.subr.mxu0 0.0
        %2445 = vmatpush1.msra.mxu0 %v2233
        %2446 = vmatprep.subr.mxu0 0.0
        %2447 = vmatpush1.msra.mxu0 %v2232
        %2448 = vmatprep.subr.mxu0 0.0
        %2449 = vmatpush1.msra.mxu0 %v2231
        %2450 = vmatprep.subr.mxu0 0.0
        %2451 = vmatpush1.msra.mxu0 %v2230
        %2452 = vmatprep.subr.mxu0 0.0
        %2453 = vmatpush1.msra.mxu0 %v2229
        %2454 = vmatprep.subr.mxu0 0.0
        %2455 = vmatpush2.msra.mxu0 %v2260
        %2456 = vmatprep.subr.mxu0 0.0
        %2457 = vmatpush2.msra.mxu0 %v2259
        %2458 = vmatprep.subr.mxu0 0.0
        %2459 = vmatpush2.msra.mxu0 %v2258
        %2460 = vmatprep.subr.mxu0 0.0
        %2461 = vmatpush2.msra.mxu0 %v2257
        %2462 = vmatprep.subr.mxu0 0.0
        %2463 = vmatpush2.msra.mxu0 %v2256
        %2464 = vmatprep.subr.mxu0 0.0
        %2465 = vmatpush2.msra.mxu0 %v2255
        %2466 = vmatprep.subr.mxu0 0.0
        %2467 = vmatpush2.msra.mxu0 %v2254
        %2468 = vmatprep.subr.mxu0 0.0
        %2469 = vmatpush2.msra.mxu0 %v2253
        %2470 = vmatprep.subr.mxu0 0.0
        %2471 = vmatpush2.msra.mxu0 %v2252
        %2472 = vmatprep.subr.mxu0 0.0
        %2473 = vmatpush2.msra.mxu0 %v2251
        %2474 = vmatprep.subr.mxu0 0.0
        %2475 = vmatpush2.msra.mxu0 %v2250
        %2476 = vmatprep.subr.mxu0 0.0
        %2477 = vmatpush2.msra.mxu0 %v2249
        %2478 = vmatprep.subr.mxu0 0.0
        %2479 = vmatpush2.msra.mxu0 %v2248
        %2480 = vmatprep.subr.mxu0 0.0
        %2481 = vmatpush2.msra.mxu0 %v2247
        %2482 = vmatprep.subr.mxu0 0.0
        %2483 = vmatpush2.msra.mxu0 %v2246
        %2484 = vmatprep.subr.mxu0 0.0
        %2485 = vmatpush2.msra.mxu0 %v2245
        %2486 = vmatprep.mubr.f32.mxu0 %v2070
        %2487 = vmatmul.mubr.f32.gmra.mxu0 %v2046
        %v2488 = vpop.f32.mrf.mxu0
        %v2489 = vadd.f32 %v2344, %v2488
        %v2490 = vpop.f32.mrf.mxu0
        %2491 = vmatprep.mubr.f32.mxu0 %v2071
        %2492 = vmatmul.mubr.f32.gmra.mxu0 %v2047
        %v2493 = vpop.f32.mrf.mxu0
        %v2494 = vadd.f32 %v2349, %v2493
        %v2495 = vpop.f32.mrf.mxu0
        %2496 = vmatprep.mubr.f32.mxu0 %v2072
        %2497 = vmatmul.mubr.f32.gmra.mxu0 %v2048
        %v2498 = vpop.f32.mrf.mxu0
        %v2499 = vadd.f32 %v2354, %v2498
        %v2500 = vpop.f32.mrf.mxu0
        %2501 = vmatprep.mubr.f32.mxu0 %v2073
        %2502 = vmatmul.mubr.f32.gmra.mxu0 %v2049
        %v2503 = vpop.f32.mrf.mxu0
        %v2504 = vadd.f32 %v2359, %v2503
        %v2505 = vpop.f32.mrf.mxu0
        %2506 = vmatprep.mubr.f32.mxu0 %v2074
        %2507 = vmatmul.mubr.f32.gmra.mxu0 %v2050
        %v2508 = vpop.f32.mrf.mxu0
        %v2509 = vadd.f32 %v2364, %v2508
        %v2510 = vpop.f32.mrf.mxu0
        %2511 = vmatprep.mubr.f32.mxu0 %v2075
        %2512 = vmatmul.mubr.f32.gmra.mxu0 %v2051
        %v2513 = vpop.f32.mrf.mxu0
        %v2514 = vadd.f32 %v2369, %v2513
        %v2515 = vpop.f32.mrf.mxu0
        %2516 = vmatprep.mubr.f32.mxu0 %v2076
        %2517 = vmatmul.mubr.f32.gmra.mxu0 %v2052
        %v2518 = vpop.f32.mrf.mxu0
        %v2519 = vadd.f32 %v2374, %v2518
        %v2520 = vpop.f32.mrf.mxu0
        %2521 = vmatprep.mubr.f32.mxu0 %v2077
        %2522 = vmatmul.mubr.f32.gmra.mxu0 %v2053
        %v2523 = vpop.f32.mrf.mxu0
        %v2524 = vadd.f32 %v2379, %v2523
        %v2525 = vpop.f32.mrf.mxu0
        %2526 = vmatprep.mubr.f32.mxu0 %v2078
        %2527 = vmatmul.mubr.f32.gmra.mxu0 %v2054
        %v2528 = vpop.f32.mrf.mxu0
        %v2529 = vadd.f32 %v2384, %v2528
        %v2530 = vpop.f32.mrf.mxu0
        %2531 = vmatprep.mubr.f32.mxu0 %v2079
        %2532 = vmatmul.mubr.f32.gmra.mxu0 %v2055
        %v2533 = vpop.f32.mrf.mxu0
        %v2534 = vadd.f32 %v2389, %v2533
        %v2535 = vpop.f32.mrf.mxu0
        %2536 = vmatprep.mubr.f32.mxu0 %v2080
        %2537 = vmatmul.mubr.f32.gmra.mxu0 %v2056
        %v2538 = vpop.f32.mrf.mxu0
        %v2539 = vadd.f32 %v2394, %v2538
        %v2540 = vpop.f32.mrf.mxu0
        %2541 = vmatprep.mubr.f32.mxu0 %v2081
        %2542 = vmatmul.mubr.f32.gmra.mxu0 %v2057
        %v2543 = vpop.f32.mrf.mxu0
        %v2544 = vadd.f32 %v2399, %v2543
        %v2545 = vpop.f32.mrf.mxu0
        %2546 = vmatprep.mubr.f32.mxu0 %v2082
        %2547 = vmatmul.mubr.f32.gmra.mxu0 %v2058
        %v2548 = vpop.f32.mrf.mxu0
        %v2549 = vadd.f32 %v2404, %v2548
        %v2550 = vpop.f32.mrf.mxu0
        %2551 = vmatprep.mubr.f32.mxu0 %v2083
        %2552 = vmatmul.mubr.f32.gmra.mxu0 %v2059
        %v2553 = vpop.f32.mrf.mxu0
        %v2554 = vadd.f32 %v2409, %v2553
        %v2555 = vpop.f32.mrf.mxu0
        %2556 = vmatprep.mubr.f32.mxu0 %v2084
        %2557 = vmatmul.mubr.f32.gmra.mxu0 %v2060
        %v2558 = vpop.f32.mrf.mxu0
        %v2559 = vadd.f32 %v2414, %v2558
        %v2560 = vpop.f32.mrf.mxu0
        %2561 = vmatprep.mubr.f32.mxu0 %v2085
        %2562 = vmatmul.mubr.f32.gmra.mxu0 %v2061
        %v2563 = vpop.f32.mrf.mxu0
        %v2564 = vadd.f32 %v2419, %v2563
        %v2565 = vpop.f32.mrf.mxu0
        %2566 = vdwg.mxu0
        %2567 = vmatprep.subr.mxu0 0.0
        %2568 = vmatpush1.msra.mxu0 %v2276
        %2569 = vmatprep.subr.mxu0 0.0
        %2570 = vmatpush1.msra.mxu0 %v2275
        %2571 = vmatprep.subr.mxu0 0.0
        %2572 = vmatpush1.msra.mxu0 %v2274
        %2573 = vmatprep.subr.mxu0 0.0
        %2574 = vmatpush1.msra.mxu0 %v2273
        %2575 = vmatprep.subr.mxu0 0.0
        %2576 = vmatpush1.msra.mxu0 %v2272
        %2577 = vmatprep.subr.mxu0 0.0
        %2578 = vmatpush1.msra.mxu0 %v2271
        %2579 = vmatprep.subr.mxu0 0.0
        %2580 = vmatpush1.msra.mxu0 %v2270
        %2581 = vmatprep.subr.mxu0 0.0
        %2582 = vmatpush1.msra.mxu0 %v2269
        %2583 = vmatprep.subr.mxu0 0.0
        %2584 = vmatpush1.msra.mxu0 %v2268
        %2585 = vmatprep.subr.mxu0 0.0
        %2586 = vmatpush1.msra.mxu0 %v2267
        %2587 = vmatprep.subr.mxu0 0.0
        %2588 = vmatpush1.msra.mxu0 %v2266
        %2589 = vmatprep.subr.mxu0 0.0
        %2590 = vmatpush1.msra.mxu0 %v2265
        %2591 = vmatprep.subr.mxu0 0.0
        %2592 = vmatpush1.msra.mxu0 %v2264
        %2593 = vmatprep.subr.mxu0 0.0
        %2594 = vmatpush1.msra.mxu0 %v2263
        %2595 = vmatprep.subr.mxu0 0.0
        %2596 = vmatpush1.msra.mxu0 %v2262
        %2597 = vmatprep.subr.mxu0 0.0
        %2598 = vmatpush1.msra.mxu0 %v2261
        %2599 = vmatprep.subr.mxu0 0.0
        %2600 = vmatpush2.msra.mxu0 0.0
        %2601 = vmatprep.subr.mxu0 0.0
        %2602 = vmatpush2.msra.mxu0 0.0
        %2603 = vmatprep.subr.mxu0 0.0
        %2604 = vmatpush2.msra.mxu0 0.0
        %2605 = vmatprep.subr.mxu0 0.0
        %2606 = vmatpush2.msra.mxu0 0.0
        %2607 = vmatprep.subr.mxu0 0.0
        %2608 = vmatpush2.msra.mxu0 0.0
        %2609 = vmatprep.subr.mxu0 0.0
        %2610 = vmatpush2.msra.mxu0 0.0
        %2611 = vmatprep.subr.mxu0 0.0
        %2612 = vmatpush2.msra.mxu0 0.0
        %2613 = vmatprep.subr.mxu0 0.0
        %2614 = vmatpush2.msra.mxu0 0.0
        %2615 = vmatprep.subr.mxu0 0.0
        %2616 = vmatpush2.msra.mxu0 0.0
        %2617 = vmatprep.subr.mxu0 0.0
        %2618 = vmatpush2.msra.mxu0 0.0
        %2619 = vmatprep.subr.mxu0 0.0
        %2620 = vmatpush2.msra.mxu0 0.0
        %2621 = vmatprep.subr.mxu0 0.0
        %2622 = vmatpush2.msra.mxu0 0.0
        %2623 = vmatprep.subr.mxu0 0.0
        %2624 = vmatpush2.msra.mxu0 0.0
        %2625 = vmatprep.subr.mxu0 0.0
        %2626 = vmatpush2.msra.mxu0 0.0
        %2627 = vmatprep.subr.mxu0 0.0
        %2628 = vmatpush2.msra.mxu0 0.0
        %2629 = vmatprep.subr.mxu0 0.0
        %2630 = vmatpush2.msra.mxu0 0.0
        %2631 = vmatprep.mubr.f32.mxu0 0.0
        %2632 = vmatmul.mubr.f32.gmra.mxu0 %v2094
        %v2633 = vpop.f32.mrf.mxu0
        %v2634 = vadd.f32 %v2489, %v2633
        %v2635 = vpop.f32.mrf.mxu0
        %2636 = vmatprep.mubr.f32.mxu0 0.0
        %2637 = vmatmul.mubr.f32.gmra.mxu0 %v2095
        %v2638 = vpop.f32.mrf.mxu0
        %v2639 = vadd.f32 %v2494, %v2638
        %v2640 = vpop.f32.mrf.mxu0
        %2641 = vmatprep.mubr.f32.mxu0 0.0
        %2642 = vmatmul.mubr.f32.gmra.mxu0 %v2096
        %v2643 = vpop.f32.mrf.mxu0
        %v2644 = vadd.f32 %v2499, %v2643
        %v2645 = vpop.f32.mrf.mxu0
        %2646 = vmatprep.mubr.f32.mxu0 0.0
        %2647 = vmatmul.mubr.f32.gmra.mxu0 %v2097
        %v2648 = vpop.f32.mrf.mxu0
        %v2649 = vadd.f32 %v2504, %v2648
        %v2650 = vpop.f32.mrf.mxu0
        %2651 = vmatprep.mubr.f32.mxu0 0.0
        %2652 = vmatmul.mubr.f32.gmra.mxu0 %v2098
        %v2653 = vpop.f32.mrf.mxu0
        %v2654 = vadd.f32 %v2509, %v2653
        %v2655 = vpop.f32.mrf.mxu0
        %2656 = vmatprep.mubr.f32.mxu0 0.0
        %2657 = vmatmul.mubr.f32.gmra.mxu0 %v2099
        %v2658 = vpop.f32.mrf.mxu0
        %v2659 = vadd.f32 %v2514, %v2658
        %v2660 = vpop.f32.mrf.mxu0
        %2661 = vmatprep.mubr.f32.mxu0 0.0
        %2662 = vmatmul.mubr.f32.gmra.mxu0 %v2100
        %v2663 = vpop.f32.mrf.mxu0
        %v2664 = vadd.f32 %v2519, %v2663
        %v2665 = vpop.f32.mrf.mxu0
        %2666 = vmatprep.mubr.f32.mxu0 0.0
        %2667 = vmatmul.mubr.f32.gmra.mxu0 %v2101
        %v2668 = vpop.f32.mrf.mxu0
        %v2669 = vadd.f32 %v2524, %v2668
        %v2670 = vpop.f32.mrf.mxu0
        %2671 = vmatprep.mubr.f32.mxu0 0.0
        %2672 = vmatmul.mubr.f32.gmra.mxu0 %v2102
        %v2673 = vpop.f32.mrf.mxu0
        %v2674 = vadd.f32 %v2529, %v2673
        %v2675 = vpop.f32.mrf.mxu0
        %2676 = vmatprep.mubr.f32.mxu0 0.0
        %2677 = vmatmul.mubr.f32.gmra.mxu0 %v2103
        %v2678 = vpop.f32.mrf.mxu0
        %v2679 = vadd.f32 %v2534, %v2678
        %v2680 = vpop.f32.mrf.mxu0
        %2681 = vmatprep.mubr.f32.mxu0 0.0
        %2682 = vmatmul.mubr.f32.gmra.mxu0 %v2104
        %v2683 = vpop.f32.mrf.mxu0
        %v2684 = vadd.f32 %v2539, %v2683
        %v2685 = vpop.f32.mrf.mxu0
        %2686 = vmatprep.mubr.f32.mxu0 0.0
        %2687 = vmatmul.mubr.f32.gmra.mxu0 %v2105
        %v2688 = vpop.f32.mrf.mxu0
        %v2689 = vadd.f32 %v2544, %v2688
        %v2690 = vpop.f32.mrf.mxu0
        %2691 = vmatprep.mubr.f32.mxu0 0.0
        %2692 = vmatmul.mubr.f32.gmra.mxu0 %v2106
        %v2693 = vpop.f32.mrf.mxu0
        %v2694 = vadd.f32 %v2549, %v2693
        %v2695 = vpop.f32.mrf.mxu0
        %2696 = vmatprep.mubr.f32.mxu0 0.0
        %2697 = vmatmul.mubr.f32.gmra.mxu0 %v2107
        %v2698 = vpop.f32.mrf.mxu0
        %v2699 = vadd.f32 %v2554, %v2698
        %v2700 = vpop.f32.mrf.mxu0
        %2701 = vmatprep.mubr.f32.mxu0 0.0
        %2702 = vmatmul.mubr.f32.gmra.mxu0 %v2108
        %v2703 = vpop.f32.mrf.mxu0
        %v2704 = vadd.f32 %v2559, %v2703
        %v2705 = vpop.f32.mrf.mxu0
        %2706 = vmatprep.mubr.f32.mxu0 0.0
        %2707 = vmatmul.mubr.f32.gmra.mxu0 %v2109
        %v2708 = vpop.f32.mrf.mxu0
        %v2709 = vadd.f32 %v2564, %v2708
        %v2710 = vpop.f32.mrf.mxu0
        %2711 = vdwg.mxu0
        %2712 = vmatprep.subr.mxu0 0.0
        %2713 = vmatpush1.msra.mxu0 %v2131
        %2714 = vmatprep.subr.mxu0 0.0
        %2715 = vmatpush1.msra.mxu0 %v2130
        %2716 = vmatprep.subr.mxu0 0.0
        %2717 = vmatpush1.msra.mxu0 %v2129
        %2718 = vmatprep.subr.mxu0 0.0
        %2719 = vmatpush1.msra.mxu0 %v2128
        %2720 = vmatprep.subr.mxu0 0.0
        %2721 = vmatpush1.msra.mxu0 %v2127
        %2722 = vmatprep.subr.mxu0 0.0
        %2723 = vmatpush1.msra.mxu0 %v2126
        %2724 = vmatprep.subr.mxu0 0.0
        %2725 = vmatpush1.msra.mxu0 %v2125
        %2726 = vmatprep.subr.mxu0 0.0
        %2727 = vmatpush1.msra.mxu0 %v2124
        %2728 = vmatprep.subr.mxu0 0.0
        %2729 = vmatpush1.msra.mxu0 %v2123
        %2730 = vmatprep.subr.mxu0 0.0
        %2731 = vmatpush1.msra.mxu0 %v2122
        %2732 = vmatprep.subr.mxu0 0.0
        %2733 = vmatpush1.msra.mxu0 %v2121
        %2734 = vmatprep.subr.mxu0 0.0
        %2735 = vmatpush1.msra.mxu0 %v2120
        %2736 = vmatprep.subr.mxu0 0.0
        %2737 = vmatpush1.msra.mxu0 %v2119
        %2738 = vmatprep.subr.mxu0 0.0
        %2739 = vmatpush1.msra.mxu0 %v2118
        %2740 = vmatprep.subr.mxu0 0.0
        %2741 = vmatpush1.msra.mxu0 %v2117
        %2742 = vmatprep.subr.mxu0 0.0
        %2743 = vmatpush1.msra.mxu0 %v2116
        %2744 = vmatprep.subr.mxu0 0.0
        %2745 = vmatpush2.msra.mxu0 %v2147
        %2746 = vmatprep.subr.mxu0 0.0
        %2747 = vmatpush2.msra.mxu0 %v2146
        %2748 = vmatprep.subr.mxu0 0.0
        %2749 = vmatpush2.msra.mxu0 %v2145
        %2750 = vmatprep.subr.mxu0 0.0
        %2751 = vmatpush2.msra.mxu0 %v2144
        %2752 = vmatprep.subr.mxu0 0.0
        %2753 = vmatpush2.msra.mxu0 %v2143
        %2754 = vmatprep.subr.mxu0 0.0
        %2755 = vmatpush2.msra.mxu0 %v2142
        %2756 = vmatprep.subr.mxu0 0.0
        %2757 = vmatpush2.msra.mxu0 %v2141
        %2758 = vmatprep.subr.mxu0 0.0
        %2759 = vmatpush2.msra.mxu0 %v2140
        %2760 = vmatprep.subr.mxu0 0.0
        %2761 = vmatpush2.msra.mxu0 %v2139
        %2762 = vmatprep.subr.mxu0 0.0
        %2763 = vmatpush2.msra.mxu0 %v2138
        %2764 = vmatprep.subr.mxu0 0.0
        %2765 = vmatpush2.msra.mxu0 %v2137
        %2766 = vmatprep.subr.mxu0 0.0
        %2767 = vmatpush2.msra.mxu0 %v2136
        %2768 = vmatprep.subr.mxu0 0.0
        %2769 = vmatpush2.msra.mxu0 %v2135
        %2770 = vmatprep.subr.mxu0 0.0
        %2771 = vmatpush2.msra.mxu0 %v2134
        %2772 = vmatprep.subr.mxu0 0.0
        %2773 = vmatpush2.msra.mxu0 %v2133
        %2774 = vmatprep.subr.mxu0 0.0
        %2775 = vmatpush2.msra.mxu0 %v2132
        %2776 = vmatprep.mubr.f32.mxu0 %v2020
        %2777 = vmatmul.mubr.f32.gmra.mxu0 %v1996
        %v2778 = vpop.f32.mrf.mxu0
        %v2779 = vadd.f32 %v2634, %v2778
        %v2780 = vpop.f32.mrf.mxu0
        %2781 = vmatprep.mubr.f32.mxu0 %v2021
        %2782 = vmatmul.mubr.f32.gmra.mxu0 %v1997
        %v2783 = vpop.f32.mrf.mxu0
        %v2784 = vadd.f32 %v2639, %v2783
        %v2785 = vpop.f32.mrf.mxu0
        %2786 = vmatprep.mubr.f32.mxu0 %v2022
        %2787 = vmatmul.mubr.f32.gmra.mxu0 %v1998
        %v2788 = vpop.f32.mrf.mxu0
        %v2789 = vadd.f32 %v2644, %v2788
        %v2790 = vpop.f32.mrf.mxu0
        %2791 = vmatprep.mubr.f32.mxu0 %v2023
        %2792 = vmatmul.mubr.f32.gmra.mxu0 %v1999
        %v2793 = vpop.f32.mrf.mxu0
        %v2794 = vadd.f32 %v2649, %v2793
        %v2795 = vpop.f32.mrf.mxu0
        %2796 = vmatprep.mubr.f32.mxu0 %v2024
        %2797 = vmatmul.mubr.f32.gmra.mxu0 %v2000
        %v2798 = vpop.f32.mrf.mxu0
        %v2799 = vadd.f32 %v2654, %v2798
        %v2800 = vpop.f32.mrf.mxu0
        %2801 = vmatprep.mubr.f32.mxu0 %v2025
        %2802 = vmatmul.mubr.f32.gmra.mxu0 %v2001
        %v2803 = vpop.f32.mrf.mxu0
        %v2804 = vadd.f32 %v2659, %v2803
        %v2805 = vpop.f32.mrf.mxu0
        %2806 = vmatprep.mubr.f32.mxu0 %v2026
        %2807 = vmatmul.mubr.f32.gmra.mxu0 %v2002
        %v2808 = vpop.f32.mrf.mxu0
        %v2809 = vadd.f32 %v2664, %v2808
        %v2810 = vpop.f32.mrf.mxu0
        %2811 = vmatprep.mubr.f32.mxu0 %v2027
        %2812 = vmatmul.mubr.f32.gmra.mxu0 %v2003
        %v2813 = vpop.f32.mrf.mxu0
        %v2814 = vadd.f32 %v2669, %v2813
        %v2815 = vpop.f32.mrf.mxu0
        %2816 = vmatprep.mubr.f32.mxu0 %v2028
        %2817 = vmatmul.mubr.f32.gmra.mxu0 %v2004
        %v2818 = vpop.f32.mrf.mxu0
        %v2819 = vadd.f32 %v2674, %v2818
        %v2820 = vpop.f32.mrf.mxu0
        %2821 = vmatprep.mubr.f32.mxu0 %v2029
        %2822 = vmatmul.mubr.f32.gmra.mxu0 %v2005
        %v2823 = vpop.f32.mrf.mxu0
        %v2824 = vadd.f32 %v2679, %v2823
        %v2825 = vpop.f32.mrf.mxu0
        %2826 = vmatprep.mubr.f32.mxu0 %v2030
        %2827 = vmatmul.mubr.f32.gmra.mxu0 %v2006
        %v2828 = vpop.f32.mrf.mxu0
        %v2829 = vadd.f32 %v2684, %v2828
        %v2830 = vpop.f32.mrf.mxu0
        %2831 = vmatprep.mubr.f32.mxu0 %v2031
        %2832 = vmatmul.mubr.f32.gmra.mxu0 %v2007
        %v2833 = vpop.f32.mrf.mxu0
        %v2834 = vadd.f32 %v2689, %v2833
        %v2835 = vpop.f32.mrf.mxu0
        %2836 = vmatprep.mubr.f32.mxu0 %v2032
        %2837 = vmatmul.mubr.f32.gmra.mxu0 %v2008
        %v2838 = vpop.f32.mrf.mxu0
        %v2839 = vadd.f32 %v2694, %v2838
        %v2840 = vpop.f32.mrf.mxu0
        %2841 = vmatprep.mubr.f32.mxu0 %v2033
        %2842 = vmatmul.mubr.f32.gmra.mxu0 %v2009
        %v2843 = vpop.f32.mrf.mxu0
        %v2844 = vadd.f32 %v2699, %v2843
        %v2845 = vpop.f32.mrf.mxu0
        %2846 = vmatprep.mubr.f32.mxu0 %v2034
        %2847 = vmatmul.mubr.f32.gmra.mxu0 %v2010
        %v2848 = vpop.f32.mrf.mxu0
        %v2849 = vadd.f32 %v2704, %v2848
        %v2850 = vpop.f32.mrf.mxu0
        %2851 = vmatprep.mubr.f32.mxu0 %v2035
        %2852 = vmatmul.mubr.f32.gmra.mxu0 %v2011
        %v2853 = vpop.f32.mrf.mxu0
        %v2854 = vadd.f32 %v2709, %v2853
        %v2855 = vpop.f32.mrf.mxu0
        %2856 = vdwg.mxu0
        %2857 = vmatprep.subr.mxu0 0.0
        %2858 = vmatpush1.msra.mxu0 %v2163
        %2859 = vmatprep.subr.mxu0 0.0
        %2860 = vmatpush1.msra.mxu0 %v2162
        %2861 = vmatprep.subr.mxu0 0.0
        %2862 = vmatpush1.msra.mxu0 %v2161
        %2863 = vmatprep.subr.mxu0 0.0
        %2864 = vmatpush1.msra.mxu0 %v2160
        %2865 = vmatprep.subr.mxu0 0.0
        %2866 = vmatpush1.msra.mxu0 %v2159
        %2867 = vmatprep.subr.mxu0 0.0
        %2868 = vmatpush1.msra.mxu0 %v2158
        %2869 = vmatprep.subr.mxu0 0.0
        %2870 = vmatpush1.msra.mxu0 %v2157
        %2871 = vmatprep.subr.mxu0 0.0
        %2872 = vmatpush1.msra.mxu0 %v2156
        %2873 = vmatprep.subr.mxu0 0.0
        %2874 = vmatpush1.msra.mxu0 %v2155
        %2875 = vmatprep.subr.mxu0 0.0
        %2876 = vmatpush1.msra.mxu0 %v2154
        %2877 = vmatprep.subr.mxu0 0.0
        %2878 = vmatpush1.msra.mxu0 %v2153
        %2879 = vmatprep.subr.mxu0 0.0
        %2880 = vmatpush1.msra.mxu0 %v2152
        %2881 = vmatprep.subr.mxu0 0.0
        %2882 = vmatpush1.msra.mxu0 %v2151
        %2883 = vmatprep.subr.mxu0 0.0
        %2884 = vmatpush1.msra.mxu0 %v2150
        %2885 = vmatprep.subr.mxu0 0.0
        %2886 = vmatpush1.msra.mxu0 %v2149
        %2887 = vmatprep.subr.mxu0 0.0
        %2888 = vmatpush1.msra.mxu0 %v2148
        %2889 = vmatprep.subr.mxu0 0.0
        %2890 = vmatpush2.msra.mxu0 %v2179
        %2891 = vmatprep.subr.mxu0 0.0
        %2892 = vmatpush2.msra.mxu0 %v2178
        %2893 = vmatprep.subr.mxu0 0.0
        %2894 = vmatpush2.msra.mxu0 %v2177
        %2895 = vmatprep.subr.mxu0 0.0
        %2896 = vmatpush2.msra.mxu0 %v2176
        %2897 = vmatprep.subr.mxu0 0.0
        %2898 = vmatpush2.msra.mxu0 %v2175
        %2899 = vmatprep.subr.mxu0 0.0
        %2900 = vmatpush2.msra.mxu0 %v2174
        %2901 = vmatprep.subr.mxu0 0.0
        %2902 = vmatpush2.msra.mxu0 %v2173
        %2903 = vmatprep.subr.mxu0 0.0
        %2904 = vmatpush2.msra.mxu0 %v2172
        %2905 = vmatprep.subr.mxu0 0.0
        %2906 = vmatpush2.msra.mxu0 %v2171
        %2907 = vmatprep.subr.mxu0 0.0
        %2908 = vmatpush2.msra.mxu0 %v2170
        %2909 = vmatprep.subr.mxu0 0.0
        %2910 = vmatpush2.msra.mxu0 %v2169
        %2911 = vmatprep.subr.mxu0 0.0
        %2912 = vmatpush2.msra.mxu0 %v2168
        %2913 = vmatprep.subr.mxu0 0.0
        %2914 = vmatpush2.msra.mxu0 %v2167
        %2915 = vmatprep.subr.mxu0 0.0
        %2916 = vmatpush2.msra.mxu0 %v2166
        %2917 = vmatprep.subr.mxu0 0.0
        %2918 = vmatpush2.msra.mxu0 %v2165
        %2919 = vmatprep.subr.mxu0 0.0
        %2920 = vmatpush2.msra.mxu0 %v2164
        %2921 = vmatprep.mubr.f32.mxu0 %v2068
        %2922 = vmatmul.mubr.f32.gmra.mxu0 %v2044
        %v2923 = vpop.f32.mrf.mxu0
        %v2924 = vadd.f32 %v2779, %v2923
        %v2925 = vpop.f32.mrf.mxu0
        %2926 = vmatprep.mubr.f32.mxu0 %v2069
        %2927 = vmatmul.mubr.f32.gmra.mxu0 %v2045
        %v2928 = vpop.f32.mrf.mxu0
        %v2929 = vadd.f32 %v2784, %v2928
        %v2930 = vpop.f32.mrf.mxu0
        %2931 = vmatprep.mubr.f32.mxu0 %v2070
        %2932 = vmatmul.mubr.f32.gmra.mxu0 %v2046
        %v2933 = vpop.f32.mrf.mxu0
        %v2934 = vadd.f32 %v2789, %v2933
        %v2935 = vpop.f32.mrf.mxu0
        %2936 = vmatprep.mubr.f32.mxu0 %v2071
        %2937 = vmatmul.mubr.f32.gmra.mxu0 %v2047
        %v2938 = vpop.f32.mrf.mxu0
        %v2939 = vadd.f32 %v2794, %v2938
        %v2940 = vpop.f32.mrf.mxu0
        %2941 = vmatprep.mubr.f32.mxu0 %v2072
        %2942 = vmatmul.mubr.f32.gmra.mxu0 %v2048
        %v2943 = vpop.f32.mrf.mxu0
        %v2944 = vadd.f32 %v2799, %v2943
        %v2945 = vpop.f32.mrf.mxu0
        %2946 = vmatprep.mubr.f32.mxu0 %v2073
        %2947 = vmatmul.mubr.f32.gmra.mxu0 %v2049
        %v2948 = vpop.f32.mrf.mxu0
        %v2949 = vadd.f32 %v2804, %v2948
        %v2950 = vpop.f32.mrf.mxu0
        %2951 = vmatprep.mubr.f32.mxu0 %v2074
        %2952 = vmatmul.mubr.f32.gmra.mxu0 %v2050
        %v2953 = vpop.f32.mrf.mxu0
        %v2954 = vadd.f32 %v2809, %v2953
        %v2955 = vpop.f32.mrf.mxu0
        %2956 = vmatprep.mubr.f32.mxu0 %v2075
        %2957 = vmatmul.mubr.f32.gmra.mxu0 %v2051
        %v2958 = vpop.f32.mrf.mxu0
        %v2959 = vadd.f32 %v2814, %v2958
        %v2960 = vpop.f32.mrf.mxu0
        %2961 = vmatprep.mubr.f32.mxu0 %v2076
        %2962 = vmatmul.mubr.f32.gmra.mxu0 %v2052
        %v2963 = vpop.f32.mrf.mxu0
        %v2964 = vadd.f32 %v2819, %v2963
        %v2965 = vpop.f32.mrf.mxu0
        %2966 = vmatprep.mubr.f32.mxu0 %v2077
        %2967 = vmatmul.mubr.f32.gmra.mxu0 %v2053
        %v2968 = vpop.f32.mrf.mxu0
        %v2969 = vadd.f32 %v2824, %v2968
        %v2970 = vpop.f32.mrf.mxu0
        %2971 = vmatprep.mubr.f32.mxu0 %v2078
        %2972 = vmatmul.mubr.f32.gmra.mxu0 %v2054
        %v2973 = vpop.f32.mrf.mxu0
        %v2974 = vadd.f32 %v2829, %v2973
        %v2975 = vpop.f32.mrf.mxu0
        %2976 = vmatprep.mubr.f32.mxu0 %v2079
        %2977 = vmatmul.mubr.f32.gmra.mxu0 %v2055
        %v2978 = vpop.f32.mrf.mxu0
        %v2979 = vadd.f32 %v2834, %v2978
        %v2980 = vpop.f32.mrf.mxu0
        %2981 = vmatprep.mubr.f32.mxu0 %v2080
        %2982 = vmatmul.mubr.f32.gmra.mxu0 %v2056
        %v2983 = vpop.f32.mrf.mxu0
        %v2984 = vadd.f32 %v2839, %v2983
        %v2985 = vpop.f32.mrf.mxu0
        %2986 = vmatprep.mubr.f32.mxu0 %v2081
        %2987 = vmatmul.mubr.f32.gmra.mxu0 %v2057
        %v2988 = vpop.f32.mrf.mxu0
        %v2989 = vadd.f32 %v2844, %v2988
        %v2990 = vpop.f32.mrf.mxu0
        %2991 = vmatprep.mubr.f32.mxu0 %v2082
        %2992 = vmatmul.mubr.f32.gmra.mxu0 %v2058
        %v2993 = vpop.f32.mrf.mxu0
        %v2994 = vadd.f32 %v2849, %v2993
        %v2995 = vpop.f32.mrf.mxu0
        %2996 = vmatprep.mubr.f32.mxu0 %v2083
        %2997 = vmatmul.mubr.f32.gmra.mxu0 %v2059
        %v2998 = vpop.f32.mrf.mxu0
        %v2999 = vadd.f32 %v2854, %v2998
        %v3000 = vpop.f32.mrf.mxu0
        %3001 = vdwg.mxu0
        %3002 = vmatprep.subr.mxu0 0.0
        %3003 = vmatpush1.msra.mxu0 %v2195
        %3004 = vmatprep.subr.mxu0 0.0
        %3005 = vmatpush1.msra.mxu0 %v2194
        %3006 = vmatprep.subr.mxu0 0.0
        %3007 = vmatpush1.msra.mxu0 %v2193
        %3008 = vmatprep.subr.mxu0 0.0
        %3009 = vmatpush1.msra.mxu0 %v2192
        %3010 = vmatprep.subr.mxu0 0.0
        %3011 = vmatpush1.msra.mxu0 %v2191
        %3012 = vmatprep.subr.mxu0 0.0
        %3013 = vmatpush1.msra.mxu0 %v2190
        %3014 = vmatprep.subr.mxu0 0.0
        %3015 = vmatpush1.msra.mxu0 %v2189
        %3016 = vmatprep.subr.mxu0 0.0
        %3017 = vmatpush1.msra.mxu0 %v2188
        %3018 = vmatprep.subr.mxu0 0.0
        %3019 = vmatpush1.msra.mxu0 %v2187
        %3020 = vmatprep.subr.mxu0 0.0
        %3021 = vmatpush1.msra.mxu0 %v2186
        %3022 = vmatprep.subr.mxu0 0.0
        %3023 = vmatpush1.msra.mxu0 %v2185
        %3024 = vmatprep.subr.mxu0 0.0
        %3025 = vmatpush1.msra.mxu0 %v2184
        %3026 = vmatprep.subr.mxu0 0.0
        %3027 = vmatpush1.msra.mxu0 %v2183
        %3028 = vmatprep.subr.mxu0 0.0
        %3029 = vmatpush1.msra.mxu0 %v2182
        %3030 = vmatprep.subr.mxu0 0.0
        %3031 = vmatpush1.msra.mxu0 %v2181
        %3032 = vmatprep.subr.mxu0 0.0
        %3033 = vmatpush1.msra.mxu0 %v2180
        %3034 = vmatprep.subr.mxu0 0.0
        %3035 = vmatpush2.msra.mxu0 0.0
        %3036 = vmatprep.subr.mxu0 0.0
        %3037 = vmatpush2.msra.mxu0 0.0
        %3038 = vmatprep.subr.mxu0 0.0
        %3039 = vmatpush2.msra.mxu0 0.0
        %3040 = vmatprep.subr.mxu0 0.0
        %3041 = vmatpush2.msra.mxu0 0.0
        %3042 = vmatprep.subr.mxu0 0.0
        %3043 = vmatpush2.msra.mxu0 0.0
        %3044 = vmatprep.subr.mxu0 0.0
        %3045 = vmatpush2.msra.mxu0 0.0
        %3046 = vmatprep.subr.mxu0 0.0
        %3047 = vmatpush2.msra.mxu0 0.0
        %3048 = vmatprep.subr.mxu0 0.0
        %3049 = vmatpush2.msra.mxu0 0.0
        %3050 = vmatprep.subr.mxu0 0.0
        %3051 = vmatpush2.msra.mxu0 0.0
        %3052 = vmatprep.subr.mxu0 0.0
        %3053 = vmatpush2.msra.mxu0 0.0
        %3054 = vmatprep.subr.mxu0 0.0
        %3055 = vmatpush2.msra.mxu0 0.0
        %3056 = vmatprep.subr.mxu0 0.0
        %3057 = vmatpush2.msra.mxu0 0.0
        %3058 = vmatprep.subr.mxu0 0.0
        %3059 = vmatpush2.msra.mxu0 0.0
        %3060 = vmatprep.subr.mxu0 0.0
        %3061 = vmatpush2.msra.mxu0 0.0
        %3062 = vmatprep.subr.mxu0 0.0
        %3063 = vmatpush2.msra.mxu0 0.0
        %3064 = vmatprep.subr.mxu0 0.0
        %3065 = vmatpush2.msra.mxu0 0.0
        %3066 = vmatprep.mubr.f32.mxu0 0.0
        %3067 = vmatmul.mubr.f32.gmra.mxu0 %v2092
        %v3068 = vpop.f32.mrf.mxu0
        %v3069 = vadd.f32 %v2924, %v3068
        %v3070 = vpop.f32.mrf.mxu0
        %3071 = vmatprep.mubr.f32.mxu0 0.0
        %3072 = vmatmul.mubr.f32.gmra.mxu0 %v2093
        %v3073 = vpop.f32.mrf.mxu0
        %v3074 = vadd.f32 %v2929, %v3073
        %v3075 = vpop.f32.mrf.mxu0
        %3076 = vmatprep.mubr.f32.mxu0 0.0
        %3077 = vmatmul.mubr.f32.gmra.mxu0 %v2094
        %v3078 = vpop.f32.mrf.mxu0
        %v3079 = vadd.f32 %v2934, %v3078
        %v3080 = vpop.f32.mrf.mxu0
        %3081 = vmatprep.mubr.f32.mxu0 0.0
        %3082 = vmatmul.mubr.f32.gmra.mxu0 %v2095
        %v3083 = vpop.f32.mrf.mxu0
        %v3084 = vadd.f32 %v2939, %v3083
        %v3085 = vpop.f32.mrf.mxu0
        %3086 = vmatprep.mubr.f32.mxu0 0.0
        %3087 = vmatmul.mubr.f32.gmra.mxu0 %v2096
        %v3088 = vpop.f32.mrf.mxu0
        %v3089 = vadd.f32 %v2944, %v3088
        %v3090 = vpop.f32.mrf.mxu0
        %3091 = vmatprep.mubr.f32.mxu0 0.0
        %3092 = vmatmul.mubr.f32.gmra.mxu0 %v2097
        %v3093 = vpop.f32.mrf.mxu0
        %v3094 = vadd.f32 %v2949, %v3093
        %v3095 = vpop.f32.mrf.mxu0
        %3096 = vmatprep.mubr.f32.mxu0 0.0
        %3097 = vmatmul.mubr.f32.gmra.mxu0 %v2098
        %v3098 = vpop.f32.mrf.mxu0
        %v3099 = vadd.f32 %v2954, %v3098
        %v3100 = vpop.f32.mrf.mxu0
        %3101 = vmatprep.mubr.f32.mxu0 0.0
        %3102 = vmatmul.mubr.f32.gmra.mxu0 %v2099
        %v3103 = vpop.f32.mrf.mxu0
        %v3104 = vadd.f32 %v2959, %v3103
        %v3105 = vpop.f32.mrf.mxu0
        %3106 = vmatprep.mubr.f32.mxu0 0.0
        %3107 = vmatmul.mubr.f32.gmra.mxu0 %v2100
        %v3108 = vpop.f32.mrf.mxu0
        %v3109 = vadd.f32 %v2964, %v3108
        %v3110 = vpop.f32.mrf.mxu0
        %3111 = vmatprep.mubr.f32.mxu0 0.0
        %3112 = vmatmul.mubr.f32.gmra.mxu0 %v2101
        %v3113 = vpop.f32.mrf.mxu0
        %v3114 = vadd.f32 %v2969, %v3113
        %v3115 = vpop.f32.mrf.mxu0
        %3116 = vmatprep.mubr.f32.mxu0 0.0
        %3117 = vmatmul.mubr.f32.gmra.mxu0 %v2102
        %v3118 = vpop.f32.mrf.mxu0
        %v3119 = vadd.f32 %v2974, %v3118
        %v3120 = vpop.f32.mrf.mxu0
        %3121 = vmatprep.mubr.f32.mxu0 0.0
        %3122 = vmatmul.mubr.f32.gmra.mxu0 %v2103
        %v3123 = vpop.f32.mrf.mxu0
        %v3124 = vadd.f32 %v2979, %v3123
        %v3125 = vpop.f32.mrf.mxu0
        %3126 = vmatprep.mubr.f32.mxu0 0.0
        %3127 = vmatmul.mubr.f32.gmra.mxu0 %v2104
        %v3128 = vpop.f32.mrf.mxu0
        %v3129 = vadd.f32 %v2984, %v3128
        %v3130 = vpop.f32.mrf.mxu0
        %3131 = vmatprep.mubr.f32.mxu0 0.0
        %3132 = vmatmul.mubr.f32.gmra.mxu0 %v2105
        %v3133 = vpop.f32.mrf.mxu0
        %v3134 = vadd.f32 %v2989, %v3133
        %v3135 = vpop.f32.mrf.mxu0
        %3136 = vmatprep.mubr.f32.mxu0 0.0
        %3137 = vmatmul.mubr.f32.gmra.mxu0 %v2106
        %v3138 = vpop.f32.mrf.mxu0
        %v3139 = vadd.f32 %v2994, %v3138
        %v3140 = vpop.f32.mrf.mxu0
        %3141 = vmatprep.mubr.f32.mxu0 0.0
        %3142 = vmatmul.mubr.f32.gmra.mxu0 %v2107
        %v3143 = vpop.f32.mrf.mxu0
        %v3144 = vadd.f32 %v2999, %v3143
        %v3145 = vpop.f32.mrf.mxu0
        %3146 = vdwg.mxu0
        %s3147 = scalar_lea.vmem [#allocation6], 1280
        %v3148 = vld [vmem:[%s3147] sm:$0xff]
        %v3149 = vld [vmem:[%s3147 + $0x8] sm:$0xff]
        %v3150 = vld [vmem:[%s3147 + $0x10] sm:$0xff]
        %v3151 = vld [vmem:[%s3147 + $0x18] sm:$0xff]
        %v3152 = vld [vmem:[%s3147 + $0x20] sm:$0xff]
        %v3153 = vld [vmem:[%s3147 + $0x28] sm:$0xff]
        %v3154 = vld [vmem:[%s3147 + $0x30] sm:$0xff]
        %v3155 = vld [vmem:[%s3147 + $0x38] sm:$0xff]
        %v3156 = vld [vmem:[%s3147 + $0x40] sm:$0xff]
        %v3157 = vld [vmem:[%s3147 + $0x48] sm:$0xff]
        %v3158 = vld [vmem:[%s3147 + $0x50] sm:$0xff]
        %v3159 = vld [vmem:[%s3147 + $0x58] sm:$0xff]
        %v3160 = vld [vmem:[%s3147 + $0x60] sm:$0xff]
        %v3161 = vld [vmem:[%s3147 + $0x68] sm:$0xff]
        %v3162 = vld [vmem:[%s3147 + $0x70] sm:$0xff]
        %v3163 = vld [vmem:[%s3147 + $0x78] sm:$0xff]
        %v3164 = vld [vmem:[%s3147 + $0x80] sm:$0xff]
        %v3165 = vld [vmem:[%s3147 + $0x88] sm:$0xff]
        %v3166 = vld [vmem:[%s3147 + $0x90] sm:$0xff]
        %v3167 = vld [vmem:[%s3147 + $0x98] sm:$0xff]
        %v3168 = vld [vmem:[%s3147 + $0xa0] sm:$0xff]
        %v3169 = vld [vmem:[%s3147 + $0xa8] sm:$0xff]
        %v3170 = vld [vmem:[%s3147 + $0xb0] sm:$0xff]
        %v3171 = vld [vmem:[%s3147 + $0xb8] sm:$0xff]
        %v3172 = vld [vmem:[%s3147 + $0xc0] sm:$0xff]
        %v3173 = vld [vmem:[%s3147 + $0xc8] sm:$0xff]
        %v3174 = vld [vmem:[%s3147 + $0xd0] sm:$0xff]
        %v3175 = vld [vmem:[%s3147 + $0xd8] sm:$0xff]
        %v3176 = vld [vmem:[%s3147 + $0xe0] sm:$0xff]
        %v3177 = vld [vmem:[%s3147 + $0xe8] sm:$0xff]
        %v3178 = vld [vmem:[%s3147 + $0xf0] sm:$0xff]
        %v3179 = vld [vmem:[%s3147 + $0xf8] sm:$0xff]
        %v3180 = vld [vmem:[%s3147 + $0x100] sm:$0xff]
        %v3181 = vld [vmem:[%s3147 + $0x108] sm:$0xff]
        %v3182 = vld [vmem:[%s3147 + $0x110] sm:$0xff]
        %v3183 = vld [vmem:[%s3147 + $0x118] sm:$0xff]
        %v3184 = vld [vmem:[%s3147 + $0x120] sm:$0xff]
        %v3185 = vld [vmem:[%s3147 + $0x128] sm:$0xff]
        %v3186 = vld [vmem:[%s3147 + $0x130] sm:$0xff]
        %v3187 = vld [vmem:[%s3147 + $0x138] sm:$0xff]
        %v3188 = vld [vmem:[%s3147 + $0x140] sm:$0xff]
        %v3189 = vld [vmem:[%s3147 + $0x148] sm:$0xff]
        %v3190 = vld [vmem:[%s3147 + $0x150] sm:$0xff]
        %v3191 = vld [vmem:[%s3147 + $0x158] sm:$0xff]
        %v3192 = vld [vmem:[%s3147 + $0x160] sm:$0xff]
        %v3193 = vld [vmem:[%s3147 + $0x168] sm:$0xff]
        %v3194 = vld [vmem:[%s3147 + $0x170] sm:$0xff]
        %v3195 = vld [vmem:[%s3147 + $0x178] sm:$0xff]
        %v3196 = vld [vmem:[%s3147 + $0x180] sm:$0xff]
        %v3197 = vld [vmem:[%s3147 + $0x188] sm:$0xff]
        %v3198 = vld [vmem:[%s3147 + $0x190] sm:$0xff]
        %v3199 = vld [vmem:[%s3147 + $0x198] sm:$0xff]
        %v3200 = vld [vmem:[%s3147 + $0x1a0] sm:$0xff]
        %v3201 = vld [vmem:[%s3147 + $0x1a8] sm:$0xff]
        %v3202 = vld [vmem:[%s3147 + $0x1b0] sm:$0xff]
        %v3203 = vld [vmem:[%s3147 + $0x1b8] sm:$0xff]
        %v3204 = vld [vmem:[%s3147 + $0x1c0] sm:$0xff]
        %v3205 = vld [vmem:[%s3147 + $0x1c8] sm:$0xff]
        %v3206 = vld [vmem:[%s3147 + $0x1d0] sm:$0xff]
        %v3207 = vld [vmem:[%s3147 + $0x1d8] sm:$0xff]
        %v3208 = vld [vmem:[%s3147 + $0x1e0] sm:$0xff]
        %v3209 = vld [vmem:[%s3147 + $0x1e8] sm:$0xff]
        %v3210 = vld [vmem:[%s3147 + $0x1f0] sm:$0xff]
        %v3211 = vld [vmem:[%s3147 + $0x1f8] sm:$0xff]
        %v3212 = vld [vmem:[%s3147 + $0x200] sm:$0xff]
        %v3213 = vld [vmem:[%s3147 + $0x208] sm:$0xff]
        %v3214 = vld [vmem:[%s3147 + $0x210] sm:$0xff]
        %v3215 = vld [vmem:[%s3147 + $0x218] sm:$0xff]
        %v3216 = vld [vmem:[%s3147 + $0x220] sm:$0xff]
        %v3217 = vld [vmem:[%s3147 + $0x228] sm:$0xff]
        %v3218 = vld [vmem:[%s3147 + $0x230] sm:$0xff]
        %v3219 = vld [vmem:[%s3147 + $0x238] sm:$0xff]
        %v3220 = vld [vmem:[%s3147 + $0x240] sm:$0xff]
        %v3221 = vld [vmem:[%s3147 + $0x248] sm:$0xff]
        %v3222 = vld [vmem:[%s3147 + $0x250] sm:$0xff]
        %v3223 = vld [vmem:[%s3147 + $0x258] sm:$0xff]
        %v3224 = vld [vmem:[%s3147 + $0x260] sm:$0xff]
        %v3225 = vld [vmem:[%s3147 + $0x268] sm:$0xff]
        %v3226 = vld [vmem:[%s3147 + $0x270] sm:$0xff]
        %v3227 = vld [vmem:[%s3147 + $0x278] sm:$0xff]
        %3228 = vmatprep.subr.mxu0 0.0
        %3229 = vmatpush1.msra.mxu0 %v3163
        %3230 = vmatprep.subr.mxu0 0.0
        %3231 = vmatpush1.msra.mxu0 %v3162
        %3232 = vmatprep.subr.mxu0 0.0
        %3233 = vmatpush1.msra.mxu0 %v3161
        %3234 = vmatprep.subr.mxu0 0.0
        %3235 = vmatpush1.msra.mxu0 %v3160
        %3236 = vmatprep.subr.mxu0 0.0
        %3237 = vmatpush1.msra.mxu0 %v3159
        %3238 = vmatprep.subr.mxu0 0.0
        %3239 = vmatpush1.msra.mxu0 %v3158
        %3240 = vmatprep.subr.mxu0 0.0
        %3241 = vmatpush1.msra.mxu0 %v3157
        %3242 = vmatprep.subr.mxu0 0.0
        %3243 = vmatpush1.msra.mxu0 %v3156
        %3244 = vmatprep.subr.mxu0 0.0
        %3245 = vmatpush1.msra.mxu0 %v3155
        %3246 = vmatprep.subr.mxu0 0.0
        %3247 = vmatpush1.msra.mxu0 %v3154
        %3248 = vmatprep.subr.mxu0 0.0
        %3249 = vmatpush1.msra.mxu0 %v3153
        %3250 = vmatprep.subr.mxu0 0.0
        %3251 = vmatpush1.msra.mxu0 %v3152
        %3252 = vmatprep.subr.mxu0 0.0
        %3253 = vmatpush1.msra.mxu0 %v3151
        %3254 = vmatprep.subr.mxu0 0.0
        %3255 = vmatpush1.msra.mxu0 %v3150
        %3256 = vmatprep.subr.mxu0 0.0
        %3257 = vmatpush1.msra.mxu0 %v3149
        %3258 = vmatprep.subr.mxu0 0.0
        %3259 = vmatpush1.msra.mxu0 %v3148
        %3260 = vmatprep.subr.mxu0 0.0
        %3261 = vmatpush2.msra.mxu0 %v3179
        %3262 = vmatprep.subr.mxu0 0.0
        %3263 = vmatpush2.msra.mxu0 %v3178
        %3264 = vmatprep.subr.mxu0 0.0
        %3265 = vmatpush2.msra.mxu0 %v3177
        %3266 = vmatprep.subr.mxu0 0.0
        %3267 = vmatpush2.msra.mxu0 %v3176
        %3268 = vmatprep.subr.mxu0 0.0
        %3269 = vmatpush2.msra.mxu0 %v3175
        %3270 = vmatprep.subr.mxu0 0.0
        %3271 = vmatpush2.msra.mxu0 %v3174
        %3272 = vmatprep.subr.mxu0 0.0
        %3273 = vmatpush2.msra.mxu0 %v3173
        %3274 = vmatprep.subr.mxu0 0.0
        %3275 = vmatpush2.msra.mxu0 %v3172
        %3276 = vmatprep.subr.mxu0 0.0
        %3277 = vmatpush2.msra.mxu0 %v3171
        %3278 = vmatprep.subr.mxu0 0.0
        %3279 = vmatpush2.msra.mxu0 %v3170
        %3280 = vmatprep.subr.mxu0 0.0
        %3281 = vmatpush2.msra.mxu0 %v3169
        %3282 = vmatprep.subr.mxu0 0.0
        %3283 = vmatpush2.msra.mxu0 %v3168
        %3284 = vmatprep.subr.mxu0 0.0
        %3285 = vmatpush2.msra.mxu0 %v3167
        %3286 = vmatprep.subr.mxu0 0.0
        %3287 = vmatpush2.msra.mxu0 %v3166
        %3288 = vmatprep.subr.mxu0 0.0
        %3289 = vmatpush2.msra.mxu0 %v3165
        %3290 = vmatprep.subr.mxu0 0.0
        %3291 = vmatpush2.msra.mxu0 %v3164
        %3292 = vmatprep.mubr.f32.mxu0 %v2024
        %3293 = vmatmul.mubr.f32.gmra.mxu0 %v2000
        %v3294 = vpop.f32.mrf.mxu0
        %v3295 = vadd.f32 0.0, %v3294
        %v3296 = vpop.f32.mrf.mxu0
        %3297 = vmatprep.mubr.f32.mxu0 %v2025
        %3298 = vmatmul.mubr.f32.gmra.mxu0 %v2001
        %v3299 = vpop.f32.mrf.mxu0
        %v3300 = vadd.f32 0.0, %v3299
        %v3301 = vpop.f32.mrf.mxu0
        %3302 = vmatprep.mubr.f32.mxu0 %v2026
        %3303 = vmatmul.mubr.f32.gmra.mxu0 %v2002
        %v3304 = vpop.f32.mrf.mxu0
        %v3305 = vadd.f32 0.0, %v3304
        %v3306 = vpop.f32.mrf.mxu0
        %3307 = vmatprep.mubr.f32.mxu0 %v2027
        %3308 = vmatmul.mubr.f32.gmra.mxu0 %v2003
        %v3309 = vpop.f32.mrf.mxu0
        %v3310 = vadd.f32 0.0, %v3309
        %v3311 = vpop.f32.mrf.mxu0
        %3312 = vmatprep.mubr.f32.mxu0 %v2028
        %3313 = vmatmul.mubr.f32.gmra.mxu0 %v2004
        %v3314 = vpop.f32.mrf.mxu0
        %v3315 = vadd.f32 0.0, %v3314
        %v3316 = vpop.f32.mrf.mxu0
        %3317 = vmatprep.mubr.f32.mxu0 %v2029
        %3318 = vmatmul.mubr.f32.gmra.mxu0 %v2005
        %v3319 = vpop.f32.mrf.mxu0
        %v3320 = vadd.f32 0.0, %v3319
        %v3321 = vpop.f32.mrf.mxu0
        %3322 = vmatprep.mubr.f32.mxu0 %v2030
        %3323 = vmatmul.mubr.f32.gmra.mxu0 %v2006
        %v3324 = vpop.f32.mrf.mxu0
        %v3325 = vadd.f32 0.0, %v3324
        %v3326 = vpop.f32.mrf.mxu0
        %3327 = vmatprep.mubr.f32.mxu0 %v2031
        %3328 = vmatmul.mubr.f32.gmra.mxu0 %v2007
        %v3329 = vpop.f32.mrf.mxu0
        %v3330 = vadd.f32 0.0, %v3329
        %v3331 = vpop.f32.mrf.mxu0
        %3332 = vmatprep.mubr.f32.mxu0 %v2032
        %3333 = vmatmul.mubr.f32.gmra.mxu0 %v2008
        %v3334 = vpop.f32.mrf.mxu0
        %v3335 = vadd.f32 0.0, %v3334
        %v3336 = vpop.f32.mrf.mxu0
        %3337 = vmatprep.mubr.f32.mxu0 %v2033
        %3338 = vmatmul.mubr.f32.gmra.mxu0 %v2009
        %v3339 = vpop.f32.mrf.mxu0
        %v3340 = vadd.f32 0.0, %v3339
        %v3341 = vpop.f32.mrf.mxu0
        %3342 = vmatprep.mubr.f32.mxu0 %v2034
        %3343 = vmatmul.mubr.f32.gmra.mxu0 %v2010
        %v3344 = vpop.f32.mrf.mxu0
        %v3345 = vadd.f32 0.0, %v3344
        %v3346 = vpop.f32.mrf.mxu0
        %3347 = vmatprep.mubr.f32.mxu0 %v2035
        %3348 = vmatmul.mubr.f32.gmra.mxu0 %v2011
        %v3349 = vpop.f32.mrf.mxu0
        %v3350 = vadd.f32 0.0, %v3349
        %v3351 = vpop.f32.mrf.mxu0
        %3352 = vmatprep.mubr.f32.mxu0 %v2036
        %3353 = vmatmul.mubr.f32.gmra.mxu0 %v2012
        %v3354 = vpop.f32.mrf.mxu0
        %v3355 = vadd.f32 0.0, %v3354
        %v3356 = vpop.f32.mrf.mxu0
        %3357 = vmatprep.mubr.f32.mxu0 %v2037
        %3358 = vmatmul.mubr.f32.gmra.mxu0 %v2013
        %v3359 = vpop.f32.mrf.mxu0
        %v3360 = vadd.f32 0.0, %v3359
        %v3361 = vpop.f32.mrf.mxu0
        %3362 = vmatprep.mubr.f32.mxu0 %v2038
        %3363 = vmatmul.mubr.f32.gmra.mxu0 %v2014
        %v3364 = vpop.f32.mrf.mxu0
        %v3365 = vadd.f32 0.0, %v3364
        %v3366 = vpop.f32.mrf.mxu0
        %3367 = vmatprep.mubr.f32.mxu0 %v2039
        %3368 = vmatmul.mubr.f32.gmra.mxu0 %v2015
        %v3369 = vpop.f32.mrf.mxu0
        %v3370 = vadd.f32 0.0, %v3369
        %v3371 = vpop.f32.mrf.mxu0
        %3372 = vdwg.mxu0
        %3373 = vmatprep.subr.mxu0 0.0
        %3374 = vmatpush1.msra.mxu0 %v3195
        %3375 = vmatprep.subr.mxu0 0.0
        %3376 = vmatpush1.msra.mxu0 %v3194
        %3377 = vmatprep.subr.mxu0 0.0
        %3378 = vmatpush1.msra.mxu0 %v3193
        %3379 = vmatprep.subr.mxu0 0.0
        %3380 = vmatpush1.msra.mxu0 %v3192
        %3381 = vmatprep.subr.mxu0 0.0
        %3382 = vmatpush1.msra.mxu0 %v3191
        %3383 = vmatprep.subr.mxu0 0.0
        %3384 = vmatpush1.msra.mxu0 %v3190
        %3385 = vmatprep.subr.mxu0 0.0
        %3386 = vmatpush1.msra.mxu0 %v3189
        %3387 = vmatprep.subr.mxu0 0.0
        %3388 = vmatpush1.msra.mxu0 %v3188
        %3389 = vmatprep.subr.mxu0 0.0
        %3390 = vmatpush1.msra.mxu0 %v3187
        %3391 = vmatprep.subr.mxu0 0.0
        %3392 = vmatpush1.msra.mxu0 %v3186
        %3393 = vmatprep.subr.mxu0 0.0
        %3394 = vmatpush1.msra.mxu0 %v3185
        %3395 = vmatprep.subr.mxu0 0.0
        %3396 = vmatpush1.msra.mxu0 %v3184
        %3397 = vmatprep.subr.mxu0 0.0
        %3398 = vmatpush1.msra.mxu0 %v3183
        %3399 = vmatprep.subr.mxu0 0.0
        %3400 = vmatpush1.msra.mxu0 %v3182
        %3401 = vmatprep.subr.mxu0 0.0
        %3402 = vmatpush1.msra.mxu0 %v3181
        %3403 = vmatprep.subr.mxu0 0.0
        %3404 = vmatpush1.msra.mxu0 %v3180
        %3405 = vmatprep.subr.mxu0 0.0
        %3406 = vmatpush2.msra.mxu0 %v3211
        %3407 = vmatprep.subr.mxu0 0.0
        %3408 = vmatpush2.msra.mxu0 %v3210
        %3409 = vmatprep.subr.mxu0 0.0
        %3410 = vmatpush2.msra.mxu0 %v3209
        %3411 = vmatprep.subr.mxu0 0.0
        %3412 = vmatpush2.msra.mxu0 %v3208
        %3413 = vmatprep.subr.mxu0 0.0
        %3414 = vmatpush2.msra.mxu0 %v3207
        %3415 = vmatprep.subr.mxu0 0.0
        %3416 = vmatpush2.msra.mxu0 %v3206
        %3417 = vmatprep.subr.mxu0 0.0
        %3418 = vmatpush2.msra.mxu0 %v3205
        %3419 = vmatprep.subr.mxu0 0.0
        %3420 = vmatpush2.msra.mxu0 %v3204
        %3421 = vmatprep.subr.mxu0 0.0
        %3422 = vmatpush2.msra.mxu0 %v3203
        %3423 = vmatprep.subr.mxu0 0.0
        %3424 = vmatpush2.msra.mxu0 %v3202
        %3425 = vmatprep.subr.mxu0 0.0
        %3426 = vmatpush2.msra.mxu0 %v3201
        %3427 = vmatprep.subr.mxu0 0.0
        %3428 = vmatpush2.msra.mxu0 %v3200
        %3429 = vmatprep.subr.mxu0 0.0
        %3430 = vmatpush2.msra.mxu0 %v3199
        %3431 = vmatprep.subr.mxu0 0.0
        %3432 = vmatpush2.msra.mxu0 %v3198
        %3433 = vmatprep.subr.mxu0 0.0
        %3434 = vmatpush2.msra.mxu0 %v3197
        %3435 = vmatprep.subr.mxu0 0.0
        %3436 = vmatpush2.msra.mxu0 %v3196
        %3437 = vmatprep.mubr.f32.mxu0 %v2072
        %3438 = vmatmul.mubr.f32.gmra.mxu0 %v2048
        %v3439 = vpop.f32.mrf.mxu0
        %v3440 = vadd.f32 %v3295, %v3439
        %v3441 = vpop.f32.mrf.mxu0
        %3442 = vmatprep.mubr.f32.mxu0 %v2073
        %3443 = vmatmul.mubr.f32.gmra.mxu0 %v2049
        %v3444 = vpop.f32.mrf.mxu0
        %v3445 = vadd.f32 %v3300, %v3444
        %v3446 = vpop.f32.mrf.mxu0
        %3447 = vmatprep.mubr.f32.mxu0 %v2074
        %3448 = vmatmul.mubr.f32.gmra.mxu0 %v2050
        %v3449 = vpop.f32.mrf.mxu0
        %v3450 = vadd.f32 %v3305, %v3449
        %v3451 = vpop.f32.mrf.mxu0
        %3452 = vmatprep.mubr.f32.mxu0 %v2075
        %3453 = vmatmul.mubr.f32.gmra.mxu0 %v2051
        %v3454 = vpop.f32.mrf.mxu0
        %v3455 = vadd.f32 %v3310, %v3454
        %v3456 = vpop.f32.mrf.mxu0
        %3457 = vmatprep.mubr.f32.mxu0 %v2076
        %3458 = vmatmul.mubr.f32.gmra.mxu0 %v2052
        %v3459 = vpop.f32.mrf.mxu0
        %v3460 = vadd.f32 %v3315, %v3459
        %v3461 = vpop.f32.mrf.mxu0
        %3462 = vmatprep.mubr.f32.mxu0 %v2077
        %3463 = vmatmul.mubr.f32.gmra.mxu0 %v2053
        %v3464 = vpop.f32.mrf.mxu0
        %v3465 = vadd.f32 %v3320, %v3464
        %v3466 = vpop.f32.mrf.mxu0
        %3467 = vmatprep.mubr.f32.mxu0 %v2078
        %3468 = vmatmul.mubr.f32.gmra.mxu0 %v2054
        %v3469 = vpop.f32.mrf.mxu0
        %v3470 = vadd.f32 %v3325, %v3469
        %v3471 = vpop.f32.mrf.mxu0
        %3472 = vmatprep.mubr.f32.mxu0 %v2079
        %3473 = vmatmul.mubr.f32.gmra.mxu0 %v2055
        %v3474 = vpop.f32.mrf.mxu0
        %v3475 = vadd.f32 %v3330, %v3474
        %v3476 = vpop.f32.mrf.mxu0
        %3477 = vmatprep.mubr.f32.mxu0 %v2080
        %3478 = vmatmul.mubr.f32.gmra.mxu0 %v2056
        %v3479 = vpop.f32.mrf.mxu0
        %v3480 = vadd.f32 %v3335, %v3479
        %v3481 = vpop.f32.mrf.mxu0
        %3482 = vmatprep.mubr.f32.mxu0 %v2081
        %3483 = vmatmul.mubr.f32.gmra.mxu0 %v2057
        %v3484 = vpop.f32.mrf.mxu0
        %v3485 = vadd.f32 %v3340, %v3484
        %v3486 = vpop.f32.mrf.mxu0
        %3487 = vmatprep.mubr.f32.mxu0 %v2082
        %3488 = vmatmul.mubr.f32.gmra.mxu0 %v2058
        %v3489 = vpop.f32.mrf.mxu0
        %v3490 = vadd.f32 %v3345, %v3489
        %v3491 = vpop.f32.mrf.mxu0
        %3492 = vmatprep.mubr.f32.mxu0 %v2083
        %3493 = vmatmul.mubr.f32.gmra.mxu0 %v2059
        %v3494 = vpop.f32.mrf.mxu0
        %v3495 = vadd.f32 %v3350, %v3494
        %v3496 = vpop.f32.mrf.mxu0
        %3497 = vmatprep.mubr.f32.mxu0 %v2084
        %3498 = vmatmul.mubr.f32.gmra.mxu0 %v2060
        %v3499 = vpop.f32.mrf.mxu0
        %v3500 = vadd.f32 %v3355, %v3499
        %v3501 = vpop.f32.mrf.mxu0
        %3502 = vmatprep.mubr.f32.mxu0 %v2085
        %3503 = vmatmul.mubr.f32.gmra.mxu0 %v2061
        %v3504 = vpop.f32.mrf.mxu0
        %v3505 = vadd.f32 %v3360, %v3504
        %v3506 = vpop.f32.mrf.mxu0
        %3507 = vmatprep.mubr.f32.mxu0 %v2086
        %3508 = vmatmul.mubr.f32.gmra.mxu0 %v2062
        %v3509 = vpop.f32.mrf.mxu0
        %v3510 = vadd.f32 %v3365, %v3509
        %v3511 = vpop.f32.mrf.mxu0
        %3512 = vmatprep.mubr.f32.mxu0 %v2087
        %3513 = vmatmul.mubr.f32.gmra.mxu0 %v2063
        %v3514 = vpop.f32.mrf.mxu0
        %v3515 = vadd.f32 %v3370, %v3514
        %v3516 = vpop.f32.mrf.mxu0
        %3517 = vdwg.mxu0
        %3518 = vmatprep.subr.mxu0 0.0
        %3519 = vmatpush1.msra.mxu0 %v3227
        %3520 = vmatprep.subr.mxu0 0.0
        %3521 = vmatpush1.msra.mxu0 %v3226
        %3522 = vmatprep.subr.mxu0 0.0
        %3523 = vmatpush1.msra.mxu0 %v3225
        %3524 = vmatprep.subr.mxu0 0.0
        %3525 = vmatpush1.msra.mxu0 %v3224
        %3526 = vmatprep.subr.mxu0 0.0
        %3527 = vmatpush1.msra.mxu0 %v3223
        %3528 = vmatprep.subr.mxu0 0.0
        %3529 = vmatpush1.msra.mxu0 %v3222
        %3530 = vmatprep.subr.mxu0 0.0
        %3531 = vmatpush1.msra.mxu0 %v3221
        %3532 = vmatprep.subr.mxu0 0.0
        %3533 = vmatpush1.msra.mxu0 %v3220
        %3534 = vmatprep.subr.mxu0 0.0
        %3535 = vmatpush1.msra.mxu0 %v3219
        %3536 = vmatprep.subr.mxu0 0.0
        %3537 = vmatpush1.msra.mxu0 %v3218
        %3538 = vmatprep.subr.mxu0 0.0
        %3539 = vmatpush1.msra.mxu0 %v3217
        %3540 = vmatprep.subr.mxu0 0.0
        %3541 = vmatpush1.msra.mxu0 %v3216
        %3542 = vmatprep.subr.mxu0 0.0
        %3543 = vmatpush1.msra.mxu0 %v3215
        %3544 = vmatprep.subr.mxu0 0.0
        %3545 = vmatpush1.msra.mxu0 %v3214
        %3546 = vmatprep.subr.mxu0 0.0
        %3547 = vmatpush1.msra.mxu0 %v3213
        %3548 = vmatprep.subr.mxu0 0.0
        %3549 = vmatpush1.msra.mxu0 %v3212
        %3550 = vmatprep.subr.mxu0 0.0
        %3551 = vmatpush2.msra.mxu0 0.0
        %3552 = vmatprep.subr.mxu0 0.0
        %3553 = vmatpush2.msra.mxu0 0.0
        %3554 = vmatprep.subr.mxu0 0.0
        %3555 = vmatpush2.msra.mxu0 0.0
        %3556 = vmatprep.subr.mxu0 0.0
        %3557 = vmatpush2.msra.mxu0 0.0
        %3558 = vmatprep.subr.mxu0 0.0
        %3559 = vmatpush2.msra.mxu0 0.0
        %3560 = vmatprep.subr.mxu0 0.0
        %3561 = vmatpush2.msra.mxu0 0.0
        %3562 = vmatprep.subr.mxu0 0.0
        %3563 = vmatpush2.msra.mxu0 0.0
        %3564 = vmatprep.subr.mxu0 0.0
        %3565 = vmatpush2.msra.mxu0 0.0
        %3566 = vmatprep.subr.mxu0 0.0
        %3567 = vmatpush2.msra.mxu0 0.0
        %3568 = vmatprep.subr.mxu0 0.0
        %3569 = vmatpush2.msra.mxu0 0.0
        %3570 = vmatprep.subr.mxu0 0.0
        %3571 = vmatpush2.msra.mxu0 0.0
        %3572 = vmatprep.subr.mxu0 0.0
        %3573 = vmatpush2.msra.mxu0 0.0
        %3574 = vmatprep.subr.mxu0 0.0
        %3575 = vmatpush2.msra.mxu0 0.0
        %3576 = vmatprep.subr.mxu0 0.0
        %3577 = vmatpush2.msra.mxu0 0.0
        %3578 = vmatprep.subr.mxu0 0.0
        %3579 = vmatpush2.msra.mxu0 0.0
        %3580 = vmatprep.subr.mxu0 0.0
        %3581 = vmatpush2.msra.mxu0 0.0
        %3582 = vmatprep.mubr.f32.mxu0 0.0
        %3583 = vmatmul.mubr.f32.gmra.mxu0 %v2096
        %v3584 = vpop.f32.mrf.mxu0
        %v3585 = vadd.f32 %v3440, %v3584
        %v3586 = vpop.f32.mrf.mxu0
        %3587 = vmatprep.mubr.f32.mxu0 0.0
        %3588 = vmatmul.mubr.f32.gmra.mxu0 %v2097
        %v3589 = vpop.f32.mrf.mxu0
        %v3590 = vadd.f32 %v3445, %v3589
        %v3591 = vpop.f32.mrf.mxu0
        %3592 = vmatprep.mubr.f32.mxu0 0.0
        %3593 = vmatmul.mubr.f32.gmra.mxu0 %v2098
        %v3594 = vpop.f32.mrf.mxu0
        %v3595 = vadd.f32 %v3450, %v3594
        %v3596 = vpop.f32.mrf.mxu0
        %3597 = vmatprep.mubr.f32.mxu0 0.0
        %3598 = vmatmul.mubr.f32.gmra.mxu0 %v2099
        %v3599 = vpop.f32.mrf.mxu0
        %v3600 = vadd.f32 %v3455, %v3599
        %v3601 = vpop.f32.mrf.mxu0
        %3602 = vmatprep.mubr.f32.mxu0 0.0
        %3603 = vmatmul.mubr.f32.gmra.mxu0 %v2100
        %v3604 = vpop.f32.mrf.mxu0
        %v3605 = vadd.f32 %v3460, %v3604
        %v3606 = vpop.f32.mrf.mxu0
        %3607 = vmatprep.mubr.f32.mxu0 0.0
        %3608 = vmatmul.mubr.f32.gmra.mxu0 %v2101
        %v3609 = vpop.f32.mrf.mxu0
        %v3610 = vadd.f32 %v3465, %v3609
        %v3611 = vpop.f32.mrf.mxu0
        %3612 = vmatprep.mubr.f32.mxu0 0.0
        %3613 = vmatmul.mubr.f32.gmra.mxu0 %v2102
        %v3614 = vpop.f32.mrf.mxu0
        %v3615 = vadd.f32 %v3470, %v3614
        %v3616 = vpop.f32.mrf.mxu0
        %3617 = vmatprep.mubr.f32.mxu0 0.0
        %3618 = vmatmul.mubr.f32.gmra.mxu0 %v2103
        %v3619 = vpop.f32.mrf.mxu0
        %v3620 = vadd.f32 %v3475, %v3619
        %v3621 = vpop.f32.mrf.mxu0
        %3622 = vmatprep.mubr.f32.mxu0 0.0
        %3623 = vmatmul.mubr.f32.gmra.mxu0 %v2104
        %v3624 = vpop.f32.mrf.mxu0
        %v3625 = vadd.f32 %v3480, %v3624
        %v3626 = vpop.f32.mrf.mxu0
        %3627 = vmatprep.mubr.f32.mxu0 0.0
        %3628 = vmatmul.mubr.f32.gmra.mxu0 %v2105
        %v3629 = vpop.f32.mrf.mxu0
        %v3630 = vadd.f32 %v3485, %v3629
        %v3631 = vpop.f32.mrf.mxu0
        %3632 = vmatprep.mubr.f32.mxu0 0.0
        %3633 = vmatmul.mubr.f32.gmra.mxu0 %v2106
        %v3634 = vpop.f32.mrf.mxu0
        %v3635 = vadd.f32 %v3490, %v3634
        %v3636 = vpop.f32.mrf.mxu0
        %3637 = vmatprep.mubr.f32.mxu0 0.0
        %3638 = vmatmul.mubr.f32.gmra.mxu0 %v2107
        %v3639 = vpop.f32.mrf.mxu0
        %v3640 = vadd.f32 %v3495, %v3639
        %v3641 = vpop.f32.mrf.mxu0
        %3642 = vmatprep.mubr.f32.mxu0 0.0
        %3643 = vmatmul.mubr.f32.gmra.mxu0 %v2108
        %v3644 = vpop.f32.mrf.mxu0
        %v3645 = vadd.f32 %v3500, %v3644
        %v3646 = vpop.f32.mrf.mxu0
        %3647 = vmatprep.mubr.f32.mxu0 0.0
        %3648 = vmatmul.mubr.f32.gmra.mxu0 %v2109
        %v3649 = vpop.f32.mrf.mxu0
        %v3650 = vadd.f32 %v3505, %v3649
        %v3651 = vpop.f32.mrf.mxu0
        %3652 = vmatprep.mubr.f32.mxu0 0.0
        %3653 = vmatmul.mubr.f32.gmra.mxu0 %v2110
        %v3654 = vpop.f32.mrf.mxu0
        %v3655 = vadd.f32 %v3510, %v3654
        %v3656 = vpop.f32.mrf.mxu0
        %3657 = vmatprep.mubr.f32.mxu0 0.0
        %3658 = vmatmul.mubr.f32.gmra.mxu0 %v2111
        %v3659 = vpop.f32.mrf.mxu0
        %v3660 = vadd.f32 %v3515, %v3659
        %v3661 = vpop.f32.mrf.mxu0
        %3662 = vdwg.mxu0
        %v3663 = vadd.f32 %v3069, %v3585
        %v3664 = vadd.f32 %v3074, %v3590
        %v3665 = vadd.f32 %v3079, %v3595
        %v3666 = vadd.f32 %v3084, %v3600
        %v3667 = vadd.f32 %v3089, %v3605
        %v3668 = vadd.f32 %v3094, %v3610
        %v3669 = vadd.f32 %v3099, %v3615
        %v3670 = vadd.f32 %v3104, %v3620
        %v3671 = vadd.f32 %v3109, %v3625
        %v3672 = vadd.f32 %v3114, %v3630
        %v3673 = vadd.f32 %v3119, %v3635
        %v3674 = vadd.f32 %v3124, %v3640
        %v3675 = vadd.f32 %v3129, %v3645
        %v3676 = vadd.f32 %v3134, %v3650
        %v3677 = vadd.f32 %v3139, %v3655
        %v3678 = vadd.f32 %v3144, %v3660
        %s3679 = scalar_lea.vmem [#allocation6], 1920
        %v3680 = vld [vmem:[%s3679] sm:$0xff]
        %v3681 = vld [vmem:[%s3679 + $0x8] sm:$0xff]
        %v3682 = vld [vmem:[%s3679 + $0x10] sm:$0xff]
        %v3683 = vld [vmem:[%s3679 + $0x18] sm:$0xff]
        %v3684 = vld [vmem:[%s3679 + $0x20] sm:$0xff]
        %v3685 = vld [vmem:[%s3679 + $0x28] sm:$0xff]
        %v3686 = vld [vmem:[%s3679 + $0x30] sm:$0xff]
        %v3687 = vld [vmem:[%s3679 + $0x38] sm:$0xff]
        %v3688 = vld [vmem:[%s3679 + $0x40] sm:$0xff]
        %v3689 = vld [vmem:[%s3679 + $0x48] sm:$0xff]
        %v3690 = vld [vmem:[%s3679 + $0x50] sm:$0xff]
        %v3691 = vld [vmem:[%s3679 + $0x58] sm:$0xff]
        %v3692 = vld [vmem:[%s3679 + $0x60] sm:$0xff]
        %v3693 = vld [vmem:[%s3679 + $0x68] sm:$0xff]
        %v3694 = vld [vmem:[%s3679 + $0x70] sm:$0xff]
        %v3695 = vld [vmem:[%s3679 + $0x78] sm:$0xff]
        %v3696 = vld [vmem:[%s3679 + $0x80] sm:$0xff]
        %v3697 = vld [vmem:[%s3679 + $0x88] sm:$0xff]
        %v3698 = vld [vmem:[%s3679 + $0x90] sm:$0xff]
        %v3699 = vld [vmem:[%s3679 + $0x98] sm:$0xff]
        %v3700 = vld [vmem:[%s3679 + $0xa0] sm:$0xff]
        %v3701 = vld [vmem:[%s3679 + $0xa8] sm:$0xff]
        %v3702 = vld [vmem:[%s3679 + $0xb0] sm:$0xff]
        %v3703 = vld [vmem:[%s3679 + $0xb8] sm:$0xff]
        %v3704 = vld [vmem:[%s3679 + $0xc0] sm:$0xff]
        %v3705 = vld [vmem:[%s3679 + $0xc8] sm:$0xff]
        %v3706 = vld [vmem:[%s3679 + $0xd0] sm:$0xff]
        %v3707 = vld [vmem:[%s3679 + $0xd8] sm:$0xff]
        %v3708 = vld [vmem:[%s3679 + $0xe0] sm:$0xff]
        %v3709 = vld [vmem:[%s3679 + $0xe8] sm:$0xff]
        %v3710 = vld [vmem:[%s3679 + $0xf0] sm:$0xff]
        %v3711 = vld [vmem:[%s3679 + $0xf8] sm:$0xff]
        %v3712 = vld [vmem:[%s3679 + $0x100] sm:$0xff]
        %v3713 = vld [vmem:[%s3679 + $0x108] sm:$0xff]
        %v3714 = vld [vmem:[%s3679 + $0x110] sm:$0xff]
        %v3715 = vld [vmem:[%s3679 + $0x118] sm:$0xff]
        %v3716 = vld [vmem:[%s3679 + $0x120] sm:$0xff]
        %v3717 = vld [vmem:[%s3679 + $0x128] sm:$0xff]
        %v3718 = vld [vmem:[%s3679 + $0x130] sm:$0xff]
        %v3719 = vld [vmem:[%s3679 + $0x138] sm:$0xff]
        %v3720 = vld [vmem:[%s3679 + $0x140] sm:$0xff]
        %v3721 = vld [vmem:[%s3679 + $0x148] sm:$0xff]
        %v3722 = vld [vmem:[%s3679 + $0x150] sm:$0xff]
        %v3723 = vld [vmem:[%s3679 + $0x158] sm:$0xff]
        %v3724 = vld [vmem:[%s3679 + $0x160] sm:$0xff]
        %v3725 = vld [vmem:[%s3679 + $0x168] sm:$0xff]
        %v3726 = vld [vmem:[%s3679 + $0x170] sm:$0xff]
        %v3727 = vld [vmem:[%s3679 + $0x178] sm:$0xff]
        %v3728 = vld [vmem:[%s3679 + $0x180] sm:$0xff]
        %v3729 = vld [vmem:[%s3679 + $0x188] sm:$0xff]
        %v3730 = vld [vmem:[%s3679 + $0x190] sm:$0xff]
        %v3731 = vld [vmem:[%s3679 + $0x198] sm:$0xff]
        %v3732 = vld [vmem:[%s3679 + $0x1a0] sm:$0xff]
        %v3733 = vld [vmem:[%s3679 + $0x1a8] sm:$0xff]
        %v3734 = vld [vmem:[%s3679 + $0x1b0] sm:$0xff]
        %v3735 = vld [vmem:[%s3679 + $0x1b8] sm:$0xff]
        %v3736 = vld [vmem:[%s3679 + $0x1c0] sm:$0xff]
        %v3737 = vld [vmem:[%s3679 + $0x1c8] sm:$0xff]
        %v3738 = vld [vmem:[%s3679 + $0x1d0] sm:$0xff]
        %v3739 = vld [vmem:[%s3679 + $0x1d8] sm:$0xff]
        %v3740 = vld [vmem:[%s3679 + $0x1e0] sm:$0xff]
        %v3741 = vld [vmem:[%s3679 + $0x1e8] sm:$0xff]
        %v3742 = vld [vmem:[%s3679 + $0x1f0] sm:$0xff]
        %v3743 = vld [vmem:[%s3679 + $0x1f8] sm:$0xff]
        %v3744 = vld [vmem:[%s3679 + $0x200] sm:$0xff]
        %v3745 = vld [vmem:[%s3679 + $0x208] sm:$0xff]
        %v3746 = vld [vmem:[%s3679 + $0x210] sm:$0xff]
        %v3747 = vld [vmem:[%s3679 + $0x218] sm:$0xff]
        %v3748 = vld [vmem:[%s3679 + $0x220] sm:$0xff]
        %v3749 = vld [vmem:[%s3679 + $0x228] sm:$0xff]
        %v3750 = vld [vmem:[%s3679 + $0x230] sm:$0xff]
        %v3751 = vld [vmem:[%s3679 + $0x238] sm:$0xff]
        %v3752 = vld [vmem:[%s3679 + $0x240] sm:$0xff]
        %v3753 = vld [vmem:[%s3679 + $0x248] sm:$0xff]
        %v3754 = vld [vmem:[%s3679 + $0x250] sm:$0xff]
        %v3755 = vld [vmem:[%s3679 + $0x258] sm:$0xff]
        %v3756 = vld [vmem:[%s3679 + $0x260] sm:$0xff]
        %v3757 = vld [vmem:[%s3679 + $0x268] sm:$0xff]
        %v3758 = vld [vmem:[%s3679 + $0x270] sm:$0xff]
        %v3759 = vld [vmem:[%s3679 + $0x278] sm:$0xff]
        %3760 = vmatprep.subr.mxu0 0.0
        %3761 = vmatpush1.msra.mxu0 %v3695
        %3762 = vmatprep.subr.mxu0 0.0
        %3763 = vmatpush1.msra.mxu0 %v3694
        %3764 = vmatprep.subr.mxu0 0.0
        %3765 = vmatpush1.msra.mxu0 %v3693
        %3766 = vmatprep.subr.mxu0 0.0
        %3767 = vmatpush1.msra.mxu0 %v3692
        %3768 = vmatprep.subr.mxu0 0.0
        %3769 = vmatpush1.msra.mxu0 %v3691
        %3770 = vmatprep.subr.mxu0 0.0
        %3771 = vmatpush1.msra.mxu0 %v3690
        %3772 = vmatprep.subr.mxu0 0.0
        %3773 = vmatpush1.msra.mxu0 %v3689
        %3774 = vmatprep.subr.mxu0 0.0
        %3775 = vmatpush1.msra.mxu0 %v3688
        %3776 = vmatprep.subr.mxu0 0.0
        %3777 = vmatpush1.msra.mxu0 %v3687
        %3778 = vmatprep.subr.mxu0 0.0
        %3779 = vmatpush1.msra.mxu0 %v3686
        %3780 = vmatprep.subr.mxu0 0.0
        %3781 = vmatpush1.msra.mxu0 %v3685
        %3782 = vmatprep.subr.mxu0 0.0
        %3783 = vmatpush1.msra.mxu0 %v3684
        %3784 = vmatprep.subr.mxu0 0.0
        %3785 = vmatpush1.msra.mxu0 %v3683
        %3786 = vmatprep.subr.mxu0 0.0
        %3787 = vmatpush1.msra.mxu0 %v3682
        %3788 = vmatprep.subr.mxu0 0.0
        %3789 = vmatpush1.msra.mxu0 %v3681
        %3790 = vmatprep.subr.mxu0 0.0
        %3791 = vmatpush1.msra.mxu0 %v3680
        %3792 = vmatprep.subr.mxu0 0.0
        %3793 = vmatpush2.msra.mxu0 %v3711
        %3794 = vmatprep.subr.mxu0 0.0
        %3795 = vmatpush2.msra.mxu0 %v3710
        %3796 = vmatprep.subr.mxu0 0.0
        %3797 = vmatpush2.msra.mxu0 %v3709
        %3798 = vmatprep.subr.mxu0 0.0
        %3799 = vmatpush2.msra.mxu0 %v3708
        %3800 = vmatprep.subr.mxu0 0.0
        %3801 = vmatpush2.msra.mxu0 %v3707
        %3802 = vmatprep.subr.mxu0 0.0
        %3803 = vmatpush2.msra.mxu0 %v3706
        %3804 = vmatprep.subr.mxu0 0.0
        %3805 = vmatpush2.msra.mxu0 %v3705
        %3806 = vmatprep.subr.mxu0 0.0
        %3807 = vmatpush2.msra.mxu0 %v3704
        %3808 = vmatprep.subr.mxu0 0.0
        %3809 = vmatpush2.msra.mxu0 %v3703
        %3810 = vmatprep.subr.mxu0 0.0
        %3811 = vmatpush2.msra.mxu0 %v3702
        %3812 = vmatprep.subr.mxu0 0.0
        %3813 = vmatpush2.msra.mxu0 %v3701
        %3814 = vmatprep.subr.mxu0 0.0
        %3815 = vmatpush2.msra.mxu0 %v3700
        %3816 = vmatprep.subr.mxu0 0.0
        %3817 = vmatpush2.msra.mxu0 %v3699
        %3818 = vmatprep.subr.mxu0 0.0
        %3819 = vmatpush2.msra.mxu0 %v3698
        %3820 = vmatprep.subr.mxu0 0.0
        %3821 = vmatpush2.msra.mxu0 %v3697
        %3822 = vmatprep.subr.mxu0 0.0
        %3823 = vmatpush2.msra.mxu0 %v3696
        %3824 = vmatprep.mubr.f32.mxu0 %v2026
        %3825 = vmatmul.mubr.f32.gmra.mxu0 %v2002
        %v3826 = vpop.f32.mrf.mxu0
        %v3827 = vadd.f32 0.0, %v3826
        %v3828 = vpop.f32.mrf.mxu0
        %3829 = vmatprep.mubr.f32.mxu0 %v2027
        %3830 = vmatmul.mubr.f32.gmra.mxu0 %v2003
        %v3831 = vpop.f32.mrf.mxu0
        %v3832 = vadd.f32 0.0, %v3831
        %v3833 = vpop.f32.mrf.mxu0
        %3834 = vmatprep.mubr.f32.mxu0 %v2028
        %3835 = vmatmul.mubr.f32.gmra.mxu0 %v2004
        %v3836 = vpop.f32.mrf.mxu0
        %v3837 = vadd.f32 0.0, %v3836
        %v3838 = vpop.f32.mrf.mxu0
        %3839 = vmatprep.mubr.f32.mxu0 %v2029
        %3840 = vmatmul.mubr.f32.gmra.mxu0 %v2005
        %v3841 = vpop.f32.mrf.mxu0
        %v3842 = vadd.f32 0.0, %v3841
        %v3843 = vpop.f32.mrf.mxu0
        %3844 = vmatprep.mubr.f32.mxu0 %v2030
        %3845 = vmatmul.mubr.f32.gmra.mxu0 %v2006
        %v3846 = vpop.f32.mrf.mxu0
        %v3847 = vadd.f32 0.0, %v3846
        %v3848 = vpop.f32.mrf.mxu0
        %3849 = vmatprep.mubr.f32.mxu0 %v2031
        %3850 = vmatmul.mubr.f32.gmra.mxu0 %v2007
        %v3851 = vpop.f32.mrf.mxu0
        %v3852 = vadd.f32 0.0, %v3851
        %v3853 = vpop.f32.mrf.mxu0
        %3854 = vmatprep.mubr.f32.mxu0 %v2032
        %3855 = vmatmul.mubr.f32.gmra.mxu0 %v2008
        %v3856 = vpop.f32.mrf.mxu0
        %v3857 = vadd.f32 0.0, %v3856
        %v3858 = vpop.f32.mrf.mxu0
        %3859 = vmatprep.mubr.f32.mxu0 %v2033
        %3860 = vmatmul.mubr.f32.gmra.mxu0 %v2009
        %v3861 = vpop.f32.mrf.mxu0
        %v3862 = vadd.f32 0.0, %v3861
        %v3863 = vpop.f32.mrf.mxu0
        %3864 = vmatprep.mubr.f32.mxu0 %v2034
        %3865 = vmatmul.mubr.f32.gmra.mxu0 %v2010
        %v3866 = vpop.f32.mrf.mxu0
        %v3867 = vadd.f32 0.0, %v3866
        %v3868 = vpop.f32.mrf.mxu0
        %3869 = vmatprep.mubr.f32.mxu0 %v2035
        %3870 = vmatmul.mubr.f32.gmra.mxu0 %v2011
        %v3871 = vpop.f32.mrf.mxu0
        %v3872 = vadd.f32 0.0, %v3871
        %v3873 = vpop.f32.mrf.mxu0
        %3874 = vmatprep.mubr.f32.mxu0 %v2036
        %3875 = vmatmul.mubr.f32.gmra.mxu0 %v2012
        %v3876 = vpop.f32.mrf.mxu0
        %v3877 = vadd.f32 0.0, %v3876
        %v3878 = vpop.f32.mrf.mxu0
        %3879 = vmatprep.mubr.f32.mxu0 %v2037
        %3880 = vmatmul.mubr.f32.gmra.mxu0 %v2013
        %v3881 = vpop.f32.mrf.mxu0
        %v3882 = vadd.f32 0.0, %v3881
        %v3883 = vpop.f32.mrf.mxu0
        %3884 = vmatprep.mubr.f32.mxu0 %v2038
        %3885 = vmatmul.mubr.f32.gmra.mxu0 %v2014
        %v3886 = vpop.f32.mrf.mxu0
        %v3887 = vadd.f32 0.0, %v3886
        %v3888 = vpop.f32.mrf.mxu0
        %3889 = vmatprep.mubr.f32.mxu0 %v2039
        %3890 = vmatmul.mubr.f32.gmra.mxu0 %v2015
        %v3891 = vpop.f32.mrf.mxu0
        %v3892 = vadd.f32 0.0, %v3891
        %v3893 = vpop.f32.mrf.mxu0
        %3894 = vmatprep.mubr.f32.mxu0 %v2040
        %3895 = vmatmul.mubr.f32.gmra.mxu0 %v2016
        %v3896 = vpop.f32.mrf.mxu0
        %v3897 = vadd.f32 0.0, %v3896
        %v3898 = vpop.f32.mrf.mxu0
        %3899 = vmatprep.mubr.f32.mxu0 %v2041
        %3900 = vmatmul.mubr.f32.gmra.mxu0 %v2017
        %v3901 = vpop.f32.mrf.mxu0
        %v3902 = vadd.f32 0.0, %v3901
        %v3903 = vpop.f32.mrf.mxu0
        %3904 = vdwg.mxu0
        %3905 = vmatprep.subr.mxu0 0.0
        %3906 = vmatpush1.msra.mxu0 %v3727
        %3907 = vmatprep.subr.mxu0 0.0
        %3908 = vmatpush1.msra.mxu0 %v3726
        %3909 = vmatprep.subr.mxu0 0.0
        %3910 = vmatpush1.msra.mxu0 %v3725
        %3911 = vmatprep.subr.mxu0 0.0
        %3912 = vmatpush1.msra.mxu0 %v3724
        %3913 = vmatprep.subr.mxu0 0.0
        %3914 = vmatpush1.msra.mxu0 %v3723
        %3915 = vmatprep.subr.mxu0 0.0
        %3916 = vmatpush1.msra.mxu0 %v3722
        %3917 = vmatprep.subr.mxu0 0.0
        %3918 = vmatpush1.msra.mxu0 %v3721
        %3919 = vmatprep.subr.mxu0 0.0
        %3920 = vmatpush1.msra.mxu0 %v3720
        %3921 = vmatprep.subr.mxu0 0.0
        %3922 = vmatpush1.msra.mxu0 %v3719
        %3923 = vmatprep.subr.mxu0 0.0
        %3924 = vmatpush1.msra.mxu0 %v3718
        %3925 = vmatprep.subr.mxu0 0.0
        %3926 = vmatpush1.msra.mxu0 %v3717
        %3927 = vmatprep.subr.mxu0 0.0
        %3928 = vmatpush1.msra.mxu0 %v3716
        %3929 = vmatprep.subr.mxu0 0.0
        %3930 = vmatpush1.msra.mxu0 %v3715
        %3931 = vmatprep.subr.mxu0 0.0
        %3932 = vmatpush1.msra.mxu0 %v3714
        %3933 = vmatprep.subr.mxu0 0.0
        %3934 = vmatpush1.msra.mxu0 %v3713
        %3935 = vmatprep.subr.mxu0 0.0
        %3936 = vmatpush1.msra.mxu0 %v3712
        %3937 = vmatprep.subr.mxu0 0.0
        %3938 = vmatpush2.msra.mxu0 %v3743
        %3939 = vmatprep.subr.mxu0 0.0
        %3940 = vmatpush2.msra.mxu0 %v3742
        %3941 = vmatprep.subr.mxu0 0.0
        %3942 = vmatpush2.msra.mxu0 %v3741
        %3943 = vmatprep.subr.mxu0 0.0
        %3944 = vmatpush2.msra.mxu0 %v3740
        %3945 = vmatprep.subr.mxu0 0.0
        %3946 = vmatpush2.msra.mxu0 %v3739
        %3947 = vmatprep.subr.mxu0 0.0
        %3948 = vmatpush2.msra.mxu0 %v3738
        %3949 = vmatprep.subr.mxu0 0.0
        %3950 = vmatpush2.msra.mxu0 %v3737
        %3951 = vmatprep.subr.mxu0 0.0
        %3952 = vmatpush2.msra.mxu0 %v3736
        %3953 = vmatprep.subr.mxu0 0.0
        %3954 = vmatpush2.msra.mxu0 %v3735
        %3955 = vmatprep.subr.mxu0 0.0
        %3956 = vmatpush2.msra.mxu0 %v3734
        %3957 = vmatprep.subr.mxu0 0.0
        %3958 = vmatpush2.msra.mxu0 %v3733
        %3959 = vmatprep.subr.mxu0 0.0
        %3960 = vmatpush2.msra.mxu0 %v3732
        %3961 = vmatprep.subr.mxu0 0.0
        %3962 = vmatpush2.msra.mxu0 %v3731
        %3963 = vmatprep.subr.mxu0 0.0
        %3964 = vmatpush2.msra.mxu0 %v3730
        %3965 = vmatprep.subr.mxu0 0.0
        %3966 = vmatpush2.msra.mxu0 %v3729
        %3967 = vmatprep.subr.mxu0 0.0
        %3968 = vmatpush2.msra.mxu0 %v3728
        %3969 = vmatprep.mubr.f32.mxu0 %v2074
        %3970 = vmatmul.mubr.f32.gmra.mxu0 %v2050
        %v3971 = vpop.f32.mrf.mxu0
        %v3972 = vadd.f32 %v3827, %v3971
        %v3973 = vpop.f32.mrf.mxu0
        %3974 = vmatprep.mubr.f32.mxu0 %v2075
        %3975 = vmatmul.mubr.f32.gmra.mxu0 %v2051
        %v3976 = vpop.f32.mrf.mxu0
        %v3977 = vadd.f32 %v3832, %v3976
        %v3978 = vpop.f32.mrf.mxu0
        %3979 = vmatprep.mubr.f32.mxu0 %v2076
        %3980 = vmatmul.mubr.f32.gmra.mxu0 %v2052
        %v3981 = vpop.f32.mrf.mxu0
        %v3982 = vadd.f32 %v3837, %v3981
        %v3983 = vpop.f32.mrf.mxu0
        %3984 = vmatprep.mubr.f32.mxu0 %v2077
        %3985 = vmatmul.mubr.f32.gmra.mxu0 %v2053
        %v3986 = vpop.f32.mrf.mxu0
        %v3987 = vadd.f32 %v3842, %v3986
        %v3988 = vpop.f32.mrf.mxu0
        %3989 = vmatprep.mubr.f32.mxu0 %v2078
        %3990 = vmatmul.mubr.f32.gmra.mxu0 %v2054
        %v3991 = vpop.f32.mrf.mxu0
        %v3992 = vadd.f32 %v3847, %v3991
        %v3993 = vpop.f32.mrf.mxu0
        %3994 = vmatprep.mubr.f32.mxu0 %v2079
        %3995 = vmatmul.mubr.f32.gmra.mxu0 %v2055
        %v3996 = vpop.f32.mrf.mxu0
        %v3997 = vadd.f32 %v3852, %v3996
        %v3998 = vpop.f32.mrf.mxu0
        %3999 = vmatprep.mubr.f32.mxu0 %v2080
        %4000 = vmatmul.mubr.f32.gmra.mxu0 %v2056
        %v4001 = vpop.f32.mrf.mxu0
        %v4002 = vadd.f32 %v3857, %v4001
        %v4003 = vpop.f32.mrf.mxu0
        %4004 = vmatprep.mubr.f32.mxu0 %v2081
        %4005 = vmatmul.mubr.f32.gmra.mxu0 %v2057
        %v4006 = vpop.f32.mrf.mxu0
        %v4007 = vadd.f32 %v3862, %v4006
        %v4008 = vpop.f32.mrf.mxu0
        %4009 = vmatprep.mubr.f32.mxu0 %v2082
        %4010 = vmatmul.mubr.f32.gmra.mxu0 %v2058
        %v4011 = vpop.f32.mrf.mxu0
        %v4012 = vadd.f32 %v3867, %v4011
        %v4013 = vpop.f32.mrf.mxu0
        %4014 = vmatprep.mubr.f32.mxu0 %v2083
        %4015 = vmatmul.mubr.f32.gmra.mxu0 %v2059
        %v4016 = vpop.f32.mrf.mxu0
        %v4017 = vadd.f32 %v3872, %v4016
        %v4018 = vpop.f32.mrf.mxu0
        %4019 = vmatprep.mubr.f32.mxu0 %v2084
        %4020 = vmatmul.mubr.f32.gmra.mxu0 %v2060
        %v4021 = vpop.f32.mrf.mxu0
        %v4022 = vadd.f32 %v3877, %v4021
        %v4023 = vpop.f32.mrf.mxu0
        %4024 = vmatprep.mubr.f32.mxu0 %v2085
        %4025 = vmatmul.mubr.f32.gmra.mxu0 %v2061
        %v4026 = vpop.f32.mrf.mxu0
        %v4027 = vadd.f32 %v3882, %v4026
        %v4028 = vpop.f32.mrf.mxu0
        %4029 = vmatprep.mubr.f32.mxu0 %v2086
        %4030 = vmatmul.mubr.f32.gmra.mxu0 %v2062
        %v4031 = vpop.f32.mrf.mxu0
        %v4032 = vadd.f32 %v3887, %v4031
        %v4033 = vpop.f32.mrf.mxu0
        %4034 = vmatprep.mubr.f32.mxu0 %v2087
        %4035 = vmatmul.mubr.f32.gmra.mxu0 %v2063
        %v4036 = vpop.f32.mrf.mxu0
        %v4037 = vadd.f32 %v3892, %v4036
        %v4038 = vpop.f32.mrf.mxu0
        %4039 = vmatprep.mubr.f32.mxu0 %v2088
        %4040 = vmatmul.mubr.f32.gmra.mxu0 %v2064
        %v4041 = vpop.f32.mrf.mxu0
        %v4042 = vadd.f32 %v3897, %v4041
        %v4043 = vpop.f32.mrf.mxu0
        %4044 = vmatprep.mubr.f32.mxu0 %v2089
        %4045 = vmatmul.mubr.f32.gmra.mxu0 %v2065
        %v4046 = vpop.f32.mrf.mxu0
        %v4047 = vadd.f32 %v3902, %v4046
        %v4048 = vpop.f32.mrf.mxu0
        %4049 = vdwg.mxu0
        %4050 = vmatprep.subr.mxu0 0.0
        %4051 = vmatpush1.msra.mxu0 %v3759
        %4052 = vmatprep.subr.mxu0 0.0
        %4053 = vmatpush1.msra.mxu0 %v3758
        %4054 = vmatprep.subr.mxu0 0.0
        %4055 = vmatpush1.msra.mxu0 %v3757
        %4056 = vmatprep.subr.mxu0 0.0
        %4057 = vmatpush1.msra.mxu0 %v3756
        %4058 = vmatprep.subr.mxu0 0.0
        %4059 = vmatpush1.msra.mxu0 %v3755
        %4060 = vmatprep.subr.mxu0 0.0
        %4061 = vmatpush1.msra.mxu0 %v3754
        %4062 = vmatprep.subr.mxu0 0.0
        %4063 = vmatpush1.msra.mxu0 %v3753
        %4064 = vmatprep.subr.mxu0 0.0
        %4065 = vmatpush1.msra.mxu0 %v3752
        %4066 = vmatprep.subr.mxu0 0.0
        %4067 = vmatpush1.msra.mxu0 %v3751
        %4068 = vmatprep.subr.mxu0 0.0
        %4069 = vmatpush1.msra.mxu0 %v3750
        %4070 = vmatprep.subr.mxu0 0.0
        %4071 = vmatpush1.msra.mxu0 %v3749
        %4072 = vmatprep.subr.mxu0 0.0
        %4073 = vmatpush1.msra.mxu0 %v3748
        %4074 = vmatprep.subr.mxu0 0.0
        %4075 = vmatpush1.msra.mxu0 %v3747
        %4076 = vmatprep.subr.mxu0 0.0
        %4077 = vmatpush1.msra.mxu0 %v3746
        %4078 = vmatprep.subr.mxu0 0.0
        %4079 = vmatpush1.msra.mxu0 %v3745
        %4080 = vmatprep.subr.mxu0 0.0
        %4081 = vmatpush1.msra.mxu0 %v3744
        %4082 = vmatprep.subr.mxu0 0.0
        %4083 = vmatpush2.msra.mxu0 0.0
        %4084 = vmatprep.subr.mxu0 0.0
        %4085 = vmatpush2.msra.mxu0 0.0
        %4086 = vmatprep.subr.mxu0 0.0
        %4087 = vmatpush2.msra.mxu0 0.0
        %4088 = vmatprep.subr.mxu0 0.0
        %4089 = vmatpush2.msra.mxu0 0.0
        %4090 = vmatprep.subr.mxu0 0.0
        %4091 = vmatpush2.msra.mxu0 0.0
        %4092 = vmatprep.subr.mxu0 0.0
        %4093 = vmatpush2.msra.mxu0 0.0
        %4094 = vmatprep.subr.mxu0 0.0
        %4095 = vmatpush2.msra.mxu0 0.0
        %4096 = vmatprep.subr.mxu0 0.0
        %4097 = vmatpush2.msra.mxu0 0.0
        %4098 = vmatprep.subr.mxu0 0.0
        %4099 = vmatpush2.msra.mxu0 0.0
        %4100 = vmatprep.subr.mxu0 0.0
        %4101 = vmatpush2.msra.mxu0 0.0
        %4102 = vmatprep.subr.mxu0 0.0
        %4103 = vmatpush2.msra.mxu0 0.0
        %4104 = vmatprep.subr.mxu0 0.0
        %4105 = vmatpush2.msra.mxu0 0.0
        %4106 = vmatprep.subr.mxu0 0.0
        %4107 = vmatpush2.msra.mxu0 0.0
        %4108 = vmatprep.subr.mxu0 0.0
        %4109 = vmatpush2.msra.mxu0 0.0
        %4110 = vmatprep.subr.mxu0 0.0
        %4111 = vmatpush2.msra.mxu0 0.0
        %4112 = vmatprep.subr.mxu0 0.0
        %4113 = vmatpush2.msra.mxu0 0.0
        %4114 = vmatprep.mubr.f32.mxu0 0.0
        %4115 = vmatmul.mubr.f32.gmra.mxu0 %v2098
        %v4116 = vpop.f32.mrf.mxu0
        %v4117 = vadd.f32 %v3972, %v4116
        %v4118 = vpop.f32.mrf.mxu0
        %4119 = vmatprep.mubr.f32.mxu0 0.0
        %4120 = vmatmul.mubr.f32.gmra.mxu0 %v2099
        %v4121 = vpop.f32.mrf.mxu0
        %v4122 = vadd.f32 %v3977, %v4121
        %v4123 = vpop.f32.mrf.mxu0
        %4124 = vmatprep.mubr.f32.mxu0 0.0
        %4125 = vmatmul.mubr.f32.gmra.mxu0 %v2100
        %v4126 = vpop.f32.mrf.mxu0
        %v4127 = vadd.f32 %v3982, %v4126
        %v4128 = vpop.f32.mrf.mxu0
        %4129 = vmatprep.mubr.f32.mxu0 0.0
        %4130 = vmatmul.mubr.f32.gmra.mxu0 %v2101
        %v4131 = vpop.f32.mrf.mxu0
        %v4132 = vadd.f32 %v3987, %v4131
        %v4133 = vpop.f32.mrf.mxu0
        %4134 = vmatprep.mubr.f32.mxu0 0.0
        %4135 = vmatmul.mubr.f32.gmra.mxu0 %v2102
        %v4136 = vpop.f32.mrf.mxu0
        %v4137 = vadd.f32 %v3992, %v4136
        %v4138 = vpop.f32.mrf.mxu0
        %4139 = vmatprep.mubr.f32.mxu0 0.0
        %4140 = vmatmul.mubr.f32.gmra.mxu0 %v2103
        %v4141 = vpop.f32.mrf.mxu0
        %v4142 = vadd.f32 %v3997, %v4141
        %v4143 = vpop.f32.mrf.mxu0
        %4144 = vmatprep.mubr.f32.mxu0 0.0
        %4145 = vmatmul.mubr.f32.gmra.mxu0 %v2104
        %v4146 = vpop.f32.mrf.mxu0
        %v4147 = vadd.f32 %v4002, %v4146
        %v4148 = vpop.f32.mrf.mxu0
        %4149 = vmatprep.mubr.f32.mxu0 0.0
        %4150 = vmatmul.mubr.f32.gmra.mxu0 %v2105
        %v4151 = vpop.f32.mrf.mxu0
        %v4152 = vadd.f32 %v4007, %v4151
        %v4153 = vpop.f32.mrf.mxu0
        %4154 = vmatprep.mubr.f32.mxu0 0.0
        %4155 = vmatmul.mubr.f32.gmra.mxu0 %v2106
        %v4156 = vpop.f32.mrf.mxu0
        %v4157 = vadd.f32 %v4012, %v4156
        %v4158 = vpop.f32.mrf.mxu0
        %4159 = vmatprep.mubr.f32.mxu0 0.0
        %4160 = vmatmul.mubr.f32.gmra.mxu0 %v2107
        %v4161 = vpop.f32.mrf.mxu0
        %v4162 = vadd.f32 %v4017, %v4161
        %v4163 = vpop.f32.mrf.mxu0
        %4164 = vmatprep.mubr.f32.mxu0 0.0
        %4165 = vmatmul.mubr.f32.gmra.mxu0 %v2108
        %v4166 = vpop.f32.mrf.mxu0
        %v4167 = vadd.f32 %v4022, %v4166
        %v4168 = vpop.f32.mrf.mxu0
        %4169 = vmatprep.mubr.f32.mxu0 0.0
        %4170 = vmatmul.mubr.f32.gmra.mxu0 %v2109
        %v4171 = vpop.f32.mrf.mxu0
        %v4172 = vadd.f32 %v4027, %v4171
        %v4173 = vpop.f32.mrf.mxu0
        %4174 = vmatprep.mubr.f32.mxu0 0.0
        %4175 = vmatmul.mubr.f32.gmra.mxu0 %v2110
        %v4176 = vpop.f32.mrf.mxu0
        %v4177 = vadd.f32 %v4032, %v4176
        %v4178 = vpop.f32.mrf.mxu0
        %4179 = vmatprep.mubr.f32.mxu0 0.0
        %4180 = vmatmul.mubr.f32.gmra.mxu0 %v2111
        %v4181 = vpop.f32.mrf.mxu0
        %v4182 = vadd.f32 %v4037, %v4181
        %v4183 = vpop.f32.mrf.mxu0
        %4184 = vmatprep.mubr.f32.mxu0 0.0
        %4185 = vmatmul.mubr.f32.gmra.mxu0 %v2112
        %v4186 = vpop.f32.mrf.mxu0
        %v4187 = vadd.f32 %v4042, %v4186
        %v4188 = vpop.f32.mrf.mxu0
        %4189 = vmatprep.mubr.f32.mxu0 0.0
        %4190 = vmatmul.mubr.f32.gmra.mxu0 %v2113
        %v4191 = vpop.f32.mrf.mxu0
        %v4192 = vadd.f32 %v4047, %v4191
        %v4193 = vpop.f32.mrf.mxu0
        %4194 = vdwg.mxu0
        %v4195 = vadd.f32 %v3663, %v4117
        %v4196 = vadd.f32 %v3664, %v4122
        %v4197 = vadd.f32 %v3665, %v4127
        %v4198 = vadd.f32 %v3666, %v4132
        %v4199 = vadd.f32 %v3667, %v4137
        %v4200 = vadd.f32 %v3668, %v4142
        %v4201 = vadd.f32 %v3669, %v4147
        %v4202 = vadd.f32 %v3670, %v4152
        %v4203 = vadd.f32 %v3671, %v4157
        %v4204 = vadd.f32 %v3672, %v4162
        %v4205 = vadd.f32 %v3673, %v4167
        %v4206 = vadd.f32 %v3674, %v4172
        %v4207 = vadd.f32 %v3675, %v4177
        %v4208 = vadd.f32 %v3676, %v4182
        %v4209 = vadd.f32 %v3677, %v4187
        %v4210 = vadd.f32 %v3678, %v4192
        %s4211 = scalar_lea.vmem [#allocation6], 2560
        %v4212 = vld [vmem:[%s4211] sm:$0xff]
        %v4213 = vld [vmem:[%s4211 + $0x8] sm:$0xff]
        %v4214 = vld [vmem:[%s4211 + $0x10] sm:$0xff]
        %v4215 = vld [vmem:[%s4211 + $0x18] sm:$0xff]
        %v4216 = vld [vmem:[%s4211 + $0x20] sm:$0xff]
        %v4217 = vld [vmem:[%s4211 + $0x28] sm:$0xff]
        %v4218 = vld [vmem:[%s4211 + $0x30] sm:$0xff]
        %v4219 = vld [vmem:[%s4211 + $0x38] sm:$0xff]
        %v4220 = vld [vmem:[%s4211 + $0x40] sm:$0xff]
        %v4221 = vld [vmem:[%s4211 + $0x48] sm:$0xff]
        %v4222 = vld [vmem:[%s4211 + $0x50] sm:$0xff]
        %v4223 = vld [vmem:[%s4211 + $0x58] sm:$0xff]
        %v4224 = vld [vmem:[%s4211 + $0x60] sm:$0xff]
        %v4225 = vld [vmem:[%s4211 + $0x68] sm:$0xff]
        %v4226 = vld [vmem:[%s4211 + $0x70] sm:$0xff]
        %v4227 = vld [vmem:[%s4211 + $0x78] sm:$0xff]
        %v4228 = vld [vmem:[%s4211 + $0x80] sm:$0xff]
        %v4229 = vld [vmem:[%s4211 + $0x88] sm:$0xff]
        %v4230 = vld [vmem:[%s4211 + $0x90] sm:$0xff]
        %v4231 = vld [vmem:[%s4211 + $0x98] sm:$0xff]
        %v4232 = vld [vmem:[%s4211 + $0xa0] sm:$0xff]
        %v4233 = vld [vmem:[%s4211 + $0xa8] sm:$0xff]
        %v4234 = vld [vmem:[%s4211 + $0xb0] sm:$0xff]
        %v4235 = vld [vmem:[%s4211 + $0xb8] sm:$0xff]
        %v4236 = vld [vmem:[%s4211 + $0xc0] sm:$0xff]
        %v4237 = vld [vmem:[%s4211 + $0xc8] sm:$0xff]
        %v4238 = vld [vmem:[%s4211 + $0xd0] sm:$0xff]
        %v4239 = vld [vmem:[%s4211 + $0xd8] sm:$0xff]
        %v4240 = vld [vmem:[%s4211 + $0xe0] sm:$0xff]
        %v4241 = vld [vmem:[%s4211 + $0xe8] sm:$0xff]
        %v4242 = vld [vmem:[%s4211 + $0xf0] sm:$0xff]
        %v4243 = vld [vmem:[%s4211 + $0xf8] sm:$0xff]
        %v4244 = vld [vmem:[%s4211 + $0x100] sm:$0xff]
        %v4245 = vld [vmem:[%s4211 + $0x108] sm:$0xff]
        %v4246 = vld [vmem:[%s4211 + $0x110] sm:$0xff]
        %v4247 = vld [vmem:[%s4211 + $0x118] sm:$0xff]
        %v4248 = vld [vmem:[%s4211 + $0x120] sm:$0xff]
        %v4249 = vld [vmem:[%s4211 + $0x128] sm:$0xff]
        %v4250 = vld [vmem:[%s4211 + $0x130] sm:$0xff]
        %v4251 = vld [vmem:[%s4211 + $0x138] sm:$0xff]
        %v4252 = vld [vmem:[%s4211 + $0x140] sm:$0xff]
        %v4253 = vld [vmem:[%s4211 + $0x148] sm:$0xff]
        %v4254 = vld [vmem:[%s4211 + $0x150] sm:$0xff]
        %v4255 = vld [vmem:[%s4211 + $0x158] sm:$0xff]
        %v4256 = vld [vmem:[%s4211 + $0x160] sm:$0xff]
        %v4257 = vld [vmem:[%s4211 + $0x168] sm:$0xff]
        %v4258 = vld [vmem:[%s4211 + $0x170] sm:$0xff]
        %v4259 = vld [vmem:[%s4211 + $0x178] sm:$0xff]
        %v4260 = vld [vmem:[%s4211 + $0x180] sm:$0xff]
        %v4261 = vld [vmem:[%s4211 + $0x188] sm:$0xff]
        %v4262 = vld [vmem:[%s4211 + $0x190] sm:$0xff]
        %v4263 = vld [vmem:[%s4211 + $0x198] sm:$0xff]
        %v4264 = vld [vmem:[%s4211 + $0x1a0] sm:$0xff]
        %v4265 = vld [vmem:[%s4211 + $0x1a8] sm:$0xff]
        %v4266 = vld [vmem:[%s4211 + $0x1b0] sm:$0xff]
        %v4267 = vld [vmem:[%s4211 + $0x1b8] sm:$0xff]
        %v4268 = vld [vmem:[%s4211 + $0x1c0] sm:$0xff]
        %v4269 = vld [vmem:[%s4211 + $0x1c8] sm:$0xff]
        %v4270 = vld [vmem:[%s4211 + $0x1d0] sm:$0xff]
        %v4271 = vld [vmem:[%s4211 + $0x1d8] sm:$0xff]
        %v4272 = vld [vmem:[%s4211 + $0x1e0] sm:$0xff]
        %v4273 = vld [vmem:[%s4211 + $0x1e8] sm:$0xff]
        %v4274 = vld [vmem:[%s4211 + $0x1f0] sm:$0xff]
        %v4275 = vld [vmem:[%s4211 + $0x1f8] sm:$0xff]
        %v4276 = vld [vmem:[%s4211 + $0x200] sm:$0xff]
        %v4277 = vld [vmem:[%s4211 + $0x208] sm:$0xff]
        %v4278 = vld [vmem:[%s4211 + $0x210] sm:$0xff]
        %v4279 = vld [vmem:[%s4211 + $0x218] sm:$0xff]
        %v4280 = vld [vmem:[%s4211 + $0x220] sm:$0xff]
        %v4281 = vld [vmem:[%s4211 + $0x228] sm:$0xff]
        %v4282 = vld [vmem:[%s4211 + $0x230] sm:$0xff]
        %v4283 = vld [vmem:[%s4211 + $0x238] sm:$0xff]
        %v4284 = vld [vmem:[%s4211 + $0x240] sm:$0xff]
        %v4285 = vld [vmem:[%s4211 + $0x248] sm:$0xff]
        %v4286 = vld [vmem:[%s4211 + $0x250] sm:$0xff]
        %v4287 = vld [vmem:[%s4211 + $0x258] sm:$0xff]
        %v4288 = vld [vmem:[%s4211 + $0x260] sm:$0xff]
        %v4289 = vld [vmem:[%s4211 + $0x268] sm:$0xff]
        %v4290 = vld [vmem:[%s4211 + $0x270] sm:$0xff]
        %v4291 = vld [vmem:[%s4211 + $0x278] sm:$0xff]
        %4292 = vmatprep.subr.mxu0 0.0
        %4293 = vmatpush1.msra.mxu0 %v4227
        %4294 = vmatprep.subr.mxu0 0.0
        %4295 = vmatpush1.msra.mxu0 %v4226
        %4296 = vmatprep.subr.mxu0 0.0
        %4297 = vmatpush1.msra.mxu0 %v4225
        %4298 = vmatprep.subr.mxu0 0.0
        %4299 = vmatpush1.msra.mxu0 %v4224
        %4300 = vmatprep.subr.mxu0 0.0
        %4301 = vmatpush1.msra.mxu0 %v4223
        %4302 = vmatprep.subr.mxu0 0.0
        %4303 = vmatpush1.msra.mxu0 %v4222
        %4304 = vmatprep.subr.mxu0 0.0
        %4305 = vmatpush1.msra.mxu0 %v4221
        %4306 = vmatprep.subr.mxu0 0.0
        %4307 = vmatpush1.msra.mxu0 %v4220
        %4308 = vmatprep.subr.mxu0 0.0
        %4309 = vmatpush1.msra.mxu0 %v4219
        %4310 = vmatprep.subr.mxu0 0.0
        %4311 = vmatpush1.msra.mxu0 %v4218
        %4312 = vmatprep.subr.mxu0 0.0
        %4313 = vmatpush1.msra.mxu0 %v4217
        %4314 = vmatprep.subr.mxu0 0.0
        %4315 = vmatpush1.msra.mxu0 %v4216
        %4316 = vmatprep.subr.mxu0 0.0
        %4317 = vmatpush1.msra.mxu0 %v4215
        %4318 = vmatprep.subr.mxu0 0.0
        %4319 = vmatpush1.msra.mxu0 %v4214
        %4320 = vmatprep.subr.mxu0 0.0
        %4321 = vmatpush1.msra.mxu0 %v4213
        %4322 = vmatprep.subr.mxu0 0.0
        %4323 = vmatpush1.msra.mxu0 %v4212
        %4324 = vmatprep.subr.mxu0 0.0
        %4325 = vmatpush2.msra.mxu0 %v4243
        %4326 = vmatprep.subr.mxu0 0.0
        %4327 = vmatpush2.msra.mxu0 %v4242
        %4328 = vmatprep.subr.mxu0 0.0
        %4329 = vmatpush2.msra.mxu0 %v4241
        %4330 = vmatprep.subr.mxu0 0.0
        %4331 = vmatpush2.msra.mxu0 %v4240
        %4332 = vmatprep.subr.mxu0 0.0
        %4333 = vmatpush2.msra.mxu0 %v4239
        %4334 = vmatprep.subr.mxu0 0.0
        %4335 = vmatpush2.msra.mxu0 %v4238
        %4336 = vmatprep.subr.mxu0 0.0
        %4337 = vmatpush2.msra.mxu0 %v4237
        %4338 = vmatprep.subr.mxu0 0.0
        %4339 = vmatpush2.msra.mxu0 %v4236
        %4340 = vmatprep.subr.mxu0 0.0
        %4341 = vmatpush2.msra.mxu0 %v4235
        %4342 = vmatprep.subr.mxu0 0.0
        %4343 = vmatpush2.msra.mxu0 %v4234
        %4344 = vmatprep.subr.mxu0 0.0
        %4345 = vmatpush2.msra.mxu0 %v4233
        %4346 = vmatprep.subr.mxu0 0.0
        %4347 = vmatpush2.msra.mxu0 %v4232
        %4348 = vmatprep.subr.mxu0 0.0
        %4349 = vmatpush2.msra.mxu0 %v4231
        %4350 = vmatprep.subr.mxu0 0.0
        %4351 = vmatpush2.msra.mxu0 %v4230
        %4352 = vmatprep.subr.mxu0 0.0
        %4353 = vmatpush2.msra.mxu0 %v4229
        %4354 = vmatprep.subr.mxu0 0.0
        %4355 = vmatpush2.msra.mxu0 %v4228
        %4356 = vmatprep.mubr.f32.mxu0 %v2028
        %4357 = vmatmul.mubr.f32.gmra.mxu0 %v2004
        %v4358 = vpop.f32.mrf.mxu0
        %v4359 = vadd.f32 0.0, %v4358
        %v4360 = vpop.f32.mrf.mxu0
        %4361 = vmatprep.mubr.f32.mxu0 %v2029
        %4362 = vmatmul.mubr.f32.gmra.mxu0 %v2005
        %v4363 = vpop.f32.mrf.mxu0
        %v4364 = vadd.f32 0.0, %v4363
        %v4365 = vpop.f32.mrf.mxu0
        %4366 = vmatprep.mubr.f32.mxu0 %v2030
        %4367 = vmatmul.mubr.f32.gmra.mxu0 %v2006
        %v4368 = vpop.f32.mrf.mxu0
        %v4369 = vadd.f32 0.0, %v4368
        %v4370 = vpop.f32.mrf.mxu0
        %4371 = vmatprep.mubr.f32.mxu0 %v2031
        %4372 = vmatmul.mubr.f32.gmra.mxu0 %v2007
        %v4373 = vpop.f32.mrf.mxu0
        %v4374 = vadd.f32 0.0, %v4373
        %v4375 = vpop.f32.mrf.mxu0
        %4376 = vmatprep.mubr.f32.mxu0 %v2032
        %4377 = vmatmul.mubr.f32.gmra.mxu0 %v2008
        %v4378 = vpop.f32.mrf.mxu0
        %v4379 = vadd.f32 0.0, %v4378
        %v4380 = vpop.f32.mrf.mxu0
        %4381 = vmatprep.mubr.f32.mxu0 %v2033
        %4382 = vmatmul.mubr.f32.gmra.mxu0 %v2009
        %v4383 = vpop.f32.mrf.mxu0
        %v4384 = vadd.f32 0.0, %v4383
        %v4385 = vpop.f32.mrf.mxu0
        %4386 = vmatprep.mubr.f32.mxu0 %v2034
        %4387 = vmatmul.mubr.f32.gmra.mxu0 %v2010
        %v4388 = vpop.f32.mrf.mxu0
        %v4389 = vadd.f32 0.0, %v4388
        %v4390 = vpop.f32.mrf.mxu0
        %4391 = vmatprep.mubr.f32.mxu0 %v2035
        %4392 = vmatmul.mubr.f32.gmra.mxu0 %v2011
        %v4393 = vpop.f32.mrf.mxu0
        %v4394 = vadd.f32 0.0, %v4393
        %v4395 = vpop.f32.mrf.mxu0
        %4396 = vmatprep.mubr.f32.mxu0 %v2036
        %4397 = vmatmul.mubr.f32.gmra.mxu0 %v2012
        %v4398 = vpop.f32.mrf.mxu0
        %v4399 = vadd.f32 0.0, %v4398
        %v4400 = vpop.f32.mrf.mxu0
        %4401 = vmatprep.mubr.f32.mxu0 %v2037
        %4402 = vmatmul.mubr.f32.gmra.mxu0 %v2013
        %v4403 = vpop.f32.mrf.mxu0
        %v4404 = vadd.f32 0.0, %v4403
        %v4405 = vpop.f32.mrf.mxu0
        %4406 = vmatprep.mubr.f32.mxu0 %v2038
        %4407 = vmatmul.mubr.f32.gmra.mxu0 %v2014
        %v4408 = vpop.f32.mrf.mxu0
        %v4409 = vadd.f32 0.0, %v4408
        %v4410 = vpop.f32.mrf.mxu0
        %4411 = vmatprep.mubr.f32.mxu0 %v2039
        %4412 = vmatmul.mubr.f32.gmra.mxu0 %v2015
        %v4413 = vpop.f32.mrf.mxu0
        %v4414 = vadd.f32 0.0, %v4413
        %v4415 = vpop.f32.mrf.mxu0
        %4416 = vmatprep.mubr.f32.mxu0 %v2040
        %4417 = vmatmul.mubr.f32.gmra.mxu0 %v2016
        %v4418 = vpop.f32.mrf.mxu0
        %v4419 = vadd.f32 0.0, %v4418
        %v4420 = vpop.f32.mrf.mxu0
        %4421 = vmatprep.mubr.f32.mxu0 %v2041
        %4422 = vmatmul.mubr.f32.gmra.mxu0 %v2017
        %v4423 = vpop.f32.mrf.mxu0
        %v4424 = vadd.f32 0.0, %v4423
        %v4425 = vpop.f32.mrf.mxu0
        %4426 = vmatprep.mubr.f32.mxu0 %v2042
        %4427 = vmatmul.mubr.f32.gmra.mxu0 %v2018
        %v4428 = vpop.f32.mrf.mxu0
        %v4429 = vadd.f32 0.0, %v4428
        %v4430 = vpop.f32.mrf.mxu0
        %4431 = vmatprep.mubr.f32.mxu0 %v2043
        %4432 = vmatmul.mubr.f32.gmra.mxu0 %v2019
        %v4433 = vpop.f32.mrf.mxu0
        %v4434 = vadd.f32 0.0, %v4433
        %v4435 = vpop.f32.mrf.mxu0
        %4436 = vdwg.mxu0
        %4437 = vmatprep.subr.mxu0 0.0
        %4438 = vmatpush1.msra.mxu0 %v4259
        %4439 = vmatprep.subr.mxu0 0.0
        %4440 = vmatpush1.msra.mxu0 %v4258
        %4441 = vmatprep.subr.mxu0 0.0
        %4442 = vmatpush1.msra.mxu0 %v4257
        %4443 = vmatprep.subr.mxu0 0.0
        %4444 = vmatpush1.msra.mxu0 %v4256
        %4445 = vmatprep.subr.mxu0 0.0
        %4446 = vmatpush1.msra.mxu0 %v4255
        %4447 = vmatprep.subr.mxu0 0.0
        %4448 = vmatpush1.msra.mxu0 %v4254
        %4449 = vmatprep.subr.mxu0 0.0
        %4450 = vmatpush1.msra.mxu0 %v4253
        %4451 = vmatprep.subr.mxu0 0.0
        %4452 = vmatpush1.msra.mxu0 %v4252
        %4453 = vmatprep.subr.mxu0 0.0
        %4454 = vmatpush1.msra.mxu0 %v4251
        %4455 = vmatprep.subr.mxu0 0.0
        %4456 = vmatpush1.msra.mxu0 %v4250
        %4457 = vmatprep.subr.mxu0 0.0
        %4458 = vmatpush1.msra.mxu0 %v4249
        %4459 = vmatprep.subr.mxu0 0.0
        %4460 = vmatpush1.msra.mxu0 %v4248
        %4461 = vmatprep.subr.mxu0 0.0
        %4462 = vmatpush1.msra.mxu0 %v4247
        %4463 = vmatprep.subr.mxu0 0.0
        %4464 = vmatpush1.msra.mxu0 %v4246
        %4465 = vmatprep.subr.mxu0 0.0
        %4466 = vmatpush1.msra.mxu0 %v4245
        %4467 = vmatprep.subr.mxu0 0.0
        %4468 = vmatpush1.msra.mxu0 %v4244
        %4469 = vmatprep.subr.mxu0 0.0
        %4470 = vmatpush2.msra.mxu0 %v4275
        %4471 = vmatprep.subr.mxu0 0.0
        %4472 = vmatpush2.msra.mxu0 %v4274
        %4473 = vmatprep.subr.mxu0 0.0
        %4474 = vmatpush2.msra.mxu0 %v4273
        %4475 = vmatprep.subr.mxu0 0.0
        %4476 = vmatpush2.msra.mxu0 %v4272
        %4477 = vmatprep.subr.mxu0 0.0
        %4478 = vmatpush2.msra.mxu0 %v4271
        %4479 = vmatprep.subr.mxu0 0.0
        %4480 = vmatpush2.msra.mxu0 %v4270
        %4481 = vmatprep.subr.mxu0 0.0
        %4482 = vmatpush2.msra.mxu0 %v4269
        %4483 = vmatprep.subr.mxu0 0.0
        %4484 = vmatpush2.msra.mxu0 %v4268
        %4485 = vmatprep.subr.mxu0 0.0
        %4486 = vmatpush2.msra.mxu0 %v4267
        %4487 = vmatprep.subr.mxu0 0.0
        %4488 = vmatpush2.msra.mxu0 %v4266
        %4489 = vmatprep.subr.mxu0 0.0
        %4490 = vmatpush2.msra.mxu0 %v4265
        %4491 = vmatprep.subr.mxu0 0.0
        %4492 = vmatpush2.msra.mxu0 %v4264
        %4493 = vmatprep.subr.mxu0 0.0
        %4494 = vmatpush2.msra.mxu0 %v4263
        %4495 = vmatprep.subr.mxu0 0.0
        %4496 = vmatpush2.msra.mxu0 %v4262
        %4497 = vmatprep.subr.mxu0 0.0
        %4498 = vmatpush2.msra.mxu0 %v4261
        %4499 = vmatprep.subr.mxu0 0.0
        %4500 = vmatpush2.msra.mxu0 %v4260
        %4501 = vmatprep.mubr.f32.mxu0 %v2076
        %4502 = vmatmul.mubr.f32.gmra.mxu0 %v2052
        %v4503 = vpop.f32.mrf.mxu0
        %v4504 = vadd.f32 %v4359, %v4503
        %v4505 = vpop.f32.mrf.mxu0
        %4506 = vmatprep.mubr.f32.mxu0 %v2077
        %4507 = vmatmul.mubr.f32.gmra.mxu0 %v2053
        %v4508 = vpop.f32.mrf.mxu0
        %v4509 = vadd.f32 %v4364, %v4508
        %v4510 = vpop.f32.mrf.mxu0
        %4511 = vmatprep.mubr.f32.mxu0 %v2078
        %4512 = vmatmul.mubr.f32.gmra.mxu0 %v2054
        %v4513 = vpop.f32.mrf.mxu0
        %v4514 = vadd.f32 %v4369, %v4513
        %v4515 = vpop.f32.mrf.mxu0
        %4516 = vmatprep.mubr.f32.mxu0 %v2079
        %4517 = vmatmul.mubr.f32.gmra.mxu0 %v2055
        %v4518 = vpop.f32.mrf.mxu0
        %v4519 = vadd.f32 %v4374, %v4518
        %v4520 = vpop.f32.mrf.mxu0
        %4521 = vmatprep.mubr.f32.mxu0 %v2080
        %4522 = vmatmul.mubr.f32.gmra.mxu0 %v2056
        %v4523 = vpop.f32.mrf.mxu0
        %v4524 = vadd.f32 %v4379, %v4523
        %v4525 = vpop.f32.mrf.mxu0
        %4526 = vmatprep.mubr.f32.mxu0 %v2081
        %4527 = vmatmul.mubr.f32.gmra.mxu0 %v2057
        %v4528 = vpop.f32.mrf.mxu0
        %v4529 = vadd.f32 %v4384, %v4528
        %v4530 = vpop.f32.mrf.mxu0
        %4531 = vmatprep.mubr.f32.mxu0 %v2082
        %4532 = vmatmul.mubr.f32.gmra.mxu0 %v2058
        %v4533 = vpop.f32.mrf.mxu0
        %v4534 = vadd.f32 %v4389, %v4533
        %v4535 = vpop.f32.mrf.mxu0
        %4536 = vmatprep.mubr.f32.mxu0 %v2083
        %4537 = vmatmul.mubr.f32.gmra.mxu0 %v2059
        %v4538 = vpop.f32.mrf.mxu0
        %v4539 = vadd.f32 %v4394, %v4538
        %v4540 = vpop.f32.mrf.mxu0
        %4541 = vmatprep.mubr.f32.mxu0 %v2084
        %4542 = vmatmul.mubr.f32.gmra.mxu0 %v2060
        %v4543 = vpop.f32.mrf.mxu0
        %v4544 = vadd.f32 %v4399, %v4543
        %v4545 = vpop.f32.mrf.mxu0
        %4546 = vmatprep.mubr.f32.mxu0 %v2085
        %4547 = vmatmul.mubr.f32.gmra.mxu0 %v2061
        %v4548 = vpop.f32.mrf.mxu0
        %v4549 = vadd.f32 %v4404, %v4548
        %v4550 = vpop.f32.mrf.mxu0
        %4551 = vmatprep.mubr.f32.mxu0 %v2086
        %4552 = vmatmul.mubr.f32.gmra.mxu0 %v2062
        %v4553 = vpop.f32.mrf.mxu0
        %v4554 = vadd.f32 %v4409, %v4553
        %v4555 = vpop.f32.mrf.mxu0
        %4556 = vmatprep.mubr.f32.mxu0 %v2087
        %4557 = vmatmul.mubr.f32.gmra.mxu0 %v2063
        %v4558 = vpop.f32.mrf.mxu0
        %v4559 = vadd.f32 %v4414, %v4558
        %v4560 = vpop.f32.mrf.mxu0
        %4561 = vmatprep.mubr.f32.mxu0 %v2088
        %4562 = vmatmul.mubr.f32.gmra.mxu0 %v2064
        %v4563 = vpop.f32.mrf.mxu0
        %v4564 = vadd.f32 %v4419, %v4563
        %v4565 = vpop.f32.mrf.mxu0
        %4566 = vmatprep.mubr.f32.mxu0 %v2089
        %4567 = vmatmul.mubr.f32.gmra.mxu0 %v2065
        %v4568 = vpop.f32.mrf.mxu0
        %v4569 = vadd.f32 %v4424, %v4568
        %v4570 = vpop.f32.mrf.mxu0
        %4571 = vmatprep.mubr.f32.mxu0 %v2090
        %4572 = vmatmul.mubr.f32.gmra.mxu0 %v2066
        %v4573 = vpop.f32.mrf.mxu0
        %v4574 = vadd.f32 %v4429, %v4573
        %v4575 = vpop.f32.mrf.mxu0
        %4576 = vmatprep.mubr.f32.mxu0 %v2091
        %4577 = vmatmul.mubr.f32.gmra.mxu0 %v2067
        %v4578 = vpop.f32.mrf.mxu0
        %v4579 = vadd.f32 %v4434, %v4578
        %v4580 = vpop.f32.mrf.mxu0
        %4581 = vdwg.mxu0
        %4582 = vmatprep.subr.mxu0 0.0
        %4583 = vmatpush1.msra.mxu0 %v4291
        %4584 = vmatprep.subr.mxu0 0.0
        %4585 = vmatpush1.msra.mxu0 %v4290
        %4586 = vmatprep.subr.mxu0 0.0
        %4587 = vmatpush1.msra.mxu0 %v4289
        %4588 = vmatprep.subr.mxu0 0.0
        %4589 = vmatpush1.msra.mxu0 %v4288
        %4590 = vmatprep.subr.mxu0 0.0
        %4591 = vmatpush1.msra.mxu0 %v4287
        %4592 = vmatprep.subr.mxu0 0.0
        %4593 = vmatpush1.msra.mxu0 %v4286
        %4594 = vmatprep.subr.mxu0 0.0
        %4595 = vmatpush1.msra.mxu0 %v4285
        %4596 = vmatprep.subr.mxu0 0.0
        %4597 = vmatpush1.msra.mxu0 %v4284
        %4598 = vmatprep.subr.mxu0 0.0
        %4599 = vmatpush1.msra.mxu0 %v4283
        %4600 = vmatprep.subr.mxu0 0.0
        %4601 = vmatpush1.msra.mxu0 %v4282
        %4602 = vmatprep.subr.mxu0 0.0
        %4603 = vmatpush1.msra.mxu0 %v4281
        %4604 = vmatprep.subr.mxu0 0.0
        %4605 = vmatpush1.msra.mxu0 %v4280
        %4606 = vmatprep.subr.mxu0 0.0
        %4607 = vmatpush1.msra.mxu0 %v4279
        %4608 = vmatprep.subr.mxu0 0.0
        %4609 = vmatpush1.msra.mxu0 %v4278
        %4610 = vmatprep.subr.mxu0 0.0
        %4611 = vmatpush1.msra.mxu0 %v4277
        %4612 = vmatprep.subr.mxu0 0.0
        %4613 = vmatpush1.msra.mxu0 %v4276
        %4614 = vmatprep.subr.mxu0 0.0
        %4615 = vmatpush2.msra.mxu0 0.0
        %4616 = vmatprep.subr.mxu0 0.0
        %4617 = vmatpush2.msra.mxu0 0.0
        %4618 = vmatprep.subr.mxu0 0.0
        %4619 = vmatpush2.msra.mxu0 0.0
        %4620 = vmatprep.subr.mxu0 0.0
        %4621 = vmatpush2.msra.mxu0 0.0
        %4622 = vmatprep.subr.mxu0 0.0
        %4623 = vmatpush2.msra.mxu0 0.0
        %4624 = vmatprep.subr.mxu0 0.0
        %4625 = vmatpush2.msra.mxu0 0.0
        %4626 = vmatprep.subr.mxu0 0.0
        %4627 = vmatpush2.msra.mxu0 0.0
        %4628 = vmatprep.subr.mxu0 0.0
        %4629 = vmatpush2.msra.mxu0 0.0
        %4630 = vmatprep.subr.mxu0 0.0
        %4631 = vmatpush2.msra.mxu0 0.0
        %4632 = vmatprep.subr.mxu0 0.0
        %4633 = vmatpush2.msra.mxu0 0.0
        %4634 = vmatprep.subr.mxu0 0.0
        %4635 = vmatpush2.msra.mxu0 0.0
        %4636 = vmatprep.subr.mxu0 0.0
        %4637 = vmatpush2.msra.mxu0 0.0
        %4638 = vmatprep.subr.mxu0 0.0
        %4639 = vmatpush2.msra.mxu0 0.0
        %4640 = vmatprep.subr.mxu0 0.0
        %4641 = vmatpush2.msra.mxu0 0.0
        %4642 = vmatprep.subr.mxu0 0.0
        %4643 = vmatpush2.msra.mxu0 0.0
        %4644 = vmatprep.subr.mxu0 0.0
        %4645 = vmatpush2.msra.mxu0 0.0
        %4646 = vmatprep.mubr.f32.mxu0 0.0
        %4647 = vmatmul.mubr.f32.gmra.mxu0 %v2100
        %v4648 = vpop.f32.mrf.mxu0
        %v4649 = vadd.f32 %v4504, %v4648
        %v4650 = vpop.f32.mrf.mxu0
        %4651 = vmatprep.mubr.f32.mxu0 0.0
        %4652 = vmatmul.mubr.f32.gmra.mxu0 %v2101
        %v4653 = vpop.f32.mrf.mxu0
        %v4654 = vadd.f32 %v4509, %v4653
        %v4655 = vpop.f32.mrf.mxu0
        %4656 = vmatprep.mubr.f32.mxu0 0.0
        %4657 = vmatmul.mubr.f32.gmra.mxu0 %v2102
        %v4658 = vpop.f32.mrf.mxu0
        %v4659 = vadd.f32 %v4514, %v4658
        %v4660 = vpop.f32.mrf.mxu0
        %4661 = vmatprep.mubr.f32.mxu0 0.0
        %4662 = vmatmul.mubr.f32.gmra.mxu0 %v2103
        %v4663 = vpop.f32.mrf.mxu0
        %v4664 = vadd.f32 %v4519, %v4663
        %v4665 = vpop.f32.mrf.mxu0
        %4666 = vmatprep.mubr.f32.mxu0 0.0
        %4667 = vmatmul.mubr.f32.gmra.mxu0 %v2104
        %v4668 = vpop.f32.mrf.mxu0
        %v4669 = vadd.f32 %v4524, %v4668
        %v4670 = vpop.f32.mrf.mxu0
        %4671 = vmatprep.mubr.f32.mxu0 0.0
        %4672 = vmatmul.mubr.f32.gmra.mxu0 %v2105
        %v4673 = vpop.f32.mrf.mxu0
        %v4674 = vadd.f32 %v4529, %v4673
        %v4675 = vpop.f32.mrf.mxu0
        %4676 = vmatprep.mubr.f32.mxu0 0.0
        %4677 = vmatmul.mubr.f32.gmra.mxu0 %v2106
        %v4678 = vpop.f32.mrf.mxu0
        %v4679 = vadd.f32 %v4534, %v4678
        %v4680 = vpop.f32.mrf.mxu0
        %4681 = vmatprep.mubr.f32.mxu0 0.0
        %4682 = vmatmul.mubr.f32.gmra.mxu0 %v2107
        %v4683 = vpop.f32.mrf.mxu0
        %v4684 = vadd.f32 %v4539, %v4683
        %v4685 = vpop.f32.mrf.mxu0
        %4686 = vmatprep.mubr.f32.mxu0 0.0
        %4687 = vmatmul.mubr.f32.gmra.mxu0 %v2108
        %v4688 = vpop.f32.mrf.mxu0
        %v4689 = vadd.f32 %v4544, %v4688
        %v4690 = vpop.f32.mrf.mxu0
        %4691 = vmatprep.mubr.f32.mxu0 0.0
        %4692 = vmatmul.mubr.f32.gmra.mxu0 %v2109
        %v4693 = vpop.f32.mrf.mxu0
        %v4694 = vadd.f32 %v4549, %v4693
        %v4695 = vpop.f32.mrf.mxu0
        %4696 = vmatprep.mubr.f32.mxu0 0.0
        %4697 = vmatmul.mubr.f32.gmra.mxu0 %v2110
        %v4698 = vpop.f32.mrf.mxu0
        %v4699 = vadd.f32 %v4554, %v4698
        %v4700 = vpop.f32.mrf.mxu0
        %4701 = vmatprep.mubr.f32.mxu0 0.0
        %4702 = vmatmul.mubr.f32.gmra.mxu0 %v2111
        %v4703 = vpop.f32.mrf.mxu0
        %v4704 = vadd.f32 %v4559, %v4703
        %v4705 = vpop.f32.mrf.mxu0
        %4706 = vmatprep.mubr.f32.mxu0 0.0
        %4707 = vmatmul.mubr.f32.gmra.mxu0 %v2112
        %v4708 = vpop.f32.mrf.mxu0
        %v4709 = vadd.f32 %v4564, %v4708
        %v4710 = vpop.f32.mrf.mxu0
        %4711 = vmatprep.mubr.f32.mxu0 0.0
        %4712 = vmatmul.mubr.f32.gmra.mxu0 %v2113
        %v4713 = vpop.f32.mrf.mxu0
        %v4714 = vadd.f32 %v4569, %v4713
        %v4715 = vpop.f32.mrf.mxu0
        %4716 = vmatprep.mubr.f32.mxu0 0.0
        %4717 = vmatmul.mubr.f32.gmra.mxu0 %v2114
        %v4718 = vpop.f32.mrf.mxu0
        %v4719 = vadd.f32 %v4574, %v4718
        %v4720 = vpop.f32.mrf.mxu0
        %4721 = vmatprep.mubr.f32.mxu0 0.0
        %4722 = vmatmul.mubr.f32.gmra.mxu0 %v2115
        %v4723 = vpop.f32.mrf.mxu0
        %v4724 = vadd.f32 %v4579, %v4723
        %v4725 = vpop.f32.mrf.mxu0
        %4726 = vdwg.mxu0
        %v4727 = vadd.f32 %v4195, %v4649
        %v4728 = vadd.f32 %v4196, %v4654
        %v4729 = vadd.f32 %v4197, %v4659
        %v4730 = vadd.f32 %v4198, %v4664
        %v4731 = vadd.f32 %v4199, %v4669
        %v4732 = vadd.f32 %v4200, %v4674
        %v4733 = vadd.f32 %v4201, %v4679
        %v4734 = vadd.f32 %v4202, %v4684
        %v4735 = vadd.f32 %v4203, %v4689
        %v4736 = vadd.f32 %v4204, %v4694
        %v4737 = vadd.f32 %v4205, %v4699
        %v4738 = vadd.f32 %v4206, %v4704
        %v4739 = vadd.f32 %v4207, %v4709
        %v4740 = vadd.f32 %v4208, %v4714
        %v4741 = vadd.f32 %v4209, %v4719
        %v4742 = vadd.f32 %v4210, %v4724
        %v4743 = vld [vmem:[#allocation8] sm:$0x1]
        %v4745 = vlaneseq
        %v4746 = vshrl.u32 %v4745, 7
        %v4747 = vsub.s32 0, %v4746
        %v4748 = vrot.slane %v4743, %v4747
        %v4750 = vadd.f32 %v4727, %v4748
        %v4751 = vadd.f32 %v4728, %v4748
        %v4752 = vadd.f32 %v4729, %v4748
        %v4753 = vadd.f32 %v4730, %v4748
        %v4754 = vadd.f32 %v4731, %v4748
        %v4755 = vadd.f32 %v4732, %v4748
        %v4756 = vadd.f32 %v4733, %v4748
        %v4757 = vadd.f32 %v4734, %v4748
        %v4758 = vadd.f32 %v4735, %v4748
        %v4759 = vadd.f32 %v4736, %v4748
        %v4760 = vadd.f32 %v4737, %v4748
        %v4761 = vadd.f32 %v4738, %v4748
        %v4762 = vadd.f32 %v4739, %v4748
        %v4763 = vadd.f32 %v4740, %v4748
        %v4764 = vadd.f32 %v4741, %v4748
        %v4765 = vadd.f32 %v4742, %v4748
        %v4766 = vxor.u32 %v4750, 2147483648
        %v4767 = vxor.u32 %v4751, 2147483648
        %v4768 = vxor.u32 %v4752, 2147483648
        %v4769 = vxor.u32 %v4753, 2147483648
        %v4770 = vxor.u32 %v4754, 2147483648
        %v4771 = vxor.u32 %v4755, 2147483648
        %v4772 = vxor.u32 %v4756, 2147483648
        %v4773 = vxor.u32 %v4757, 2147483648
        %v4774 = vxor.u32 %v4758, 2147483648
        %v4775 = vxor.u32 %v4759, 2147483648
        %v4776 = vxor.u32 %v4760, 2147483648
        %v4777 = vxor.u32 %v4761, 2147483648
        %v4778 = vxor.u32 %v4762, 2147483648
        %v4779 = vxor.u32 %v4763, 2147483648
        %v4780 = vxor.u32 %v4764, 2147483648
        %v4781 = vxor.u32 %v4765, 2147483648
        %v4782 = vmul.f32 %v4766, 1.442695
        %v4783 = vpow.pop %v4782
        %v4784 = vmul.f32 %v4767, 1.442695
        %v4785 = vpow.pop %v4784
        %v4786 = vmul.f32 %v4768, 1.442695
        %v4787 = vpow.pop %v4786
        %v4788 = vmul.f32 %v4769, 1.442695
        %v4789 = vpow.pop %v4788
        %v4790 = vmul.f32 %v4770, 1.442695
        %v4791 = vpow.pop %v4790
        %v4792 = vmul.f32 %v4771, 1.442695
        %v4793 = vpow.pop %v4792
        %v4794 = vmul.f32 %v4772, 1.442695
        %v4795 = vpow.pop %v4794
        %v4796 = vmul.f32 %v4773, 1.442695
        %v4797 = vpow.pop %v4796
        %v4798 = vmul.f32 %v4774, 1.442695
        %v4799 = vpow.pop %v4798
        %v4800 = vmul.f32 %v4775, 1.442695
        %v4801 = vpow.pop %v4800
        %v4802 = vmul.f32 %v4776, 1.442695
        %v4803 = vpow.pop %v4802
        %v4804 = vmul.f32 %v4777, 1.442695
        %v4805 = vpow.pop %v4804
        %v4806 = vmul.f32 %v4778, 1.442695
        %v4807 = vpow.pop %v4806
        %v4808 = vmul.f32 %v4779, 1.442695
        %v4809 = vpow.pop %v4808
        %v4810 = vmul.f32 %v4780, 1.442695
        %v4811 = vpow.pop %v4810
        %v4812 = vmul.f32 %v4781, 1.442695
        %v4813 = vpow.pop %v4812
        %v4814 = vadd.f32 %v4783, 1.0
        %v4815 = vadd.f32 %v4785, 1.0
        %v4816 = vadd.f32 %v4787, 1.0
        %v4817 = vadd.f32 %v4789, 1.0
        %v4818 = vadd.f32 %v4791, 1.0
        %v4819 = vadd.f32 %v4793, 1.0
        %v4820 = vadd.f32 %v4795, 1.0
        %v4821 = vadd.f32 %v4797, 1.0
        %v4822 = vadd.f32 %v4799, 1.0
        %v4823 = vadd.f32 %v4801, 1.0
        %v4824 = vadd.f32 %v4803, 1.0
        %v4825 = vadd.f32 %v4805, 1.0
        %v4826 = vadd.f32 %v4807, 1.0
        %v4827 = vadd.f32 %v4809, 1.0
        %v4828 = vadd.f32 %v4811, 1.0
        %v4829 = vadd.f32 %v4813, 1.0
        %v4830 = vrcp.pop %v4814
        %v4831 = vmul.f32 1.0, %v4830
        %v4832 = vrcp.pop %v4815
        %v4833 = vmul.f32 1.0, %v4832
        %v4834 = vrcp.pop %v4816
        %v4835 = vmul.f32 1.0, %v4834
        %v4836 = vrcp.pop %v4817
        %v4837 = vmul.f32 1.0, %v4836
        %v4838 = vrcp.pop %v4818
        %v4839 = vmul.f32 1.0, %v4838
        %v4840 = vrcp.pop %v4819
        %v4841 = vmul.f32 1.0, %v4840
        %v4842 = vrcp.pop %v4820
        %v4843 = vmul.f32 1.0, %v4842
        %v4844 = vrcp.pop %v4821
        %v4845 = vmul.f32 1.0, %v4844
        %v4846 = vrcp.pop %v4822
        %v4847 = vmul.f32 1.0, %v4846
        %v4848 = vrcp.pop %v4823
        %v4849 = vmul.f32 1.0, %v4848
        %v4850 = vrcp.pop %v4824
        %v4851 = vmul.f32 1.0, %v4850
        %v4852 = vrcp.pop %v4825
        %v4853 = vmul.f32 1.0, %v4852
        %v4854 = vrcp.pop %v4826
        %v4855 = vmul.f32 1.0, %v4854
        %v4856 = vrcp.pop %v4827
        %v4857 = vmul.f32 1.0, %v4856
        %v4858 = vrcp.pop %v4828
        %v4859 = vmul.f32 1.0, %v4858
        %v4860 = vrcp.pop %v4829
        %v4861 = vmul.f32 1.0, %v4860
        %v4862 = vmul.f32 %v4750, %v4831
        %v4863 = vmul.f32 %v4751, %v4833
        %v4864 = vmul.f32 %v4752, %v4835
        %v4865 = vmul.f32 %v4753, %v4837
        %v4866 = vmul.f32 %v4754, %v4839
        %v4867 = vmul.f32 %v4755, %v4841
        %v4868 = vmul.f32 %v4756, %v4843
        %v4869 = vmul.f32 %v4757, %v4845
        %v4870 = vmul.f32 %v4758, %v4847
        %v4871 = vmul.f32 %v4759, %v4849
        %v4872 = vmul.f32 %v4760, %v4851
        %v4873 = vmul.f32 %v4761, %v4853
        %v4874 = vmul.f32 %v4762, %v4855
        %v4875 = vmul.f32 %v4763, %v4857
        %v4876 = vmul.f32 %v4764, %v4859
        %v4877 = vmul.f32 %v4765, %v4861
        %v4878 = vld [vmem:[%s315] sm:$0xff]
        %v4879 = vld [vmem:[%s315 + $0x8] sm:$0xff]
        %v4880 = vld [vmem:[%s315 + $0x10] sm:$0xff]
        %v4881 = vld [vmem:[%s315 + $0x18] sm:$0xff]
        %v4882 = vld [vmem:[%s315 + $0x20] sm:$0xff]
        %v4883 = vld [vmem:[%s315 + $0x28] sm:$0xff]
        %v4884 = vld [vmem:[%s315 + $0x30] sm:$0xff]
        %v4885 = vld [vmem:[%s315 + $0x38] sm:$0xff]
        %v4886 = vld [vmem:[%s315 + $0x40] sm:$0xff]
        %v4887 = vld [vmem:[%s315 + $0x48] sm:$0xff]
        %v4888 = vld [vmem:[%s315 + $0x50] sm:$0xff]
        %v4889 = vld [vmem:[%s315 + $0x58] sm:$0xff]
        %v4890 = vld [vmem:[%s315 + $0x60] sm:$0xff]
        %v4891 = vld [vmem:[%s315 + $0x68] sm:$0xff]
        %v4892 = vld [vmem:[%s315 + $0x70] sm:$0xff]
        %v4893 = vld [vmem:[%s315 + $0x78] sm:$0xff]
        %v4894 = vadd.f32 %v4862, %v4878
        %v4895 = vadd.f32 %v4863, %v4879
        %v4896 = vadd.f32 %v4864, %v4880
        %v4897 = vadd.f32 %v4865, %v4881
        %v4898 = vadd.f32 %v4866, %v4882
        %v4899 = vadd.f32 %v4867, %v4883
        %v4900 = vadd.f32 %v4868, %v4884
        %v4901 = vadd.f32 %v4869, %v4885
        %v4902 = vadd.f32 %v4870, %v4886
        %v4903 = vadd.f32 %v4871, %v4887
        %v4904 = vadd.f32 %v4872, %v4888
        %v4905 = vadd.f32 %v4873, %v4889
        %v4906 = vadd.f32 %v4874, %v4890
        %v4907 = vadd.f32 %v4875, %v4891
        %v4908 = vadd.f32 %v4876, %v4892
        %v4909 = vadd.f32 %v4877, %v4893
        %4910 = vst [vmem:[%s352] sm:$0xff] %v4894
        %4911 = vst [vmem:[%s352 + $0x8] sm:$0xff] %v4895
        %4912 = vst [vmem:[%s352 + $0x10] sm:$0xff] %v4896
        %4913 = vst [vmem:[%s352 + $0x18] sm:$0xff] %v4897
        %4914 = vst [vmem:[%s352 + $0x20] sm:$0xff] %v4898
        %4915 = vst [vmem:[%s352 + $0x28] sm:$0xff] %v4899
        %4916 = vst [vmem:[%s352 + $0x30] sm:$0xff] %v4900
        %4917 = vst [vmem:[%s352 + $0x38] sm:$0xff] %v4901
        %4918 = vst [vmem:[%s352 + $0x40] sm:$0xff] %v4902
        %4919 = vst [vmem:[%s352 + $0x48] sm:$0xff] %v4903
        %4920 = vst [vmem:[%s352 + $0x50] sm:$0xff] %v4904
        %4921 = vst [vmem:[%s352 + $0x58] sm:$0xff] %v4905
        %4922 = vst [vmem:[%s352 + $0x60] sm:$0xff] %v4906
        %4923 = vst [vmem:[%s352 + $0x68] sm:$0xff] %v4907
        %4924 = vst [vmem:[%s352 + $0x70] sm:$0xff] %v4908
        %4925 = vst [vmem:[%s352 + $0x78] sm:$0xff] %v4909
        %s4926 = sand.u32 %s187, 1
        %s4927 = scalar_lea.sflag [#allocation5], %s4926
        %s4928 = sand.u32 %s187, 1
        %s4929 = smul.addr %s4928, 128
        %s4930 = scalar_lea.vmem [#allocation11], %s4929
        // Predicated region
        $region69: #{tpu_custom_call.1} parent=43 // pred_check
          %p4931 = pneg %p197
        $region70: #{tpu_custom_call.1} parent=43 // pred_check_branch
          %4933 = sbr.rel (%p4931) target = $region72
        $region71: #{tpu_custom_call.1} parent=43 // pred_region
          %s4934 = smul.u32 16, %s30
          %s4936 = ssub.s32 2048, 2048
          %4937 = vsyncadd %s4927, %s4936
          %s4938 = smul.addr %s29, 32
          %s4939 = sadd.s32 %s4934, %s4938
          %s4940 = smul.addr %s4939, 128
          %s4941 = scalar_lea.hbm %s6, %s4940
          %s4942 = sshll.u32 %s4930, 4
          %s4943 = int_to_ptr.vmem [resolvable:$true] %s4942
          %4948 = dma.vmem_to_hbm [thread:$0]  %s4943, 2048, %s4941, %s4927, 128, 128, 8
        $region72: #{tpu_custom_call.1} parent=43 // pred_fallthru
          _
      $region44: #{tpu_custom_call.1} parent=5 // pred_fallthru
        _
      %p4949 = scmp.le.s32.totalorder 2, %s20
      // Predicated region
      $region73: #{tpu_custom_call.1} parent=5 // pred_check
        %p4950 = pneg %p4949
      $region74: #{tpu_custom_call.1} parent=5 // pred_check_branch
        %4952 = sbr.rel (%p4950) target = $region76
      $region75: #{tpu_custom_call.1} parent=5 // pred_region
        %s4953 = ssub.s32 %s20, 2
        // Predicated region
        $region77: #{tpu_custom_call.1} parent=75 // pred_check
          %p4954 = pneg %p203
        $region78: #{tpu_custom_call.1} parent=75 // pred_check_branch
          %4956 = sbr.rel (%p4954) target = $region80
        $region79: #{tpu_custom_call.1} parent=75 // pred_region
          %s4957 = sand.u32 %s188, 1
          %s4958 = scalar_lea.sflag [#allocation5], %s4957
          %s4959 = sand.u32 %s188, 1
          %s4960 = smul.addr %s4959, 128
          %s4961 = scalar_lea.vmem [#allocation11], %s4960
          %4962 = dma.done %s4958, 2048
        $region80: #{tpu_custom_call.1} parent=75 // pred_fallthru
          _
      $region76: #{tpu_custom_call.1} parent=5 // pred_fallthru
        _
    $region6: #{tpu_custom_call.1} parent=1 // loop_footer
      %s24 = sadd.s32 1, %s20
    $region7: #{tpu_custom_call.1} parent=1 // loop_footer_branch
      %19 = sbr.rel target = $region3
    $region8: #{tpu_custom_call.1} parent=1 // loop_exit
      _
    %4963 = vsyncpa [#allocation4], 1
    %s4964 = scalar_lea.sflag [#allocation4], 1
    %4965 = vsyncpa %s4964, 1
    %4966 = vsyncpa [#allocation7], 1
    %4967 = vsyncpa [#allocation10], 1
    %s4968 = scalar_lea.sflag [#allocation10], 1
    %4969 = vsyncpa %s4968, 1
    %4970 = vsyncpa [#allocation5], 1
    %s4971 = scalar_lea.sflag [#allocation5], 1
    %4972 = vsyncpa %s4971, 1

</llo_original>
